<compile_context>
chip_gen: v7x
topology: tpu7x:2x2x1
jax: 0.10.0
libtpu: 0.0.40
codegen_flags: <defaults>
</compile_context>

<pallas_src>
import functools

import jax
import jax.numpy as jnp
from jax import lax
from jax.experimental import pallas as pl
from jax.experimental.pallas import tpu as pltpu


# ----------------------------------------------------------------------------
# In-kernel helpers (pure jnp; traced inside the Pallas kernel body).
# ----------------------------------------------------------------------------
def _pair_gates(gx, nrows, H, steps):
    """Split / pre-pair the fused input-side pre-activations (off the serial chain).

    gx: (steps*nrows, 6H) = [fwd r,z,n | bwd r,z,n], biases included, time-major.
    Returns G_r, G_z, G_n each (steps*nrows, 2H); row block s pairs the forward
    gate at time s (lanes 0:H) with the backward gate at time steps-1-s (lanes H:2H).
    All row blocks are full `nrows`-sublane tiles (nrows is a multiple of 8).
    """
    gxf = gx[:, 0:3 * H]
    gxb = gx[:, 3 * H:6 * H]
    if steps > 1:
        gxb_rev = jnp.concatenate(
            [gxb[(steps - 1 - s) * nrows:(steps - s) * nrows, :] for s in range(steps)],
            axis=0)
    else:
        gxb_rev = gxb
    G_r = jnp.concatenate([gxf[:, 0:H], gxb_rev[:, 0:H]], axis=1)
    G_z = jnp.concatenate([gxf[:, H:2 * H], gxb_rev[:, H:2 * H]], axis=1)
    G_n = jnp.concatenate([gxf[:, 2 * H:3 * H], gxb_rev[:, 2 * H:3 * H]], axis=1)
    return G_r, G_z, G_n


def _bigru_merged(G_r, G_z, G_n, whhT_blk_bf16, bhh_blk, nrows, H2, steps):
    """Both GRU directions in ONE unrolled recurrence.

    Carry h = [hf | hb] (nrows, 2H); whhT_blk is (2H, 6H) block-diagonal (bf16)
    with gate-column order [r_f,r_b, z_f,z_b, n_f,n_b] so each gate is a
    contiguous 2H lane slice.  Returns the list of per-step hidden states (f32).
    """
    h = jnp.zeros((nrows, H2), jnp.float32)
    hs = []
    for s in range(steps):
        rs = slice(s * nrows, (s + 1) * nrows)
        gh = jnp.dot(h.astype(jnp.bfloat16), whhT_blk_bf16,
                     preferred_element_type=jnp.float32) + bhh_blk
        r = jax.nn.sigmoid(G_r[rs] + gh[:, 0:H2])
        z = jax.nn.sigmoid(G_z[rs] + gh[:, H2:2 * H2])
        n = jnp.tanh(G_n[rs] + r * gh[:, 2 * H2:3 * H2])
        h = (1.0 - z) * n + z * h
        hs.append(h)
    return hs


def _bidir_blocks(hs, H, steps):
    """hs[s] = [hf at time s | hb at time steps-1-s]; return the list of
    per-time blocks [hf_t | hb_t] (trace-time reindex, full-tile data)."""
    return [jnp.concatenate([hs[t][:, 0:H], hs[steps - 1 - t][:, H:2 * H]], axis=1)
            for t in range(steps)]


def _expert_softmax(ab):
    """Softmax over the 2 'expert' lanes of a (rows, 2) array."""
    m = jnp.max(ab, axis=1, keepdims=True)
    e = jnp.exp(ab - m)
    s = jnp.sum(e, axis=1, keepdims=True)
    return e * pl.reciprocal(s, approx=True)


def _moe_mix_rows(w1, w2, gw_row, gb):
    """MOENet on lane-oriented inputs: w1, w2 (rows, M); gw_row (1, M); gb (1, 1).
    The N=1 gate matmuls are VPU multiplies + lane reductions (no MXU pushes)."""
    a = jnp.sum(w1 * gw_row, axis=1, keepdims=True) + gb
    b = jnp.sum(w2 * gw_row, axis=1, keepdims=True) + gb
    m = jnp.maximum(a, b)
    ea = jnp.exp(a - m)
    eb = jnp.exp(b - m)
    inv = pl.reciprocal(ea + eb, approx=True)
    return (ea * inv) * w1 + (eb * inv) * w2


# ----------------------------------------------------------------------------
# Fused HAN kernel: WordAttNet (post-BERT) + SentAttNet in one pallas_call.
# ----------------------------------------------------------------------------
def _han_kernel(x_ref, len_ref,
                w_wihT_ref, w_bih_ref, w_whhT_ref, w_bhh_ref,
                w_wwT_ref, w_bw_ref, w_cw_ref,
                w_g1w_ref, w_g1b_ref, w_g2w_ref, w_g2b_ref,
                s_wihT_ref, s_bih_ref, s_whhT_ref, s_bhh_ref,
                s_sw1T_ref, s_sb1_ref, s_sw2T_ref, s_sb2_ref,
                s_scw2_ref, s_scb2_ref,
                s_g1w_ref, s_g1b_ref, s_g2w_ref, s_g2b_ref,
                s_fc1T_ref, s_fc1b_ref, s_fc2T_ref, s_fc2b_ref,
                out_ref,
                *, B, Bp, T, H, M, C1, C2, OUT_W):
    H2 = 2 * H
    SP = 8          # sentence-level stream rows (2 real streams, padded to a sublane tile)
    NEG = jnp.float32(-1.0e9)

    # ------------------------------ word level ------------------------------
    # Fused fwd+bwd input-side gate projection: one K=1024 bf16 matmul.
    x = x_ref[...]                                                     # (T*Bp, E) bf16
    gx = jnp.dot(x, w_wihT_ref[...],
                 preferred_element_type=jnp.float32) + w_bih_ref[...]  # (T*Bp, 6H) f32

    G_r, G_z, G_n = _pair_gates(gx, Bp, H, T)
    hs = _bigru_merged(G_r, G_z, G_n, w_whhT_ref[...], w_bhh_ref[...], Bp, H2, T)
    Hcat_blocks = _bidir_blocks(hs, H, T)                              # T x (Bp, 2H)
    Hcat = jnp.concatenate(Hcat_blocks, axis=0)                        # (T*Bp, 2H)

    # Batched attention projections: 2 matmuls instead of ~4*T tiny ones.
    O = jnp.tanh(jnp.dot(Hcat.astype(jnp.bfloat16), w_wwT_ref[...],
                         preferred_element_type=jnp.float32) + w_bw_ref[...])   # (T*Bp, 4H)
    scores = jnp.dot(O.astype(jnp.bfloat16), w_cw_ref[...],
                     preferred_element_type=jnp.float32)                         # (T*Bp, 2)

    # Masked softmax over time, kept in time-major (Bp, 2)-tile form:
    # column 0 = head 1 (context_weight_1), column 1 = head 2.
    len_col = len_ref[...]                                             # (Bp, 1) int32
    sm_list = []
    for t in range(T):
        s_t = scores[t * Bp:(t + 1) * Bp, :]                           # full-tile row block
        sm_list.append(jnp.where(len_col <= t, NEG, s_t))
    mx = sm_list[0]
    for t in range(1, T):
        mx = jnp.maximum(mx, sm_list[t])
    e_list = [jnp.exp(sm_list[t] - mx) for t in range(T)]
    den = e_list[0]
    for t in range(1, T):
        den = den + e_list[t]
    inv = pl.reciprocal(den, approx=True)
    w_list = [e_list[t] * inv for t in range(T)]                       # T x (Bp, 2)

    # MOE gates: gate_k(w) = sum_t gk[t] * w[t] + bk, applied to BOTH heads at
    # once (same gate weight) -> (Bp, 2) = [a | b], then softmax over experts.
    ab1 = jnp.zeros((Bp, 2), jnp.float32)
    ab2 = jnp.zeros((Bp, 2), jnp.float32)
    for t in range(T):
        ab1 = ab1 + w_list[t] * w_g1w_ref[t]
        ab2 = ab2 + w_list[t] * w_g2w_ref[t]
    ab1 = _expert_softmax(ab1 + w_g1b_ref[0])                          # (Bp, 2) = [alpha|beta]
    ab2 = _expert_softmax(ab2 + w_g2b_ref[0])

    # mixed_k[t] = alpha_k * w1[t] + beta_k * w2[t]  (2-lane VPU reduce per step).
    mixed1_list = [jnp.sum(ab1 * w_list[t], axis=1, keepdims=True) for t in range(T)]
    mixed2_list = [jnp.sum(ab2 * w_list[t], axis=1, keepdims=True) for t in range(T)]

    # Attention-weighted pooling of the raw GRU outputs (full-tile mul-adds,
    # reusing the per-step hidden blocks -> no re-slicing of Hcat).
    acc1 = jnp.zeros((Bp, H2), jnp.float32)
    acc2 = jnp.zeros((Bp, H2), jnp.float32)
    for t in range(T):
        acc1 = acc1 + Hcat_blocks[t] * mixed1_list[t]
        acc2 = acc2 + Hcat_blocks[t] * mixed2_list[t]

    ww2 = jnp.concatenate(mixed2_list, axis=1)                         # (Bp, T)

    # ---------------------------- sentence level ----------------------------
    # The reference feeds a 2-D (B, 2H) tensor to nn.GRU, which PyTorch treats
    # as ONE unbatched length-B sequence.  The two streams (acc1/acc2) share
    # the GRU -> run them as 2 batch rows (padded to an 8-row tile) through one
    # merged BiGRU over the B real steps.
    zs = jnp.zeros((SP - 2, H2), jnp.float32)
    Xs = jnp.concatenate(
        [jnp.concatenate([acc1[t:t + 1, :], acc2[t:t + 1, :], zs], axis=0)
         for t in range(B)],
        axis=0)                                                        # (B*SP, 2H)

    gxs = jnp.dot(Xs.astype(jnp.bfloat16), s_wihT_ref[...],
                  preferred_element_type=jnp.float32) + s_bih_ref[...]           # (B*SP, 6H)
    Gs_r, Gs_z, Gs_n = _pair_gates(gxs, SP, H, B)
    hss = _bigru_merged(Gs_r, Gs_z, Gs_n, s_whhT_ref[...], s_bhh_ref[...], SP, H2, B)
    Hs_blocks = _bidir_blocks(hss, H, B)                               # B x (SP, 2H)

    # De-interleave the two streams back to (Bp, 2H) (pad rows B..Bp with zeros).
    g1_parts = [blk[0:1, :] for blk in Hs_blocks]
    g2_parts = [blk[1:2, :] for blk in Hs_blocks]
    if Bp > B:
        zrow = jnp.zeros((Bp - B, H2), jnp.float32)
        g1_parts.append(zrow)
        g2_parts.append(zrow)
    g1 = jnp.concatenate(g1_parts, axis=0)                             # (Bp, 2H)
    g2 = jnp.concatenate(g2_parts, axis=0)

    o1 = jnp.tanh(jnp.dot(g1, s_sw1T_ref[...],
                          preferred_element_type=jnp.float32) + s_sb1_ref[...])
    o2 = jnp.tanh(jnp.dot(g2, s_sw2T_ref[...],
                          preferred_element_type=jnp.float32) + s_sb2_ref[...])

    # context_weight_1 output goes through softmax over a singleton dim -> all
    # ones (scw1/scb1 cancel and are not passed in).  Per the reference,
    # weights_2 is used RAW (only weights_1 is softmaxed).
    wt2 = jnp.sum(o2 * s_scw2_ref[...], axis=1, keepdims=True) + s_scb2_ref[...]  # (Bp, 1)

    col = lax.broadcasted_iota(jnp.int32, (Bp, M), 1)
    onehot0 = (col == 0).astype(jnp.float32)
    w1p = onehot0                                                      # padded [1, 0, ..., 0]
    w2p = wt2 * onehot0                                                # padded [wt2, 0, ..., 0]

    sm1 = _moe_mix_rows(w1p, w2p, s_g1w_ref[...], s_g1b_ref[...])
    sm2 = _moe_mix_rows(w1p, w2p, s_g2w_ref[...], s_g2b_ref[...])
    ws1 = sm1[:, 0:1]                                                  # weights[:, :t], t == 1
    ws2 = sm2[:, 0:1]

    v1 = o1 * ws1
    v2 = o2 * ws2
    log1 = jnp.dot(v1, s_fc1T_ref[...],
                   preferred_element_type=jnp.float32) + s_fc1b_ref[...]          # (Bp, C1)
    log2 = jnp.dot(v2, s_fc2T_ref[...],
                   preferred_element_type=jnp.float32) + s_fc2b_ref[...]          # (Bp, C2)

    # One lane-dense packed output slab: [logits_1 | logits_2 | word_w2 | sent_w2 | 0-pad].
    used = C1 + C2 + T + 1
    pieces = [log1, log2, ww2, ws2]
    if used < OUT_W:
        pieces.append(jnp.zeros((Bp, OUT_W - used), jnp.float32))
    out_ref[...] = jnp.concatenate(pieces, axis=1)


def han_pallas(x_tm, len_col, wp, sp, *, B, Bp, T, H, M, C1, C2):
    OUT_W = 128
    assert C1 + C2 + T + 1 <= OUT_W, "packed output slab too narrow"
    vmem = pl.BlockSpec(memory_space=pltpu.MemorySpace.VMEM)
    smem = pl.BlockSpec(memory_space=pltpu.MemorySpace.SMEM)
    args = [x_tm, len_col,
            wp["wihT"], wp["bih"], wp["whhT"], wp["bhh"],
            wp["wwT"], wp["bw"], wp["cw"],
            wp["g1w"], wp["g1b"], wp["g2w"], wp["g2b"],
            sp["wihT"], sp["bih"], sp["whhT"], sp["bhh"],
            sp["sw1T"], sp["sb1"], sp["sw2T"], sp["sb2"],
            sp["scw2"], sp["scb2"],
            sp["g1w"], sp["g1b"], sp["g2w"], sp["g2b"],
            sp["fc1T"], sp["fc1b"], sp["fc2T"], sp["fc2b"]]
    specs = [vmem] * len(args)
    for i in (9, 10, 11, 12):     # word-level MoE gate scalars live in SMEM
        specs[i] = smem
    return pl.pallas_call(
        functools.partial(_han_kernel, B=B, Bp=Bp, T=T, H=H, M=M,
                          C1=C1, C2=C2, OUT_W=OUT_W),
        out_shape=jax.ShapeDtypeStruct((Bp, OUT_W), jnp.float32),
        in_specs=specs,
        out_specs=vmem,
    )(*args)


# ----------------------------------------------------------------------------
# Parameter packing: per-direction PyTorch-layout weights -> fused kernel layout.
# ----------------------------------------------------------------------------
def _blockdiag_gru(whhT_f, whhT_b, H):
    """(H,3H)+(H,3H) [r,z,n] -> (2H,6H) block-diagonal, columns [r_f,r_b,z_f,z_b,n_f,n_b]."""
    z = jnp.zeros((H, H), jnp.float32)
    top = jnp.concatenate([whhT_f[:, 0:H], z, whhT_f[:, H:2 * H], z,
                           whhT_f[:, 2 * H:3 * H], z], axis=1)
    bot = jnp.concatenate([z, whhT_b[:, 0:H], z, whhT_b[:, H:2 * H],
                           z, whhT_b[:, 2 * H:3 * H]], axis=1)
    return jnp.concatenate([top, bot], axis=0)


def _interleave_gate_bias(b_f, b_b, H):
    return jnp.concatenate([b_f[:, 0:H], b_b[:, 0:H],
                            b_f[:, H:2 * H], b_b[:, H:2 * H],
                            b_f[:, 2 * H:3 * H], b_b[:, 2 * H:3 * H]], axis=1)


def _blockdiag_ctx(cw1, cw2):
    H2 = cw1.shape[0]
    z = jnp.zeros((H2, 1), jnp.float32)
    return jnp.concatenate([jnp.concatenate([cw1, z], axis=1),
                            jnp.concatenate([z, cw2], axis=1)], axis=0)   # (2*H2, 2)


def pack_han_params(raw):
    """One-time (outside jit) repack into the fused layouts the kernel expects."""
    H = raw["word"]["whhT_f"].shape[0]
    w, s = raw["word"], raw["sent"]
    T = w["g1wT"].shape[0]
    M = s["g1wT"].shape[0]
    bf16 = jnp.bfloat16
    wp = dict(
        wihT=jnp.concatenate([w["wihT_f"], w["wihT_b"]], axis=1).astype(bf16),
        bih=jnp.concatenate([w["bih_f"], w["bih_b"]], axis=1),
        whhT=_blockdiag_gru(w["whhT_f"], w["whhT_b"], H).astype(bf16),
        bhh=_interleave_gate_bias(w["bhh_f"], w["bhh_b"], H),
        wwT=jnp.concatenate([w["ww1T"], w["ww2T"]], axis=1).astype(bf16),
        bw=jnp.concatenate([w["bw1"], w["bw2"]], axis=1),
        cw=_blockdiag_ctx(w["cw1"], w["cw2"]).astype(bf16),
        g1w=jnp.reshape(w["g1wT"], (T,)), g1b=jnp.reshape(w["g1b"], (1,)),
        g2w=jnp.reshape(w["g2wT"], (T,)), g2b=jnp.reshape(w["g2b"], (1,)),
    )
    sp = dict(
        wihT=jnp.concatenate([s["wihT_f"], s["wihT_b"]], axis=1).astype(bf16),
        bih=jnp.concatenate([s["bih_f"], s["bih_b"]], axis=1),
        whhT=_blockdiag_gru(s["whhT_f"], s["whhT_b"], H).astype(bf16),
        bhh=_interleave_gate_bias(s["bhh_f"], s["bhh_b"], H),
        sw1T=s["sw1T"], sb1=s["sb1"], sw2T=s["sw2T"], sb2=s["sb2"],
        # scw1/scb1 drop out of the forward pass (softmax over a singleton dim).
        scw2=jnp.reshape(s["scw2"], (1, 2 * H)), scb2=s["scb2"],
        g1w=jnp.reshape(s["g1wT"], (1, M)), g1b=s["g1b"],
        g2w=jnp.reshape(s["g2wT"], (1, M)), g2b=s["g2b"],
        fc1T=s["fc1T"], fc1b=s["fc1b"], fc2T=s["fc2T"], fc2b=s["fc2b"],
    )
    return dict(embedding=raw["embedding"], word=wp, sent=sp)


# ----------------------------------------------------------------------------
# HAN forward (glue in plain JAX).
# ----------------------------------------------------------------------------
def han_forward(input_ids, attention_mask, token_type, matrix, packed):
    del token_type  # unused by the embedding surrogate
    B, S = input_ids.shape
    T = S - 1
    H = packed["word"]["whhT"].shape[0] // 2
    M = packed["sent"]["g1w"].shape[1]
    C1 = packed["sent"]["fc1T"].shape[1]
    C2 = packed["sent"]["fc2T"].shape[1]
    Bp = ((B + 7) // 8) * 8            # pad batch to full sublane tiles

    # BERT surrogate: deterministic embedding lookup, drop the [CLS]-like token.
    hidden = packed["embedding"][input_ids]                           # (B, S, E)
    x = hidden[:, 1:, :]                                              # (B, T, E)
    lengths = (jnp.sum(attention_mask, axis=1) - 1).astype(jnp.int32)  # (B,)

    if Bp > B:
        x = jnp.concatenate(
            [x, jnp.zeros((Bp - B, T, x.shape[-1]), x.dtype)], axis=0)
        lengths = jnp.concatenate(
            [lengths, jnp.zeros((Bp - B,), jnp.int32)], axis=0)

    x_tm = jnp.transpose(x, (1, 0, 2)).reshape(T * Bp, -1).astype(jnp.bfloat16)
    len_col = lengths.reshape(Bp, 1)

    slab = han_pallas(x_tm, len_col, packed["word"], packed["sent"],
                      B=B, Bp=Bp, T=T, H=H, M=M, C1=C1, C2=C2)

    logits1 = slab[:B, 0:C1]
    logits2 = slab[:B, C1:C1 + C2]
    word_w2 = slab[:B, C1 + C2:C1 + C2 + T]
    sent_w2 = slab[:B, C1 + C2 + T]

    # Reference computes `weights = logits_1 @ matrix` (detached, never returned).
    _ = jnp.dot(logits1, matrix.astype(jnp.float32))

    return logits1, logits2, word_w2, sent_w2


# ----------------------------------------------------------------------------
# Deterministic parameter construction (synthetic weights, std=0.05 normals).
# ----------------------------------------------------------------------------
def _nrm(key, shape, std=0.05):
    return (std * jax.random.normal(key, shape)).astype(jnp.float32)


def init_han_params(key, *, vocab, E, H, T, M, C1, C2):
    ks = iter(jax.random.split(key, 64))
    nk = lambda shape: _nrm(next(ks), shape)

    embedding = 0.02 * jax.random.normal(next(ks), (vocab, E), dtype=jnp.float32)

    word = dict(
        # BiGRU (input E, hidden H), gate order [r, z, n]; weights pre-transposed.
        wihT_f=nk((E, 3 * H)), whhT_f=nk((H, 3 * H)), bih_f=nk((1, 3 * H)), bhh_f=nk((1, 3 * H)),
        wihT_b=nk((E, 3 * H)), whhT_b=nk((H, 3 * H)), bih_b=nk((1, 3 * H)), bhh_b=nk((1, 3 * H)),
        ww1T=nk((2 * H, 2 * H)), bw1=nk((1, 2 * H)),
        ww2T=nk((2 * H, 2 * H)), bw2=nk((1, 2 * H)),
        cw1=nk((2 * H, 1)), cw2=nk((2 * H, 1)),            # context weights (no bias)
        g1wT=nk((T, 1)), g1b=nk((1, 1)),                   # MOE gates (max_turn = T)
        g2wT=nk((T, 1)), g2b=nk((1, 1)),
    )

    sent = dict(
        wihT_f=nk((2 * H, 3 * H)), whhT_f=nk((H, 3 * H)), bih_f=nk((1, 3 * H)), bhh_f=nk((1, 3 * H)),
        wihT_b=nk((2 * H, 3 * H)), whhT_b=nk((H, 3 * H)), bih_b=nk((1, 3 * H)), bhh_b=nk((1, 3 * H)),
        sw1T=nk((2 * H, 2 * H)), sb1=nk((1, 2 * H)),
        sw2T=nk((2 * H, 2 * H)), sb2=nk((1, 2 * H)),
        scw1=nk((2 * H, 1)), scb1=nk((1, 1)),              # cancel out of forward (kept for parity)
        scw2=nk((2 * H, 1)), scb2=nk((1, 1)),
        g1wT=nk((M, 1)), g1b=nk((1, 1)),                   # MOE gates (max_turn = M)
        g2wT=nk((M, 1)), g2b=nk((1, 1)),
        fc1T=nk((2 * H, C1)), fc1b=nk((1, C1)),
        fc2T=nk((2 * H, C2)), fc2b=nk((1, C2)),
    )
    return dict(embedding=embedding, word=word, sent=sent)


if __name__ == "__main__":
    B, S, H = 2, 8, 32          # batch, max_seq, hidden_size
    E = 1024                    # Roberta-large hidden width (GRU input_size=1024)
    M = 6                       # sent-level max_turn
    C1, C2 = 4, 3               # num_classes_1, num_classes_2
    vocab = 50

    key = jax.random.PRNGKey(0)
    pkey, ikey, mkey = jax.random.split(key, 3)
    raw_params = init_han_params(pkey, vocab=vocab, E=E, H=H, T=S - 1, M=M, C1=C1, C2=C2)
    packed = pack_han_params(raw_params)   # one-time repack into fused kernel layout

    input_ids = jax.random.randint(ikey, (B, S), 0, vocab, dtype=jnp.int32)
    attention_mask = jnp.array([[1] * S, [1] * (S - 2) + [0] * 2], dtype=jnp.int32)
    token_type = jnp.zeros((B, S), jnp.int32)
    matrix = jax.random.randint(mkey, (C1, C2), 0, 2, dtype=jnp.int32)  # reference casts long->float

    fwd = jax.jit(han_forward)
    logits_1, logits_2, word_w2, sent_w2 = jax.block_until_ready(
        fwd(input_ids, attention_mask, token_type, matrix, packed))

    assert logits_1.shape == (B, C1)
    assert logits_2.shape == (B, C2)
    assert word_w2.shape == (B, S - 1)
    assert sent_w2.shape == (B,)
    assert all(bool(jnp.all(jnp.isfinite(o))) for o in (logits_1, logits_2, word_w2, sent_w2))
    print("KERNEL_OK")
</pallas_src>

<mosaic_0001>
module attributes {stable_mosaic.version = 11 : i64} {
  func.func @_han_kernel(%arg0: memref<56x1024xbf16, #tpu.memory_space<vmem>>, %arg1: memref<8x1xi32, #tpu.memory_space<vmem>>, %arg2: memref<1024x192xbf16, #tpu.memory_space<vmem>>, %arg3: memref<1x192xf32, #tpu.memory_space<vmem>>, %arg4: memref<64x192xbf16, #tpu.memory_space<vmem>>, %arg5: memref<1x192xf32, #tpu.memory_space<vmem>>, %arg6: memref<64x128xbf16, #tpu.memory_space<vmem>>, %arg7: memref<1x128xf32, #tpu.memory_space<vmem>>, %arg8: memref<128x2xbf16, #tpu.memory_space<vmem>>, %arg9: memref<7xf32, #tpu.memory_space<smem>>, %arg10: memref<1xf32, #tpu.memory_space<smem>>, %arg11: memref<7xf32, #tpu.memory_space<smem>>, %arg12: memref<1xf32, #tpu.memory_space<smem>>, %arg13: memref<64x192xbf16, #tpu.memory_space<vmem>>, %arg14: memref<1x192xf32, #tpu.memory_space<vmem>>, %arg15: memref<64x192xbf16, #tpu.memory_space<vmem>>, %arg16: memref<1x192xf32, #tpu.memory_space<vmem>>, %arg17: memref<64x64xf32, #tpu.memory_space<vmem>>, %arg18: memref<1x64xf32, #tpu.memory_space<vmem>>, %arg19: memref<64x64xf32, #tpu.memory_space<vmem>>, %arg20: memref<1x64xf32, #tpu.memory_space<vmem>>, %arg21: memref<1x64xf32, #tpu.memory_space<vmem>>, %arg22: memref<1x1xf32, #tpu.memory_space<vmem>>, %arg23: memref<1x6xf32, #tpu.memory_space<vmem>>, %arg24: memref<1x1xf32, #tpu.memory_space<vmem>>, %arg25: memref<1x6xf32, #tpu.memory_space<vmem>>, %arg26: memref<1x1xf32, #tpu.memory_space<vmem>>, %arg27: memref<64x4xf32, #tpu.memory_space<vmem>>, %arg28: memref<1x4xf32, #tpu.memory_space<vmem>>, %arg29: memref<64x3xf32, #tpu.memory_space<vmem>>, %arg30: memref<1x3xf32, #tpu.memory_space<vmem>>, %arg31: memref<8x128xf32, #tpu.memory_space<vmem>>) attributes {dimension_semantics = [], scalar_prefetch = 0 : i64, scratch_operands = 0 : i64, tpu.core_type = #tpu.core_type<tc>} {
    %c0 = arith.constant 0 : index
    %c0_0 = arith.constant 0 : index
    %0 = vector.load %arg0[%c0, %c0_0] : memref<56x1024xbf16, #tpu.memory_space<vmem>>, vector<56x1024xbf16>
    %c0_1 = arith.constant 0 : index
    %c0_2 = arith.constant 0 : index
    %1 = vector.load %arg2[%c0_1, %c0_2] : memref<1024x192xbf16, #tpu.memory_space<vmem>>, vector<1024x192xbf16>
    %cst = arith.constant dense<0.000000e+00> : vector<56x192xf32>
    %2 = tpu.matmul %0, %1, %cst {dimension_numbers = #tpu.dot_dimension_numbers<[1], [0], [0], [1], [0, 0, 1, 1], [], []>} : vector<56x1024xbf16>, vector<1024x192xbf16>, vector<56x192xf32> -> vector<56x192xf32>
    %c0_3 = arith.constant 0 : index
    %c0_4 = arith.constant 0 : index
    %3 = vector.load %arg3[%c0_3, %c0_4] : memref<1x192xf32, #tpu.memory_space<vmem>>, vector<1x192xf32>
    %4 = vector.broadcast %3 : vector<1x192xf32> to vector<56x192xf32>
    %5 = arith.addf %2, %4 : vector<56x192xf32>
    %6 = vector.extract_strided_slice %5 {offsets = [0, 0], sizes = [56, 96], strides = [1, 1]} : vector<56x192xf32> to vector<56x96xf32>
    %7 = vector.extract_strided_slice %5 {offsets = [0, 96], sizes = [56, 96], strides = [1, 1]} : vector<56x192xf32> to vector<56x96xf32>
    %8 = vector.extract_strided_slice %7 {offsets = [48, 0], sizes = [8, 96], strides = [1, 1]} : vector<56x96xf32> to vector<8x96xf32>
    %9 = vector.extract_strided_slice %7 {offsets = [40, 0], sizes = [8, 96], strides = [1, 1]} : vector<56x96xf32> to vector<8x96xf32>
    %10 = vector.extract_strided_slice %7 {offsets = [32, 0], sizes = [8, 96], strides = [1, 1]} : vector<56x96xf32> to vector<8x96xf32>
    %11 = vector.extract_strided_slice %7 {offsets = [24, 0], sizes = [8, 96], strides = [1, 1]} : vector<56x96xf32> to vector<8x96xf32>
    %12 = vector.extract_strided_slice %7 {offsets = [16, 0], sizes = [8, 96], strides = [1, 1]} : vector<56x96xf32> to vector<8x96xf32>
    %13 = vector.extract_strided_slice %7 {offsets = [8, 0], sizes = [8, 96], strides = [1, 1]} : vector<56x96xf32> to vector<8x96xf32>
    %14 = vector.extract_strided_slice %7 {offsets = [0, 0], sizes = [8, 96], strides = [1, 1]} : vector<56x96xf32> to vector<8x96xf32>
    %15 = tpu.concatenate %8, %9, %10, %11, %12, %13, %14 in 0 : vector<8x96xf32>, vector<8x96xf32>, vector<8x96xf32>, vector<8x96xf32>, vector<8x96xf32>, vector<8x96xf32>, vector<8x96xf32> -> vector<56x96xf32>
    %16 = vector.extract_strided_slice %6 {offsets = [0, 0], sizes = [56, 32], strides = [1, 1]} : vector<56x96xf32> to vector<56x32xf32>
    %17 = vector.extract_strided_slice %15 {offsets = [0, 0], sizes = [56, 32], strides = [1, 1]} : vector<56x96xf32> to vector<56x32xf32>
    %18 = tpu.concatenate %16, %17 in 1 : vector<56x32xf32>, vector<56x32xf32> -> vector<56x64xf32>
    %19 = vector.extract_strided_slice %6 {offsets = [0, 32], sizes = [56, 32], strides = [1, 1]} : vector<56x96xf32> to vector<56x32xf32>
    %20 = vector.extract_strided_slice %15 {offsets = [0, 32], sizes = [56, 32], strides = [1, 1]} : vector<56x96xf32> to vector<56x32xf32>
    %21 = tpu.concatenate %19, %20 in 1 : vector<56x32xf32>, vector<56x32xf32> -> vector<56x64xf32>
    %22 = vector.extract_strided_slice %6 {offsets = [0, 64], sizes = [56, 32], strides = [1, 1]} : vector<56x96xf32> to vector<56x32xf32>
    %23 = vector.extract_strided_slice %15 {offsets = [0, 64], sizes = [56, 32], strides = [1, 1]} : vector<56x96xf32> to vector<56x32xf32>
    %24 = tpu.concatenate %22, %23 in 1 : vector<56x32xf32>, vector<56x32xf32> -> vector<56x64xf32>
    %c0_5 = arith.constant 0 : index
    %c0_6 = arith.constant 0 : index
    %25 = vector.load %arg4[%c0_5, %c0_6] : memref<64x192xbf16, #tpu.memory_space<vmem>>, vector<64x192xbf16>
    %c0_7 = arith.constant 0 : index
    %c0_8 = arith.constant 0 : index
    %26 = vector.load %arg5[%c0_7, %c0_8] : memref<1x192xf32, #tpu.memory_space<vmem>>, vector<1x192xf32>
    %cst_9 = arith.constant 0.000000e+00 : f32
    %27 = vector.broadcast %cst_9 : f32 to vector<8x64xf32>
    %28 = arith.truncf %27 : vector<8x64xf32> to vector<8x64xbf16>
    %cst_10 = arith.constant dense<0.000000e+00> : vector<8x192xf32>
    %29 = tpu.matmul %28, %25, %cst_10 {dimension_numbers = #tpu.dot_dimension_numbers<[1], [0], [0], [1], [0, 0, 1, 1], [], []>} : vector<8x64xbf16>, vector<64x192xbf16>, vector<8x192xf32> -> vector<8x192xf32>
    %30 = vector.broadcast %26 : vector<1x192xf32> to vector<8x192xf32>
    %31 = arith.addf %29, %30 : vector<8x192xf32>
    %32 = vector.extract_strided_slice %18 {offsets = [0, 0], sizes = [8, 64], strides = [1, 1]} : vector<56x64xf32> to vector<8x64xf32>
    %33 = vector.extract_strided_slice %31 {offsets = [0, 0], sizes = [8, 64], strides = [1, 1]} : vector<8x192xf32> to vector<8x64xf32>
    %34 = arith.addf %32, %33 : vector<8x64xf32>
    %35 = arith.negf %34 : vector<8x64xf32>
    %36 = math.exp %35 : vector<8x64xf32>
    %cst_11 = arith.constant 1.000000e+00 : f32
    %37 = vector.broadcast %cst_11 : f32 to vector<8x64xf32>
    %38 = arith.addf %37, %36 : vector<8x64xf32>
    %39 = arith.divf %37, %38 : vector<8x64xf32>
    %40 = vector.extract_strided_slice %21 {offsets = [0, 0], sizes = [8, 64], strides = [1, 1]} : vector<56x64xf32> to vector<8x64xf32>
    %41 = vector.extract_strided_slice %31 {offsets = [0, 64], sizes = [8, 64], strides = [1, 1]} : vector<8x192xf32> to vector<8x64xf32>
    %42 = arith.addf %40, %41 : vector<8x64xf32>
    %43 = arith.negf %42 : vector<8x64xf32>
    %44 = math.exp %43 : vector<8x64xf32>
    %cst_12 = arith.constant 1.000000e+00 : f32
    %45 = vector.broadcast %cst_12 : f32 to vector<8x64xf32>
    %46 = arith.addf %45, %44 : vector<8x64xf32>
    %47 = arith.divf %45, %46 : vector<8x64xf32>
    %48 = vector.extract_strided_slice %24 {offsets = [0, 0], sizes = [8, 64], strides = [1, 1]} : vector<56x64xf32> to vector<8x64xf32>
    %49 = vector.extract_strided_slice %31 {offsets = [0, 128], sizes = [8, 64], strides = [1, 1]} : vector<8x192xf32> to vector<8x64xf32>
    %50 = arith.mulf %39, %49 : vector<8x64xf32>
    %51 = arith.addf %48, %50 : vector<8x64xf32>
    %52 = math.tanh %51 : vector<8x64xf32>
    %cst_13 = arith.constant 1.000000e+00 : f32
    %53 = vector.broadcast %cst_13 : f32 to vector<8x64xf32>
    %54 = arith.subf %53, %47 : vector<8x64xf32>
    %55 = arith.mulf %54, %52 : vector<8x64xf32>
    %56 = arith.mulf %47, %27 : vector<8x64xf32>
    %57 = arith.addf %55, %56 : vector<8x64xf32>
    %58 = arith.truncf %57 : vector<8x64xf32> to vector<8x64xbf16>
    %cst_14 = arith.constant dense<0.000000e+00> : vector<8x192xf32>
    %59 = tpu.matmul %58, %25, %cst_14 {dimension_numbers = #tpu.dot_dimension_numbers<[1], [0], [0], [1], [0, 0, 1, 1], [], []>} : vector<8x64xbf16>, vector<64x192xbf16>, vector<8x192xf32> -> vector<8x192xf32>
    %60 = vector.broadcast %26 : vector<1x192xf32> to vector<8x192xf32>
    %61 = arith.addf %59, %60 : vector<8x192xf32>
    %62 = vector.extract_strided_slice %18 {offsets = [8, 0], sizes = [8, 64], strides = [1, 1]} : vector<56x64xf32> to vector<8x64xf32>
    %63 = vector.extract_strided_slice %61 {offsets = [0, 0], sizes = [8, 64], strides = [1, 1]} : vector<8x192xf32> to vector<8x64xf32>
    %64 = arith.addf %62, %63 : vector<8x64xf32>
    %65 = arith.negf %64 : vector<8x64xf32>
    %66 = math.exp %65 : vector<8x64xf32>
    %cst_15 = arith.constant 1.000000e+00 : f32
    %67 = vector.broadcast %cst_15 : f32 to vector<8x64xf32>
    %68 = arith.addf %67, %66 : vector<8x64xf32>
    %69 = arith.divf %67, %68 : vector<8x64xf32>
    %70 = vector.extract_strided_slice %21 {offsets = [8, 0], sizes = [8, 64], strides = [1, 1]} : vector<56x64xf32> to vector<8x64xf32>
    %71 = vector.extract_strided_slice %61 {offsets = [0, 64], sizes = [8, 64], strides = [1, 1]} : vector<8x192xf32> to vector<8x64xf32>
    %72 = arith.addf %70, %71 : vector<8x64xf32>
    %73 = arith.negf %72 : vector<8x64xf32>
    %74 = math.exp %73 : vector<8x64xf32>
    %cst_16 = arith.constant 1.000000e+00 : f32
    %75 = vector.broadcast %cst_16 : f32 to vector<8x64xf32>
    %76 = arith.addf %75, %74 : vector<8x64xf32>
    %77 = arith.divf %75, %76 : vector<8x64xf32>
    %78 = vector.extract_strided_slice %24 {offsets = [8, 0], sizes = [8, 64], strides = [1, 1]} : vector<56x64xf32> to vector<8x64xf32>
    %79 = vector.extract_strided_slice %61 {offsets = [0, 128], sizes = [8, 64], strides = [1, 1]} : vector<8x192xf32> to vector<8x64xf32>
    %80 = arith.mulf %69, %79 : vector<8x64xf32>
    %81 = arith.addf %78, %80 : vector<8x64xf32>
    %82 = math.tanh %81 : vector<8x64xf32>
    %cst_17 = arith.constant 1.000000e+00 : f32
    %83 = vector.broadcast %cst_17 : f32 to vector<8x64xf32>
    %84 = arith.subf %83, %77 : vector<8x64xf32>
    %85 = arith.mulf %84, %82 : vector<8x64xf32>
    %86 = arith.mulf %77, %57 : vector<8x64xf32>
    %87 = arith.addf %85, %86 : vector<8x64xf32>
    %88 = arith.truncf %87 : vector<8x64xf32> to vector<8x64xbf16>
    %cst_18 = arith.constant dense<0.000000e+00> : vector<8x192xf32>
    %89 = tpu.matmul %88, %25, %cst_18 {dimension_numbers = #tpu.dot_dimension_numbers<[1], [0], [0], [1], [0, 0, 1, 1], [], []>} : vector<8x64xbf16>, vector<64x192xbf16>, vector<8x192xf32> -> vector<8x192xf32>
    %90 = vector.broadcast %26 : vector<1x192xf32> to vector<8x192xf32>
    %91 = arith.addf %89, %90 : vector<8x192xf32>
    %92 = vector.extract_strided_slice %18 {offsets = [16, 0], sizes = [8, 64], strides = [1, 1]} : vector<56x64xf32> to vector<8x64xf32>
    %93 = vector.extract_strided_slice %91 {offsets = [0, 0], sizes = [8, 64], strides = [1, 1]} : vector<8x192xf32> to vector<8x64xf32>
    %94 = arith.addf %92, %93 : vector<8x64xf32>
    %95 = arith.negf %94 : vector<8x64xf32>
    %96 = math.exp %95 : vector<8x64xf32>
    %cst_19 = arith.constant 1.000000e+00 : f32
    %97 = vector.broadcast %cst_19 : f32 to vector<8x64xf32>
    %98 = arith.addf %97, %96 : vector<8x64xf32>
    %99 = arith.divf %97, %98 : vector<8x64xf32>
    %100 = vector.extract_strided_slice %21 {offsets = [16, 0], sizes = [8, 64], strides = [1, 1]} : vector<56x64xf32> to vector<8x64xf32>
    %101 = vector.extract_strided_slice %91 {offsets = [0, 64], sizes = [8, 64], strides = [1, 1]} : vector<8x192xf32> to vector<8x64xf32>
    %102 = arith.addf %100, %101 : vector<8x64xf32>
    %103 = arith.negf %102 : vector<8x64xf32>
    %104 = math.exp %103 : vector<8x64xf32>
    %cst_20 = arith.constant 1.000000e+00 : f32
    %105 = vector.broadcast %cst_20 : f32 to vector<8x64xf32>
    %106 = arith.addf %105, %104 : vector<8x64xf32>
    %107 = arith.divf %105, %106 : vector<8x64xf32>
    %108 = vector.extract_strided_slice %24 {offsets = [16, 0], sizes = [8, 64], strides = [1, 1]} : vector<56x64xf32> to vector<8x64xf32>
    %109 = vector.extract_strided_slice %91 {offsets = [0, 128], sizes = [8, 64], strides = [1, 1]} : vector<8x192xf32> to vector<8x64xf32>
    %110 = arith.mulf %99, %109 : vector<8x64xf32>
    %111 = arith.addf %108, %110 : vector<8x64xf32>
    %112 = math.tanh %111 : vector<8x64xf32>
    %cst_21 = arith.constant 1.000000e+00 : f32
    %113 = vector.broadcast %cst_21 : f32 to vector<8x64xf32>
    %114 = arith.subf %113, %107 : vector<8x64xf32>
    %115 = arith.mulf %114, %112 : vector<8x64xf32>
    %116 = arith.mulf %107, %87 : vector<8x64xf32>
    %117 = arith.addf %115, %116 : vector<8x64xf32>
    %118 = arith.truncf %117 : vector<8x64xf32> to vector<8x64xbf16>
    %cst_22 = arith.constant dense<0.000000e+00> : vector<8x192xf32>
    %119 = tpu.matmul %118, %25, %cst_22 {dimension_numbers = #tpu.dot_dimension_numbers<[1], [0], [0], [1], [0, 0, 1, 1], [], []>} : vector<8x64xbf16>, vector<64x192xbf16>, vector<8x192xf32> -> vector<8x192xf32>
    %120 = vector.broadcast %26 : vector<1x192xf32> to vector<8x192xf32>
    %121 = arith.addf %119, %120 : vector<8x192xf32>
    %122 = vector.extract_strided_slice %18 {offsets = [24, 0], sizes = [8, 64], strides = [1, 1]} : vector<56x64xf32> to vector<8x64xf32>
    %123 = vector.extract_strided_slice %121 {offsets = [0, 0], sizes = [8, 64], strides = [1, 1]} : vector<8x192xf32> to vector<8x64xf32>
    %124 = arith.addf %122, %123 : vector<8x64xf32>
    %125 = arith.negf %124 : vector<8x64xf32>
    %126 = math.exp %125 : vector<8x64xf32>
    %cst_23 = arith.constant 1.000000e+00 : f32
    %127 = vector.broadcast %cst_23 : f32 to vector<8x64xf32>
    %128 = arith.addf %127, %126 : vector<8x64xf32>
    %129 = arith.divf %127, %128 : vector<8x64xf32>
    %130 = vector.extract_strided_slice %21 {offsets = [24, 0], sizes = [8, 64], strides = [1, 1]} : vector<56x64xf32> to vector<8x64xf32>
    %131 = vector.extract_strided_slice %121 {offsets = [0, 64], sizes = [8, 64], strides = [1, 1]} : vector<8x192xf32> to vector<8x64xf32>
    %132 = arith.addf %130, %131 : vector<8x64xf32>
    %133 = arith.negf %132 : vector<8x64xf32>
    %134 = math.exp %133 : vector<8x64xf32>
    %cst_24 = arith.constant 1.000000e+00 : f32
    %135 = vector.broadcast %cst_24 : f32 to vector<8x64xf32>
    %136 = arith.addf %135, %134 : vector<8x64xf32>
    %137 = arith.divf %135, %136 : vector<8x64xf32>
    %138 = vector.extract_strided_slice %24 {offsets = [24, 0], sizes = [8, 64], strides = [1, 1]} : vector<56x64xf32> to vector<8x64xf32>
    %139 = vector.extract_strided_slice %121 {offsets = [0, 128], sizes = [8, 64], strides = [1, 1]} : vector<8x192xf32> to vector<8x64xf32>
    %140 = arith.mulf %129, %139 : vector<8x64xf32>
    %141 = arith.addf %138, %140 : vector<8x64xf32>
    %142 = math.tanh %141 : vector<8x64xf32>
    %cst_25 = arith.constant 1.000000e+00 : f32
    %143 = vector.broadcast %cst_25 : f32 to vector<8x64xf32>
    %144 = arith.subf %143, %137 : vector<8x64xf32>
    %145 = arith.mulf %144, %142 : vector<8x64xf32>
    %146 = arith.mulf %137, %117 : vector<8x64xf32>
    %147 = arith.addf %145, %146 : vector<8x64xf32>
    %148 = arith.truncf %147 : vector<8x64xf32> to vector<8x64xbf16>
    %cst_26 = arith.constant dense<0.000000e+00> : vector<8x192xf32>
    %149 = tpu.matmul %148, %25, %cst_26 {dimension_numbers = #tpu.dot_dimension_numbers<[1], [0], [0], [1], [0, 0, 1, 1], [], []>} : vector<8x64xbf16>, vector<64x192xbf16>, vector<8x192xf32> -> vector<8x192xf32>
    %150 = vector.broadcast %26 : vector<1x192xf32> to vector<8x192xf32>
    %151 = arith.addf %149, %150 : vector<8x192xf32>
    %152 = vector.extract_strided_slice %18 {offsets = [32, 0], sizes = [8, 64], strides = [1, 1]} : vector<56x64xf32> to vector<8x64xf32>
    %153 = vector.extract_strided_slice %151 {offsets = [0, 0], sizes = [8, 64], strides = [1, 1]} : vector<8x192xf32> to vector<8x64xf32>
    %154 = arith.addf %152, %153 : vector<8x64xf32>
    %155 = arith.negf %154 : vector<8x64xf32>
    %156 = math.exp %155 : vector<8x64xf32>
    %cst_27 = arith.constant 1.000000e+00 : f32
    %157 = vector.broadcast %cst_27 : f32 to vector<8x64xf32>
    %158 = arith.addf %157, %156 : vector<8x64xf32>
    %159 = arith.divf %157, %158 : vector<8x64xf32>
    %160 = vector.extract_strided_slice %21 {offsets = [32, 0], sizes = [8, 64], strides = [1, 1]} : vector<56x64xf32> to vector<8x64xf32>
    %161 = vector.extract_strided_slice %151 {offsets = [0, 64], sizes = [8, 64], strides = [1, 1]} : vector<8x192xf32> to vector<8x64xf32>
    %162 = arith.addf %160, %161 : vector<8x64xf32>
    %163 = arith.negf %162 : vector<8x64xf32>
    %164 = math.exp %163 : vector<8x64xf32>
    %cst_28 = arith.constant 1.000000e+00 : f32
    %165 = vector.broadcast %cst_28 : f32 to vector<8x64xf32>
    %166 = arith.addf %165, %164 : vector<8x64xf32>
    %167 = arith.divf %165, %166 : vector<8x64xf32>
    %168 = vector.extract_strided_slice %24 {offsets = [32, 0], sizes = [8, 64], strides = [1, 1]} : vector<56x64xf32> to vector<8x64xf32>
    %169 = vector.extract_strided_slice %151 {offsets = [0, 128], sizes = [8, 64], strides = [1, 1]} : vector<8x192xf32> to vector<8x64xf32>
    %170 = arith.mulf %159, %169 : vector<8x64xf32>
    %171 = arith.addf %168, %170 : vector<8x64xf32>
    %172 = math.tanh %171 : vector<8x64xf32>
    %cst_29 = arith.constant 1.000000e+00 : f32
    %173 = vector.broadcast %cst_29 : f32 to vector<8x64xf32>
    %174 = arith.subf %173, %167 : vector<8x64xf32>
    %175 = arith.mulf %174, %172 : vector<8x64xf32>
    %176 = arith.mulf %167, %147 : vector<8x64xf32>
    %177 = arith.addf %175, %176 : vector<8x64xf32>
    %178 = arith.truncf %177 : vector<8x64xf32> to vector<8x64xbf16>
    %cst_30 = arith.constant dense<0.000000e+00> : vector<8x192xf32>
    %179 = tpu.matmul %178, %25, %cst_30 {dimension_numbers = #tpu.dot_dimension_numbers<[1], [0], [0], [1], [0, 0, 1, 1], [], []>} : vector<8x64xbf16>, vector<64x192xbf16>, vector<8x192xf32> -> vector<8x192xf32>
    %180 = vector.broadcast %26 : vector<1x192xf32> to vector<8x192xf32>
    %181 = arith.addf %179, %180 : vector<8x192xf32>
    %182 = vector.extract_strided_slice %18 {offsets = [40, 0], sizes = [8, 64], strides = [1, 1]} : vector<56x64xf32> to vector<8x64xf32>
    %183 = vector.extract_strided_slice %181 {offsets = [0, 0], sizes = [8, 64], strides = [1, 1]} : vector<8x192xf32> to vector<8x64xf32>
    %184 = arith.addf %182, %183 : vector<8x64xf32>
    %185 = arith.negf %184 : vector<8x64xf32>
    %186 = math.exp %185 : vector<8x64xf32>
    %cst_31 = arith.constant 1.000000e+00 : f32
    %187 = vector.broadcast %cst_31 : f32 to vector<8x64xf32>
    %188 = arith.addf %187, %186 : vector<8x64xf32>
    %189 = arith.divf %187, %188 : vector<8x64xf32>
    %190 = vector.extract_strided_slice %21 {offsets = [40, 0], sizes = [8, 64], strides = [1, 1]} : vector<56x64xf32> to vector<8x64xf32>
    %191 = vector.extract_strided_slice %181 {offsets = [0, 64], sizes = [8, 64], strides = [1, 1]} : vector<8x192xf32> to vector<8x64xf32>
    %192 = arith.addf %190, %191 : vector<8x64xf32>
    %193 = arith.negf %192 : vector<8x64xf32>
    %194 = math.exp %193 : vector<8x64xf32>
    %cst_32 = arith.constant 1.000000e+00 : f32
    %195 = vector.broadcast %cst_32 : f32 to vector<8x64xf32>
    %196 = arith.addf %195, %194 : vector<8x64xf32>
    %197 = arith.divf %195, %196 : vector<8x64xf32>
    %198 = vector.extract_strided_slice %24 {offsets = [40, 0], sizes = [8, 64], strides = [1, 1]} : vector<56x64xf32> to vector<8x64xf32>
    %199 = vector.extract_strided_slice %181 {offsets = [0, 128], sizes = [8, 64], strides = [1, 1]} : vector<8x192xf32> to vector<8x64xf32>
    %200 = arith.mulf %189, %199 : vector<8x64xf32>
    %201 = arith.addf %198, %200 : vector<8x64xf32>
    %202 = math.tanh %201 : vector<8x64xf32>
    %cst_33 = arith.constant 1.000000e+00 : f32
    %203 = vector.broadcast %cst_33 : f32 to vector<8x64xf32>
    %204 = arith.subf %203, %197 : vector<8x64xf32>
    %205 = arith.mulf %204, %202 : vector<8x64xf32>
    %206 = arith.mulf %197, %177 : vector<8x64xf32>
    %207 = arith.addf %205, %206 : vector<8x64xf32>
    %208 = arith.truncf %207 : vector<8x64xf32> to vector<8x64xbf16>
    %cst_34 = arith.constant dense<0.000000e+00> : vector<8x192xf32>
    %209 = tpu.matmul %208, %25, %cst_34 {dimension_numbers = #tpu.dot_dimension_numbers<[1], [0], [0], [1], [0, 0, 1, 1], [], []>} : vector<8x64xbf16>, vector<64x192xbf16>, vector<8x192xf32> -> vector<8x192xf32>
    %210 = vector.broadcast %26 : vector<1x192xf32> to vector<8x192xf32>
    %211 = arith.addf %209, %210 : vector<8x192xf32>
    %212 = vector.extract_strided_slice %18 {offsets = [48, 0], sizes = [8, 64], strides = [1, 1]} : vector<56x64xf32> to vector<8x64xf32>
    %213 = vector.extract_strided_slice %211 {offsets = [0, 0], sizes = [8, 64], strides = [1, 1]} : vector<8x192xf32> to vector<8x64xf32>
    %214 = arith.addf %212, %213 : vector<8x64xf32>
    %215 = arith.negf %214 : vector<8x64xf32>
    %216 = math.exp %215 : vector<8x64xf32>
    %cst_35 = arith.constant 1.000000e+00 : f32
    %217 = vector.broadcast %cst_35 : f32 to vector<8x64xf32>
    %218 = arith.addf %217, %216 : vector<8x64xf32>
    %219 = arith.divf %217, %218 : vector<8x64xf32>
    %220 = vector.extract_strided_slice %21 {offsets = [48, 0], sizes = [8, 64], strides = [1, 1]} : vector<56x64xf32> to vector<8x64xf32>
    %221 = vector.extract_strided_slice %211 {offsets = [0, 64], sizes = [8, 64], strides = [1, 1]} : vector<8x192xf32> to vector<8x64xf32>
    %222 = arith.addf %220, %221 : vector<8x64xf32>
    %223 = arith.negf %222 : vector<8x64xf32>
    %224 = math.exp %223 : vector<8x64xf32>
    %cst_36 = arith.constant 1.000000e+00 : f32
    %225 = vector.broadcast %cst_36 : f32 to vector<8x64xf32>
    %226 = arith.addf %225, %224 : vector<8x64xf32>
    %227 = arith.divf %225, %226 : vector<8x64xf32>
    %228 = vector.extract_strided_slice %24 {offsets = [48, 0], sizes = [8, 64], strides = [1, 1]} : vector<56x64xf32> to vector<8x64xf32>
    %229 = vector.extract_strided_slice %211 {offsets = [0, 128], sizes = [8, 64], strides = [1, 1]} : vector<8x192xf32> to vector<8x64xf32>
    %230 = arith.mulf %219, %229 : vector<8x64xf32>
    %231 = arith.addf %228, %230 : vector<8x64xf32>
    %232 = math.tanh %231 : vector<8x64xf32>
    %cst_37 = arith.constant 1.000000e+00 : f32
    %233 = vector.broadcast %cst_37 : f32 to vector<8x64xf32>
    %234 = arith.subf %233, %227 : vector<8x64xf32>
    %235 = arith.mulf %234, %232 : vector<8x64xf32>
    %236 = arith.mulf %227, %207 : vector<8x64xf32>
    %237 = arith.addf %235, %236 : vector<8x64xf32>
    %238 = vector.extract_strided_slice %57 {offsets = [0, 0], sizes = [8, 32], strides = [1, 1]} : vector<8x64xf32> to vector<8x32xf32>
    %239 = vector.extract_strided_slice %237 {offsets = [0, 32], sizes = [8, 32], strides = [1, 1]} : vector<8x64xf32> to vector<8x32xf32>
    %240 = tpu.concatenate %238, %239 in 1 : vector<8x32xf32>, vector<8x32xf32> -> vector<8x64xf32>
    %241 = vector.extract_strided_slice %87 {offsets = [0, 0], sizes = [8, 32], strides = [1, 1]} : vector<8x64xf32> to vector<8x32xf32>
    %242 = vector.extract_strided_slice %207 {offsets = [0, 32], sizes = [8, 32], strides = [1, 1]} : vector<8x64xf32> to vector<8x32xf32>
    %243 = tpu.concatenate %241, %242 in 1 : vector<8x32xf32>, vector<8x32xf32> -> vector<8x64xf32>
    %244 = vector.extract_strided_slice %117 {offsets = [0, 0], sizes = [8, 32], strides = [1, 1]} : vector<8x64xf32> to vector<8x32xf32>
    %245 = vector.extract_strided_slice %177 {offsets = [0, 32], sizes = [8, 32], strides = [1, 1]} : vector<8x64xf32> to vector<8x32xf32>
    %246 = tpu.concatenate %244, %245 in 1 : vector<8x32xf32>, vector<8x32xf32> -> vector<8x64xf32>
    %247 = vector.extract_strided_slice %147 {offsets = [0, 0], sizes = [8, 32], strides = [1, 1]} : vector<8x64xf32> to vector<8x32xf32>
    %248 = vector.extract_strided_slice %147 {offsets = [0, 32], sizes = [8, 32], strides = [1, 1]} : vector<8x64xf32> to vector<8x32xf32>
    %249 = tpu.concatenate %247, %248 in 1 : vector<8x32xf32>, vector<8x32xf32> -> vector<8x64xf32>
    %250 = vector.extract_strided_slice %177 {offsets = [0, 0], sizes = [8, 32], strides = [1, 1]} : vector<8x64xf32> to vector<8x32xf32>
    %251 = vector.extract_strided_slice %117 {offsets = [0, 32], sizes = [8, 32], strides = [1, 1]} : vector<8x64xf32> to vector<8x32xf32>
    %252 = tpu.concatenate %250, %251 in 1 : vector<8x32xf32>, vector<8x32xf32> -> vector<8x64xf32>
    %253 = vector.extract_strided_slice %207 {offsets = [0, 0], sizes = [8, 32], strides = [1, 1]} : vector<8x64xf32> to vector<8x32xf32>
    %254 = vector.extract_strided_slice %87 {offsets = [0, 32], sizes = [8, 32], strides = [1, 1]} : vector<8x64xf32> to vector<8x32xf32>
    %255 = tpu.concatenate %253, %254 in 1 : vector<8x32xf32>, vector<8x32xf32> -> vector<8x64xf32>
    %256 = vector.extract_strided_slice %237 {offsets = [0, 0], sizes = [8, 32], strides = [1, 1]} : vector<8x64xf32> to vector<8x32xf32>
    %257 = vector.extract_strided_slice %57 {offsets = [0, 32], sizes = [8, 32], strides = [1, 1]} : vector<8x64xf32> to vector<8x32xf32>
    %258 = tpu.concatenate %256, %257 in 1 : vector<8x32xf32>, vector<8x32xf32> -> vector<8x64xf32>
    %259 = tpu.concatenate %240, %243, %246, %249, %252, %255, %258 in 0 : vector<8x64xf32>, vector<8x64xf32>, vector<8x64xf32>, vector<8x64xf32>, vector<8x64xf32>, vector<8x64xf32>, vector<8x64xf32> -> vector<56x64xf32>
    %260 = arith.truncf %259 : vector<56x64xf32> to vector<56x64xbf16>
    %c0_38 = arith.constant 0 : index
    %c0_39 = arith.constant 0 : index
    %261 = vector.load %arg6[%c0_38, %c0_39] : memref<64x128xbf16, #tpu.memory_space<vmem>>, vector<64x128xbf16>
    %cst_40 = arith.constant dense<0.000000e+00> : vector<56x128xf32>
    %262 = tpu.matmul %260, %261, %cst_40 {dimension_numbers = #tpu.dot_dimension_numbers<[1], [0], [0], [1], [0, 0, 1, 1], [], []>} : vector<56x64xbf16>, vector<64x128xbf16>, vector<56x128xf32> -> vector<56x128xf32>
    %c0_41 = arith.constant 0 : index
    %c0_42 = arith.constant 0 : index
    %263 = vector.load %arg7[%c0_41, %c0_42] : memref<1x128xf32, #tpu.memory_space<vmem>>, vector<1x128xf32>
    %264 = vector.broadcast %263 : vector<1x128xf32> to vector<56x128xf32>
    %265 = arith.addf %262, %264 : vector<56x128xf32>
    %266 = math.tanh %265 : vector<56x128xf32>
    %267 = arith.truncf %266 : vector<56x128xf32> to vector<56x128xbf16>
    %c0_43 = arith.constant 0 : index
    %c0_44 = arith.constant 0 : index
    %268 = vector.load %arg8[%c0_43, %c0_44] : memref<128x2xbf16, #tpu.memory_space<vmem>>, vector<128x2xbf16>
    %cst_45 = arith.constant dense<0.000000e+00> : vector<56x2xf32>
    %269 = tpu.matmul %267, %268, %cst_45 {dimension_numbers = #tpu.dot_dimension_numbers<[1], [0], [0], [1], [0, 0, 1, 1], [], []>} : vector<56x128xbf16>, vector<128x2xbf16>, vector<56x2xf32> -> vector<56x2xf32>
    %c0_46 = arith.constant 0 : index
    %c0_47 = arith.constant 0 : index
    %270 = vector.load %arg1[%c0_46, %c0_47] : memref<8x1xi32, #tpu.memory_space<vmem>>, vector<8x1xi32>
    %271 = vector.extract_strided_slice %269 {offsets = [0, 0], sizes = [8, 2], strides = [1, 1]} : vector<56x2xf32> to vector<8x2xf32>
    %c0_i32 = arith.constant 0 : i32
    %272 = vector.broadcast %c0_i32 : i32 to vector<8x1xi32>
    %273 = arith.cmpi sle, %270, %272 : vector<8x1xi32>
    %cst_48 = arith.constant -1.000000e+09 : f32
    %274 = vector.shape_cast %273 : vector<8x1xi1> to vector<8x1xi1>
    %275 = vector.broadcast %274 : vector<8x1xi1> to vector<8x2xi1>
    %276 = vector.broadcast %cst_48 : f32 to vector<8x2xf32>
    %277 = arith.select %275, %276, %271 : vector<8x2xi1>, vector<8x2xf32>
    %278 = vector.extract_strided_slice %269 {offsets = [8, 0], sizes = [8, 2], strides = [1, 1]} : vector<56x2xf32> to vector<8x2xf32>
    %c1_i32 = arith.constant 1 : i32
    %279 = vector.broadcast %c1_i32 : i32 to vector<8x1xi32>
    %280 = arith.cmpi sle, %270, %279 : vector<8x1xi32>
    %cst_49 = arith.constant -1.000000e+09 : f32
    %281 = vector.shape_cast %280 : vector<8x1xi1> to vector<8x1xi1>
    %282 = vector.broadcast %281 : vector<8x1xi1> to vector<8x2xi1>
    %283 = vector.broadcast %cst_49 : f32 to vector<8x2xf32>
    %284 = arith.select %282, %283, %278 : vector<8x2xi1>, vector<8x2xf32>
    %285 = vector.extract_strided_slice %269 {offsets = [16, 0], sizes = [8, 2], strides = [1, 1]} : vector<56x2xf32> to vector<8x2xf32>
    %c2_i32 = arith.constant 2 : i32
    %286 = vector.broadcast %c2_i32 : i32 to vector<8x1xi32>
    %287 = arith.cmpi sle, %270, %286 : vector<8x1xi32>
    %cst_50 = arith.constant -1.000000e+09 : f32
    %288 = vector.shape_cast %287 : vector<8x1xi1> to vector<8x1xi1>
    %289 = vector.broadcast %288 : vector<8x1xi1> to vector<8x2xi1>
    %290 = vector.broadcast %cst_50 : f32 to vector<8x2xf32>
    %291 = arith.select %289, %290, %285 : vector<8x2xi1>, vector<8x2xf32>
    %292 = vector.extract_strided_slice %269 {offsets = [24, 0], sizes = [8, 2], strides = [1, 1]} : vector<56x2xf32> to vector<8x2xf32>
    %c3_i32 = arith.constant 3 : i32
    %293 = vector.broadcast %c3_i32 : i32 to vector<8x1xi32>
    %294 = arith.cmpi sle, %270, %293 : vector<8x1xi32>
    %cst_51 = arith.constant -1.000000e+09 : f32
    %295 = vector.shape_cast %294 : vector<8x1xi1> to vector<8x1xi1>
    %296 = vector.broadcast %295 : vector<8x1xi1> to vector<8x2xi1>
    %297 = vector.broadcast %cst_51 : f32 to vector<8x2xf32>
    %298 = arith.select %296, %297, %292 : vector<8x2xi1>, vector<8x2xf32>
    %299 = vector.extract_strided_slice %269 {offsets = [32, 0], sizes = [8, 2], strides = [1, 1]} : vector<56x2xf32> to vector<8x2xf32>
    %c4_i32 = arith.constant 4 : i32
    %300 = vector.broadcast %c4_i32 : i32 to vector<8x1xi32>
    %301 = arith.cmpi sle, %270, %300 : vector<8x1xi32>
    %cst_52 = arith.constant -1.000000e+09 : f32
    %302 = vector.shape_cast %301 : vector<8x1xi1> to vector<8x1xi1>
    %303 = vector.broadcast %302 : vector<8x1xi1> to vector<8x2xi1>
    %304 = vector.broadcast %cst_52 : f32 to vector<8x2xf32>
    %305 = arith.select %303, %304, %299 : vector<8x2xi1>, vector<8x2xf32>
    %306 = vector.extract_strided_slice %269 {offsets = [40, 0], sizes = [8, 2], strides = [1, 1]} : vector<56x2xf32> to vector<8x2xf32>
    %c5_i32 = arith.constant 5 : i32
    %307 = vector.broadcast %c5_i32 : i32 to vector<8x1xi32>
    %308 = arith.cmpi sle, %270, %307 : vector<8x1xi32>
    %cst_53 = arith.constant -1.000000e+09 : f32
    %309 = vector.shape_cast %308 : vector<8x1xi1> to vector<8x1xi1>
    %310 = vector.broadcast %309 : vector<8x1xi1> to vector<8x2xi1>
    %311 = vector.broadcast %cst_53 : f32 to vector<8x2xf32>
    %312 = arith.select %310, %311, %306 : vector<8x2xi1>, vector<8x2xf32>
    %313 = vector.extract_strided_slice %269 {offsets = [48, 0], sizes = [8, 2], strides = [1, 1]} : vector<56x2xf32> to vector<8x2xf32>
    %c6_i32 = arith.constant 6 : i32
    %314 = vector.broadcast %c6_i32 : i32 to vector<8x1xi32>
    %315 = arith.cmpi sle, %270, %314 : vector<8x1xi32>
    %cst_54 = arith.constant -1.000000e+09 : f32
    %316 = vector.shape_cast %315 : vector<8x1xi1> to vector<8x1xi1>
    %317 = vector.broadcast %316 : vector<8x1xi1> to vector<8x2xi1>
    %318 = vector.broadcast %cst_54 : f32 to vector<8x2xf32>
    %319 = arith.select %317, %318, %313 : vector<8x2xi1>, vector<8x2xf32>
    %320 = arith.maximumf %277, %284 : vector<8x2xf32>
    %321 = arith.maximumf %320, %291 : vector<8x2xf32>
    %322 = arith.maximumf %321, %298 : vector<8x2xf32>
    %323 = arith.maximumf %322, %305 : vector<8x2xf32>
    %324 = arith.maximumf %323, %312 : vector<8x2xf32>
    %325 = arith.maximumf %324, %319 : vector<8x2xf32>
    %326 = arith.subf %277, %325 : vector<8x2xf32>
    %327 = math.exp %326 : vector<8x2xf32>
    %328 = arith.subf %284, %325 : vector<8x2xf32>
    %329 = math.exp %328 : vector<8x2xf32>
    %330 = arith.subf %291, %325 : vector<8x2xf32>
    %331 = math.exp %330 : vector<8x2xf32>
    %332 = arith.subf %298, %325 : vector<8x2xf32>
    %333 = math.exp %332 : vector<8x2xf32>
    %334 = arith.subf %305, %325 : vector<8x2xf32>
    %335 = math.exp %334 : vector<8x2xf32>
    %336 = arith.subf %312, %325 : vector<8x2xf32>
    %337 = math.exp %336 : vector<8x2xf32>
    %338 = arith.subf %319, %325 : vector<8x2xf32>
    %339 = math.exp %338 : vector<8x2xf32>
    %340 = arith.addf %327, %329 : vector<8x2xf32>
    %341 = arith.addf %340, %331 : vector<8x2xf32>
    %342 = arith.addf %341, %333 : vector<8x2xf32>
    %343 = arith.addf %342, %335 : vector<8x2xf32>
    %344 = arith.addf %343, %337 : vector<8x2xf32>
    %345 = arith.addf %344, %339 : vector<8x2xf32>
    %346 = tpu.reciprocal %345 {approx = true} : vector<8x2xf32> -> vector<8x2xf32>
    %347 = arith.mulf %327, %346 : vector<8x2xf32>
    %348 = arith.mulf %329, %346 : vector<8x2xf32>
    %349 = arith.mulf %331, %346 : vector<8x2xf32>
    %350 = arith.mulf %333, %346 : vector<8x2xf32>
    %351 = arith.mulf %335, %346 : vector<8x2xf32>
    %352 = arith.mulf %337, %346 : vector<8x2xf32>
    %353 = arith.mulf %339, %346 : vector<8x2xf32>
    %cst_55 = arith.constant 0.000000e+00 : f32
    %354 = vector.broadcast %cst_55 : f32 to vector<8x2xf32>
    %cst_56 = arith.constant 0.000000e+00 : f32
    %355 = vector.broadcast %cst_56 : f32 to vector<8x2xf32>
    %c0_57 = arith.constant 0 : index
    %356 = memref.load %arg9[%c0_57] : memref<7xf32, #tpu.memory_space<smem>>
    %357 = vector.broadcast %356 : f32 to vector<8x2xf32>
    %358 = arith.mulf %347, %357 : vector<8x2xf32>
    %359 = arith.addf %354, %358 : vector<8x2xf32>
    %c0_58 = arith.constant 0 : index
    %360 = memref.load %arg11[%c0_58] : memref<7xf32, #tpu.memory_space<smem>>
    %361 = vector.broadcast %360 : f32 to vector<8x2xf32>
    %362 = arith.mulf %347, %361 : vector<8x2xf32>
    %363 = arith.addf %355, %362 : vector<8x2xf32>
    %c1 = arith.constant 1 : index
    %364 = memref.load %arg9[%c1] : memref<7xf32, #tpu.memory_space<smem>>
    %365 = vector.broadcast %364 : f32 to vector<8x2xf32>
    %366 = arith.mulf %348, %365 : vector<8x2xf32>
    %367 = arith.addf %359, %366 : vector<8x2xf32>
    %c1_59 = arith.constant 1 : index
    %368 = memref.load %arg11[%c1_59] : memref<7xf32, #tpu.memory_space<smem>>
    %369 = vector.broadcast %368 : f32 to vector<8x2xf32>
    %370 = arith.mulf %348, %369 : vector<8x2xf32>
    %371 = arith.addf %363, %370 : vector<8x2xf32>
    %c2 = arith.constant 2 : index
    %372 = memref.load %arg9[%c2] : memref<7xf32, #tpu.memory_space<smem>>
    %373 = vector.broadcast %372 : f32 to vector<8x2xf32>
    %374 = arith.mulf %349, %373 : vector<8x2xf32>
    %375 = arith.addf %367, %374 : vector<8x2xf32>
    %c2_60 = arith.constant 2 : index
    %376 = memref.load %arg11[%c2_60] : memref<7xf32, #tpu.memory_space<smem>>
    %377 = vector.broadcast %376 : f32 to vector<8x2xf32>
    %378 = arith.mulf %349, %377 : vector<8x2xf32>
    %379 = arith.addf %371, %378 : vector<8x2xf32>
    %c3 = arith.constant 3 : index
    %380 = memref.load %arg9[%c3] : memref<7xf32, #tpu.memory_space<smem>>
    %381 = vector.broadcast %380 : f32 to vector<8x2xf32>
    %382 = arith.mulf %350, %381 : vector<8x2xf32>
    %383 = arith.addf %375, %382 : vector<8x2xf32>
    %c3_61 = arith.constant 3 : index
    %384 = memref.load %arg11[%c3_61] : memref<7xf32, #tpu.memory_space<smem>>
    %385 = vector.broadcast %384 : f32 to vector<8x2xf32>
    %386 = arith.mulf %350, %385 : vector<8x2xf32>
    %387 = arith.addf %379, %386 : vector<8x2xf32>
    %c4 = arith.constant 4 : index
    %388 = memref.load %arg9[%c4] : memref<7xf32, #tpu.memory_space<smem>>
    %389 = vector.broadcast %388 : f32 to vector<8x2xf32>
    %390 = arith.mulf %351, %389 : vector<8x2xf32>
    %391 = arith.addf %383, %390 : vector<8x2xf32>
    %c4_62 = arith.constant 4 : index
    %392 = memref.load %arg11[%c4_62] : memref<7xf32, #tpu.memory_space<smem>>
    %393 = vector.broadcast %392 : f32 to vector<8x2xf32>
    %394 = arith.mulf %351, %393 : vector<8x2xf32>
    %395 = arith.addf %387, %394 : vector<8x2xf32>
    %c5 = arith.constant 5 : index
    %396 = memref.load %arg9[%c5] : memref<7xf32, #tpu.memory_space<smem>>
    %397 = vector.broadcast %396 : f32 to vector<8x2xf32>
    %398 = arith.mulf %352, %397 : vector<8x2xf32>
    %399 = arith.addf %391, %398 : vector<8x2xf32>
    %c5_63 = arith.constant 5 : index
    %400 = memref.load %arg11[%c5_63] : memref<7xf32, #tpu.memory_space<smem>>
    %401 = vector.broadcast %400 : f32 to vector<8x2xf32>
    %402 = arith.mulf %352, %401 : vector<8x2xf32>
    %403 = arith.addf %395, %402 : vector<8x2xf32>
    %c6 = arith.constant 6 : index
    %404 = memref.load %arg9[%c6] : memref<7xf32, #tpu.memory_space<smem>>
    %405 = vector.broadcast %404 : f32 to vector<8x2xf32>
    %406 = arith.mulf %353, %405 : vector<8x2xf32>
    %407 = arith.addf %399, %406 : vector<8x2xf32>
    %c6_64 = arith.constant 6 : index
    %408 = memref.load %arg11[%c6_64] : memref<7xf32, #tpu.memory_space<smem>>
    %409 = vector.broadcast %408 : f32 to vector<8x2xf32>
    %410 = arith.mulf %353, %409 : vector<8x2xf32>
    %411 = arith.addf %403, %410 : vector<8x2xf32>
    %c0_65 = arith.constant 0 : index
    %412 = memref.load %arg10[%c0_65] : memref<1xf32, #tpu.memory_space<smem>>
    %413 = vector.broadcast %412 : f32 to vector<8x2xf32>
    %414 = arith.addf %407, %413 : vector<8x2xf32>
    %cst_66 = arith.constant dense<0xFF800000> : vector<8xf32>
    %415 = vector.multi_reduction <maximumf>, %414, %cst_66 [1] : vector<8x2xf32> to vector<8xf32>
    %416 = vector.shape_cast %415 : vector<8xf32> to vector<8x1xf32>
    %417 = vector.broadcast %416 : vector<8x1xf32> to vector<8x2xf32>
    %418 = arith.subf %414, %417 : vector<8x2xf32>
    %419 = math.exp %418 : vector<8x2xf32>
    %cst_67 = arith.constant dense<0.000000e+00> : vector<8xf32>
    %420 = vector.multi_reduction <add>, %419, %cst_67 [1] : vector<8x2xf32> to vector<8xf32>
    %421 = vector.shape_cast %420 : vector<8xf32> to vector<8x1xf32>
    %422 = tpu.reciprocal %421 {approx = true} : vector<8x1xf32> -> vector<8x1xf32>
    %423 = vector.broadcast %422 : vector<8x1xf32> to vector<8x2xf32>
    %424 = arith.mulf %419, %423 : vector<8x2xf32>
    %c0_68 = arith.constant 0 : index
    %425 = memref.load %arg12[%c0_68] : memref<1xf32, #tpu.memory_space<smem>>
    %426 = vector.broadcast %425 : f32 to vector<8x2xf32>
    %427 = arith.addf %411, %426 : vector<8x2xf32>
    %cst_69 = arith.constant dense<0xFF800000> : vector<8xf32>
    %428 = vector.multi_reduction <maximumf>, %427, %cst_69 [1] : vector<8x2xf32> to vector<8xf32>
    %429 = vector.shape_cast %428 : vector<8xf32> to vector<8x1xf32>
    %430 = vector.broadcast %429 : vector<8x1xf32> to vector<8x2xf32>
    %431 = arith.subf %427, %430 : vector<8x2xf32>
    %432 = math.exp %431 : vector<8x2xf32>
    %cst_70 = arith.constant dense<0.000000e+00> : vector<8xf32>
    %433 = vector.multi_reduction <add>, %432, %cst_70 [1] : vector<8x2xf32> to vector<8xf32>
    %434 = vector.shape_cast %433 : vector<8xf32> to vector<8x1xf32>
    %435 = tpu.reciprocal %434 {approx = true} : vector<8x1xf32> -> vector<8x1xf32>
    %436 = vector.broadcast %435 : vector<8x1xf32> to vector<8x2xf32>
    %437 = arith.mulf %432, %436 : vector<8x2xf32>
    %438 = arith.mulf %424, %347 : vector<8x2xf32>
    %cst_71 = arith.constant dense<0.000000e+00> : vector<8xf32>
    %439 = vector.multi_reduction <add>, %438, %cst_71 [1] : vector<8x2xf32> to vector<8xf32>
    %440 = vector.shape_cast %439 : vector<8xf32> to vector<8x1xf32>
    %441 = arith.mulf %424, %348 : vector<8x2xf32>
    %cst_72 = arith.constant dense<0.000000e+00> : vector<8xf32>
    %442 = vector.multi_reduction <add>, %441, %cst_72 [1] : vector<8x2xf32> to vector<8xf32>
    %443 = vector.shape_cast %442 : vector<8xf32> to vector<8x1xf32>
    %444 = arith.mulf %424, %349 : vector<8x2xf32>
    %cst_73 = arith.constant dense<0.000000e+00> : vector<8xf32>
    %445 = vector.multi_reduction <add>, %444, %cst_73 [1] : vector<8x2xf32> to vector<8xf32>
    %446 = vector.shape_cast %445 : vector<8xf32> to vector<8x1xf32>
    %447 = arith.mulf %424, %350 : vector<8x2xf32>
    %cst_74 = arith.constant dense<0.000000e+00> : vector<8xf32>
    %448 = vector.multi_reduction <add>, %447, %cst_74 [1] : vector<8x2xf32> to vector<8xf32>
    %449 = vector.shape_cast %448 : vector<8xf32> to vector<8x1xf32>
    %450 = arith.mulf %424, %351 : vector<8x2xf32>
    %cst_75 = arith.constant dense<0.000000e+00> : vector<8xf32>
    %451 = vector.multi_reduction <add>, %450, %cst_75 [1] : vector<8x2xf32> to vector<8xf32>
    %452 = vector.shape_cast %451 : vector<8xf32> to vector<8x1xf32>
    %453 = arith.mulf %424, %352 : vector<8x2xf32>
    %cst_76 = arith.constant dense<0.000000e+00> : vector<8xf32>
    %454 = vector.multi_reduction <add>, %453, %cst_76 [1] : vector<8x2xf32> to vector<8xf32>
    %455 = vector.shape_cast %454 : vector<8xf32> to vector<8x1xf32>
    %456 = arith.mulf %424, %353 : vector<8x2xf32>
    %cst_77 = arith.constant dense<0.000000e+00> : vector<8xf32>
    %457 = vector.multi_reduction <add>, %456, %cst_77 [1] : vector<8x2xf32> to vector<8xf32>
    %458 = vector.shape_cast %457 : vector<8xf32> to vector<8x1xf32>
    %459 = arith.mulf %437, %347 : vector<8x2xf32>
    %cst_78 = arith.constant dense<0.000000e+00> : vector<8xf32>
    %460 = vector.multi_reduction <add>, %459, %cst_78 [1] : vector<8x2xf32> to vector<8xf32>
    %461 = vector.shape_cast %460 : vector<8xf32> to vector<8x1xf32>
    %462 = arith.mulf %437, %348 : vector<8x2xf32>
    %cst_79 = arith.constant dense<0.000000e+00> : vector<8xf32>
    %463 = vector.multi_reduction <add>, %462, %cst_79 [1] : vector<8x2xf32> to vector<8xf32>
    %464 = vector.shape_cast %463 : vector<8xf32> to vector<8x1xf32>
    %465 = arith.mulf %437, %349 : vector<8x2xf32>
    %cst_80 = arith.constant dense<0.000000e+00> : vector<8xf32>
    %466 = vector.multi_reduction <add>, %465, %cst_80 [1] : vector<8x2xf32> to vector<8xf32>
    %467 = vector.shape_cast %466 : vector<8xf32> to vector<8x1xf32>
    %468 = arith.mulf %437, %350 : vector<8x2xf32>
    %cst_81 = arith.constant dense<0.000000e+00> : vector<8xf32>
    %469 = vector.multi_reduction <add>, %468, %cst_81 [1] : vector<8x2xf32> to vector<8xf32>
    %470 = vector.shape_cast %469 : vector<8xf32> to vector<8x1xf32>
    %471 = arith.mulf %437, %351 : vector<8x2xf32>
    %cst_82 = arith.constant dense<0.000000e+00> : vector<8xf32>
    %472 = vector.multi_reduction <add>, %471, %cst_82 [1] : vector<8x2xf32> to vector<8xf32>
    %473 = vector.shape_cast %472 : vector<8xf32> to vector<8x1xf32>
    %474 = arith.mulf %437, %352 : vector<8x2xf32>
    %cst_83 = arith.constant dense<0.000000e+00> : vector<8xf32>
    %475 = vector.multi_reduction <add>, %474, %cst_83 [1] : vector<8x2xf32> to vector<8xf32>
    %476 = vector.shape_cast %475 : vector<8xf32> to vector<8x1xf32>
    %477 = arith.mulf %437, %353 : vector<8x2xf32>
    %cst_84 = arith.constant dense<0.000000e+00> : vector<8xf32>
    %478 = vector.multi_reduction <add>, %477, %cst_84 [1] : vector<8x2xf32> to vector<8xf32>
    %479 = vector.shape_cast %478 : vector<8xf32> to vector<8x1xf32>
    %cst_85 = arith.constant 0.000000e+00 : f32
    %480 = vector.broadcast %cst_85 : f32 to vector<8x64xf32>
    %cst_86 = arith.constant 0.000000e+00 : f32
    %481 = vector.broadcast %cst_86 : f32 to vector<8x64xf32>
    %482 = vector.broadcast %440 : vector<8x1xf32> to vector<8x64xf32>
    %483 = arith.mulf %240, %482 : vector<8x64xf32>
    %484 = arith.addf %480, %483 : vector<8x64xf32>
    %485 = vector.broadcast %461 : vector<8x1xf32> to vector<8x64xf32>
    %486 = arith.mulf %240, %485 : vector<8x64xf32>
    %487 = arith.addf %481, %486 : vector<8x64xf32>
    %488 = vector.broadcast %443 : vector<8x1xf32> to vector<8x64xf32>
    %489 = arith.mulf %243, %488 : vector<8x64xf32>
    %490 = arith.addf %484, %489 : vector<8x64xf32>
    %491 = vector.broadcast %464 : vector<8x1xf32> to vector<8x64xf32>
    %492 = arith.mulf %243, %491 : vector<8x64xf32>
    %493 = arith.addf %487, %492 : vector<8x64xf32>
    %494 = vector.broadcast %446 : vector<8x1xf32> to vector<8x64xf32>
    %495 = arith.mulf %246, %494 : vector<8x64xf32>
    %496 = arith.addf %490, %495 : vector<8x64xf32>
    %497 = vector.broadcast %467 : vector<8x1xf32> to vector<8x64xf32>
    %498 = arith.mulf %246, %497 : vector<8x64xf32>
    %499 = arith.addf %493, %498 : vector<8x64xf32>
    %500 = vector.broadcast %449 : vector<8x1xf32> to vector<8x64xf32>
    %501 = arith.mulf %249, %500 : vector<8x64xf32>
    %502 = arith.addf %496, %501 : vector<8x64xf32>
    %503 = vector.broadcast %470 : vector<8x1xf32> to vector<8x64xf32>
    %504 = arith.mulf %249, %503 : vector<8x64xf32>
    %505 = arith.addf %499, %504 : vector<8x64xf32>
    %506 = vector.broadcast %452 : vector<8x1xf32> to vector<8x64xf32>
    %507 = arith.mulf %252, %506 : vector<8x64xf32>
    %508 = arith.addf %502, %507 : vector<8x64xf32>
    %509 = vector.broadcast %473 : vector<8x1xf32> to vector<8x64xf32>
    %510 = arith.mulf %252, %509 : vector<8x64xf32>
    %511 = arith.addf %505, %510 : vector<8x64xf32>
    %512 = vector.broadcast %455 : vector<8x1xf32> to vector<8x64xf32>
    %513 = arith.mulf %255, %512 : vector<8x64xf32>
    %514 = arith.addf %508, %513 : vector<8x64xf32>
    %515 = vector.broadcast %476 : vector<8x1xf32> to vector<8x64xf32>
    %516 = arith.mulf %255, %515 : vector<8x64xf32>
    %517 = arith.addf %511, %516 : vector<8x64xf32>
    %518 = vector.broadcast %458 : vector<8x1xf32> to vector<8x64xf32>
    %519 = arith.mulf %258, %518 : vector<8x64xf32>
    %520 = arith.addf %514, %519 : vector<8x64xf32>
    %521 = vector.broadcast %479 : vector<8x1xf32> to vector<8x64xf32>
    %522 = arith.mulf %258, %521 : vector<8x64xf32>
    %523 = arith.addf %517, %522 : vector<8x64xf32>
    %524 = tpu.concatenate %461, %464, %467, %470, %473, %476, %479 in 1 : vector<8x1xf32>, vector<8x1xf32>, vector<8x1xf32>, vector<8x1xf32>, vector<8x1xf32>, vector<8x1xf32>, vector<8x1xf32> -> vector<8x7xf32>
    %cst_87 = arith.constant 0.000000e+00 : f32
    %525 = vector.broadcast %cst_87 : f32 to vector<6x64xf32>
    %526 = vector.extract_strided_slice %520 {offsets = [0, 0], sizes = [1, 64], strides = [1, 1]} : vector<8x64xf32> to vector<1x64xf32>
    %527 = vector.extract_strided_slice %523 {offsets = [0, 0], sizes = [1, 64], strides = [1, 1]} : vector<8x64xf32> to vector<1x64xf32>
    %528 = tpu.concatenate %526, %527, %525 in 0 : vector<1x64xf32>, vector<1x64xf32>, vector<6x64xf32> -> vector<8x64xf32>
    %529 = vector.extract_strided_slice %520 {offsets = [1, 0], sizes = [1, 64], strides = [1, 1]} : vector<8x64xf32> to vector<1x64xf32>
    %530 = vector.extract_strided_slice %523 {offsets = [1, 0], sizes = [1, 64], strides = [1, 1]} : vector<8x64xf32> to vector<1x64xf32>
    %531 = tpu.concatenate %529, %530, %525 in 0 : vector<1x64xf32>, vector<1x64xf32>, vector<6x64xf32> -> vector<8x64xf32>
    %532 = tpu.concatenate %528, %531 in 0 : vector<8x64xf32>, vector<8x64xf32> -> vector<16x64xf32>
    %533 = arith.truncf %532 : vector<16x64xf32> to vector<16x64xbf16>
    %c0_88 = arith.constant 0 : index
    %c0_89 = arith.constant 0 : index
    %534 = vector.load %arg13[%c0_88, %c0_89] : memref<64x192xbf16, #tpu.memory_space<vmem>>, vector<64x192xbf16>
    %cst_90 = arith.constant dense<0.000000e+00> : vector<16x192xf32>
    %535 = tpu.matmul %533, %534, %cst_90 {dimension_numbers = #tpu.dot_dimension_numbers<[1], [0], [0], [1], [0, 0, 1, 1], [], []>} : vector<16x64xbf16>, vector<64x192xbf16>, vector<16x192xf32> -> vector<16x192xf32>
    %c0_91 = arith.constant 0 : index
    %c0_92 = arith.constant 0 : index
    %536 = vector.load %arg14[%c0_91, %c0_92] : memref<1x192xf32, #tpu.memory_space<vmem>>, vector<1x192xf32>
    %537 = vector.broadcast %536 : vector<1x192xf32> to vector<16x192xf32>
    %538 = arith.addf %535, %537 : vector<16x192xf32>
    %539 = vector.extract_strided_slice %538 {offsets = [0, 0], sizes = [16, 96], strides = [1, 1]} : vector<16x192xf32> to vector<16x96xf32>
    %540 = vector.extract_strided_slice %538 {offsets = [0, 96], sizes = [16, 96], strides = [1, 1]} : vector<16x192xf32> to vector<16x96xf32>
    %541 = vector.extract_strided_slice %540 {offsets = [8, 0], sizes = [8, 96], strides = [1, 1]} : vector<16x96xf32> to vector<8x96xf32>
    %542 = vector.extract_strided_slice %540 {offsets = [0, 0], sizes = [8, 96], strides = [1, 1]} : vector<16x96xf32> to vector<8x96xf32>
    %543 = tpu.concatenate %541, %542 in 0 : vector<8x96xf32>, vector<8x96xf32> -> vector<16x96xf32>
    %544 = vector.extract_strided_slice %539 {offsets = [0, 0], sizes = [16, 32], strides = [1, 1]} : vector<16x96xf32> to vector<16x32xf32>
    %545 = vector.extract_strided_slice %543 {offsets = [0, 0], sizes = [16, 32], strides = [1, 1]} : vector<16x96xf32> to vector<16x32xf32>
    %546 = tpu.concatenate %544, %545 in 1 : vector<16x32xf32>, vector<16x32xf32> -> vector<16x64xf32>
    %547 = vector.extract_strided_slice %539 {offsets = [0, 32], sizes = [16, 32], strides = [1, 1]} : vector<16x96xf32> to vector<16x32xf32>
    %548 = vector.extract_strided_slice %543 {offsets = [0, 32], sizes = [16, 32], strides = [1, 1]} : vector<16x96xf32> to vector<16x32xf32>
    %549 = tpu.concatenate %547, %548 in 1 : vector<16x32xf32>, vector<16x32xf32> -> vector<16x64xf32>
    %550 = vector.extract_strided_slice %539 {offsets = [0, 64], sizes = [16, 32], strides = [1, 1]} : vector<16x96xf32> to vector<16x32xf32>
    %551 = vector.extract_strided_slice %543 {offsets = [0, 64], sizes = [16, 32], strides = [1, 1]} : vector<16x96xf32> to vector<16x32xf32>
    %552 = tpu.concatenate %550, %551 in 1 : vector<16x32xf32>, vector<16x32xf32> -> vector<16x64xf32>
    %c0_93 = arith.constant 0 : index
    %c0_94 = arith.constant 0 : index
    %553 = vector.load %arg15[%c0_93, %c0_94] : memref<64x192xbf16, #tpu.memory_space<vmem>>, vector<64x192xbf16>
    %c0_95 = arith.constant 0 : index
    %c0_96 = arith.constant 0 : index
    %554 = vector.load %arg16[%c0_95, %c0_96] : memref<1x192xf32, #tpu.memory_space<vmem>>, vector<1x192xf32>
    %cst_97 = arith.constant 0.000000e+00 : f32
    %555 = vector.broadcast %cst_97 : f32 to vector<8x64xf32>
    %556 = arith.truncf %555 : vector<8x64xf32> to vector<8x64xbf16>
    %cst_98 = arith.constant dense<0.000000e+00> : vector<8x192xf32>
    %557 = tpu.matmul %556, %553, %cst_98 {dimension_numbers = #tpu.dot_dimension_numbers<[1], [0], [0], [1], [0, 0, 1, 1], [], []>} : vector<8x64xbf16>, vector<64x192xbf16>, vector<8x192xf32> -> vector<8x192xf32>
    %558 = vector.broadcast %554 : vector<1x192xf32> to vector<8x192xf32>
    %559 = arith.addf %557, %558 : vector<8x192xf32>
    %560 = vector.extract_strided_slice %546 {offsets = [0, 0], sizes = [8, 64], strides = [1, 1]} : vector<16x64xf32> to vector<8x64xf32>
    %561 = vector.extract_strided_slice %559 {offsets = [0, 0], sizes = [8, 64], strides = [1, 1]} : vector<8x192xf32> to vector<8x64xf32>
    %562 = arith.addf %560, %561 : vector<8x64xf32>
    %563 = arith.negf %562 : vector<8x64xf32>
    %564 = math.exp %563 : vector<8x64xf32>
    %cst_99 = arith.constant 1.000000e+00 : f32
    %565 = vector.broadcast %cst_99 : f32 to vector<8x64xf32>
    %566 = arith.addf %565, %564 : vector<8x64xf32>
    %567 = arith.divf %565, %566 : vector<8x64xf32>
    %568 = vector.extract_strided_slice %549 {offsets = [0, 0], sizes = [8, 64], strides = [1, 1]} : vector<16x64xf32> to vector<8x64xf32>
    %569 = vector.extract_strided_slice %559 {offsets = [0, 64], sizes = [8, 64], strides = [1, 1]} : vector<8x192xf32> to vector<8x64xf32>
    %570 = arith.addf %568, %569 : vector<8x64xf32>
    %571 = arith.negf %570 : vector<8x64xf32>
    %572 = math.exp %571 : vector<8x64xf32>
    %cst_100 = arith.constant 1.000000e+00 : f32
    %573 = vector.broadcast %cst_100 : f32 to vector<8x64xf32>
    %574 = arith.addf %573, %572 : vector<8x64xf32>
    %575 = arith.divf %573, %574 : vector<8x64xf32>
    %576 = vector.extract_strided_slice %552 {offsets = [0, 0], sizes = [8, 64], strides = [1, 1]} : vector<16x64xf32> to vector<8x64xf32>
    %577 = vector.extract_strided_slice %559 {offsets = [0, 128], sizes = [8, 64], strides = [1, 1]} : vector<8x192xf32> to vector<8x64xf32>
    %578 = arith.mulf %567, %577 : vector<8x64xf32>
    %579 = arith.addf %576, %578 : vector<8x64xf32>
    %580 = math.tanh %579 : vector<8x64xf32>
    %cst_101 = arith.constant 1.000000e+00 : f32
    %581 = vector.broadcast %cst_101 : f32 to vector<8x64xf32>
    %582 = arith.subf %581, %575 : vector<8x64xf32>
    %583 = arith.mulf %582, %580 : vector<8x64xf32>
    %584 = arith.mulf %575, %555 : vector<8x64xf32>
    %585 = arith.addf %583, %584 : vector<8x64xf32>
    %586 = arith.truncf %585 : vector<8x64xf32> to vector<8x64xbf16>
    %cst_102 = arith.constant dense<0.000000e+00> : vector<8x192xf32>
    %587 = tpu.matmul %586, %553, %cst_102 {dimension_numbers = #tpu.dot_dimension_numbers<[1], [0], [0], [1], [0, 0, 1, 1], [], []>} : vector<8x64xbf16>, vector<64x192xbf16>, vector<8x192xf32> -> vector<8x192xf32>
    %588 = vector.broadcast %554 : vector<1x192xf32> to vector<8x192xf32>
    %589 = arith.addf %587, %588 : vector<8x192xf32>
    %590 = vector.extract_strided_slice %546 {offsets = [8, 0], sizes = [8, 64], strides = [1, 1]} : vector<16x64xf32> to vector<8x64xf32>
    %591 = vector.extract_strided_slice %589 {offsets = [0, 0], sizes = [8, 64], strides = [1, 1]} : vector<8x192xf32> to vector<8x64xf32>
    %592 = arith.addf %590, %591 : vector<8x64xf32>
    %593 = arith.negf %592 : vector<8x64xf32>
    %594 = math.exp %593 : vector<8x64xf32>
    %cst_103 = arith.constant 1.000000e+00 : f32
    %595 = vector.broadcast %cst_103 : f32 to vector<8x64xf32>
    %596 = arith.addf %595, %594 : vector<8x64xf32>
    %597 = arith.divf %595, %596 : vector<8x64xf32>
    %598 = vector.extract_strided_slice %549 {offsets = [8, 0], sizes = [8, 64], strides = [1, 1]} : vector<16x64xf32> to vector<8x64xf32>
    %599 = vector.extract_strided_slice %589 {offsets = [0, 64], sizes = [8, 64], strides = [1, 1]} : vector<8x192xf32> to vector<8x64xf32>
    %600 = arith.addf %598, %599 : vector<8x64xf32>
    %601 = arith.negf %600 : vector<8x64xf32>
    %602 = math.exp %601 : vector<8x64xf32>
    %cst_104 = arith.constant 1.000000e+00 : f32
    %603 = vector.broadcast %cst_104 : f32 to vector<8x64xf32>
    %604 = arith.addf %603, %602 : vector<8x64xf32>
    %605 = arith.divf %603, %604 : vector<8x64xf32>
    %606 = vector.extract_strided_slice %552 {offsets = [8, 0], sizes = [8, 64], strides = [1, 1]} : vector<16x64xf32> to vector<8x64xf32>
    %607 = vector.extract_strided_slice %589 {offsets = [0, 128], sizes = [8, 64], strides = [1, 1]} : vector<8x192xf32> to vector<8x64xf32>
    %608 = arith.mulf %597, %607 : vector<8x64xf32>
    %609 = arith.addf %606, %608 : vector<8x64xf32>
    %610 = math.tanh %609 : vector<8x64xf32>
    %cst_105 = arith.constant 1.000000e+00 : f32
    %611 = vector.broadcast %cst_105 : f32 to vector<8x64xf32>
    %612 = arith.subf %611, %605 : vector<8x64xf32>
    %613 = arith.mulf %612, %610 : vector<8x64xf32>
    %614 = arith.mulf %605, %585 : vector<8x64xf32>
    %615 = arith.addf %613, %614 : vector<8x64xf32>
    %616 = vector.extract_strided_slice %585 {offsets = [0, 0], sizes = [8, 32], strides = [1, 1]} : vector<8x64xf32> to vector<8x32xf32>
    %617 = vector.extract_strided_slice %615 {offsets = [0, 32], sizes = [8, 32], strides = [1, 1]} : vector<8x64xf32> to vector<8x32xf32>
    %618 = tpu.concatenate %616, %617 in 1 : vector<8x32xf32>, vector<8x32xf32> -> vector<8x64xf32>
    %619 = vector.extract_strided_slice %615 {offsets = [0, 0], sizes = [8, 32], strides = [1, 1]} : vector<8x64xf32> to vector<8x32xf32>
    %620 = vector.extract_strided_slice %585 {offsets = [0, 32], sizes = [8, 32], strides = [1, 1]} : vector<8x64xf32> to vector<8x32xf32>
    %621 = tpu.concatenate %619, %620 in 1 : vector<8x32xf32>, vector<8x32xf32> -> vector<8x64xf32>
    %622 = vector.extract_strided_slice %618 {offsets = [0, 0], sizes = [1, 64], strides = [1, 1]} : vector<8x64xf32> to vector<1x64xf32>
    %623 = vector.extract_strided_slice %621 {offsets = [0, 0], sizes = [1, 64], strides = [1, 1]} : vector<8x64xf32> to vector<1x64xf32>
    %624 = vector.extract_strided_slice %618 {offsets = [1, 0], sizes = [1, 64], strides = [1, 1]} : vector<8x64xf32> to vector<1x64xf32>
    %625 = vector.extract_strided_slice %621 {offsets = [1, 0], sizes = [1, 64], strides = [1, 1]} : vector<8x64xf32> to vector<1x64xf32>
    %cst_106 = arith.constant 0.000000e+00 : f32
    %626 = vector.broadcast %cst_106 : f32 to vector<6x64xf32>
    %627 = tpu.concatenate %622, %623, %626 in 0 : vector<1x64xf32>, vector<1x64xf32>, vector<6x64xf32> -> vector<8x64xf32>
    %628 = tpu.concatenate %624, %625, %626 in 0 : vector<1x64xf32>, vector<1x64xf32>, vector<6x64xf32> -> vector<8x64xf32>
    %c0_107 = arith.constant 0 : index
    %c0_108 = arith.constant 0 : index
    %629 = vector.load %arg17[%c0_107, %c0_108] : memref<64x64xf32, #tpu.memory_space<vmem>>, vector<64x64xf32>
    %cst_109 = arith.constant dense<0.000000e+00> : vector<8x64xf32>
    %630 = tpu.matmul %627, %629, %cst_109 {dimension_numbers = #tpu.dot_dimension_numbers<[1], [0], [0], [1], [0, 0, 1, 1], [], []>} : vector<8x64xf32>, vector<64x64xf32>, vector<8x64xf32> -> vector<8x64xf32>
    %c0_110 = arith.constant 0 : index
    %c0_111 = arith.constant 0 : index
    %631 = vector.load %arg18[%c0_110, %c0_111] : memref<1x64xf32, #tpu.memory_space<vmem>>, vector<1x64xf32>
    %632 = vector.broadcast %631 : vector<1x64xf32> to vector<8x64xf32>
    %633 = arith.addf %630, %632 : vector<8x64xf32>
    %634 = math.tanh %633 : vector<8x64xf32>
    %c0_112 = arith.constant 0 : index
    %c0_113 = arith.constant 0 : index
    %635 = vector.load %arg19[%c0_112, %c0_113] : memref<64x64xf32, #tpu.memory_space<vmem>>, vector<64x64xf32>
    %cst_114 = arith.constant dense<0.000000e+00> : vector<8x64xf32>
    %636 = tpu.matmul %628, %635, %cst_114 {dimension_numbers = #tpu.dot_dimension_numbers<[1], [0], [0], [1], [0, 0, 1, 1], [], []>} : vector<8x64xf32>, vector<64x64xf32>, vector<8x64xf32> -> vector<8x64xf32>
    %c0_115 = arith.constant 0 : index
    %c0_116 = arith.constant 0 : index
    %637 = vector.load %arg20[%c0_115, %c0_116] : memref<1x64xf32, #tpu.memory_space<vmem>>, vector<1x64xf32>
    %638 = vector.broadcast %637 : vector<1x64xf32> to vector<8x64xf32>
    %639 = arith.addf %636, %638 : vector<8x64xf32>
    %640 = math.tanh %639 : vector<8x64xf32>
    %c0_117 = arith.constant 0 : index
    %c0_118 = arith.constant 0 : index
    %641 = vector.load %arg21[%c0_117, %c0_118] : memref<1x64xf32, #tpu.memory_space<vmem>>, vector<1x64xf32>
    %642 = vector.broadcast %641 : vector<1x64xf32> to vector<8x64xf32>
    %643 = arith.mulf %640, %642 : vector<8x64xf32>
    %cst_119 = arith.constant dense<0.000000e+00> : vector<8xf32>
    %644 = vector.multi_reduction <add>, %643, %cst_119 [1] : vector<8x64xf32> to vector<8xf32>
    %645 = vector.shape_cast %644 : vector<8xf32> to vector<8x1xf32>
    %c0_120 = arith.constant 0 : index
    %c0_121 = arith.constant 0 : index
    %646 = vector.load %arg22[%c0_120, %c0_121] : memref<1x1xf32, #tpu.memory_space<vmem>>, vector<1x1xf32>
    %647 = vector.broadcast %646 : vector<1x1xf32> to vector<8x1xf32>
    %648 = arith.addf %645, %647 : vector<8x1xf32>
    %649 = tpu.iota {dimensions = array<i32: 1>} : vector<8x6xi32>
    %c0_i32_122 = arith.constant 0 : i32
    %650 = vector.broadcast %c0_i32_122 : i32 to vector<8x6xi32>
    %651 = arith.cmpi eq, %649, %650 : vector<8x6xi32>
    %652 = arith.extui %651 : vector<8x6xi1> to vector<8x6xi32>
    %653 = arith.sitofp %652 : vector<8x6xi32> to vector<8x6xf32>
    %654 = vector.broadcast %648 : vector<8x1xf32> to vector<8x6xf32>
    %655 = arith.mulf %654, %653 : vector<8x6xf32>
    %c0_123 = arith.constant 0 : index
    %c0_124 = arith.constant 0 : index
    %656 = vector.load %arg23[%c0_123, %c0_124] : memref<1x6xf32, #tpu.memory_space<vmem>>, vector<1x6xf32>
    %c0_125 = arith.constant 0 : index
    %c0_126 = arith.constant 0 : index
    %657 = vector.load %arg24[%c0_125, %c0_126] : memref<1x1xf32, #tpu.memory_space<vmem>>, vector<1x1xf32>
    %658 = vector.broadcast %656 : vector<1x6xf32> to vector<8x6xf32>
    %659 = arith.mulf %653, %658 : vector<8x6xf32>
    %cst_127 = arith.constant dense<0.000000e+00> : vector<8xf32>
    %660 = vector.multi_reduction <add>, %659, %cst_127 [1] : vector<8x6xf32> to vector<8xf32>
    %661 = vector.shape_cast %660 : vector<8xf32> to vector<8x1xf32>
    %662 = vector.broadcast %657 : vector<1x1xf32> to vector<8x1xf32>
    %663 = arith.addf %661, %662 : vector<8x1xf32>
    %664 = vector.broadcast %656 : vector<1x6xf32> to vector<8x6xf32>
    %665 = arith.mulf %655, %664 : vector<8x6xf32>
    %cst_128 = arith.constant dense<0.000000e+00> : vector<8xf32>
    %666 = vector.multi_reduction <add>, %665, %cst_128 [1] : vector<8x6xf32> to vector<8xf32>
    %667 = vector.shape_cast %666 : vector<8xf32> to vector<8x1xf32>
    %668 = vector.broadcast %657 : vector<1x1xf32> to vector<8x1xf32>
    %669 = arith.addf %667, %668 : vector<8x1xf32>
    %670 = arith.maximumf %663, %669 : vector<8x1xf32>
    %671 = arith.subf %663, %670 : vector<8x1xf32>
    %672 = math.exp %671 : vector<8x1xf32>
    %673 = arith.subf %669, %670 : vector<8x1xf32>
    %674 = math.exp %673 : vector<8x1xf32>
    %675 = arith.addf %672, %674 : vector<8x1xf32>
    %676 = tpu.reciprocal %675 {approx = true} : vector<8x1xf32> -> vector<8x1xf32>
    %677 = arith.mulf %672, %676 : vector<8x1xf32>
    %678 = vector.broadcast %677 : vector<8x1xf32> to vector<8x6xf32>
    %679 = arith.mulf %678, %653 : vector<8x6xf32>
    %680 = arith.mulf %674, %676 : vector<8x1xf32>
    %681 = vector.broadcast %680 : vector<8x1xf32> to vector<8x6xf32>
    %682 = arith.mulf %681, %655 : vector<8x6xf32>
    %683 = arith.addf %679, %682 : vector<8x6xf32>
    %c0_129 = arith.constant 0 : index
    %c0_130 = arith.constant 0 : index
    %684 = vector.load %arg25[%c0_129, %c0_130] : memref<1x6xf32, #tpu.memory_space<vmem>>, vector<1x6xf32>
    %c0_131 = arith.constant 0 : index
    %c0_132 = arith.constant 0 : index
    %685 = vector.load %arg26[%c0_131, %c0_132] : memref<1x1xf32, #tpu.memory_space<vmem>>, vector<1x1xf32>
    %686 = vector.broadcast %684 : vector<1x6xf32> to vector<8x6xf32>
    %687 = arith.mulf %653, %686 : vector<8x6xf32>
    %cst_133 = arith.constant dense<0.000000e+00> : vector<8xf32>
    %688 = vector.multi_reduction <add>, %687, %cst_133 [1] : vector<8x6xf32> to vector<8xf32>
    %689 = vector.shape_cast %688 : vector<8xf32> to vector<8x1xf32>
    %690 = vector.broadcast %685 : vector<1x1xf32> to vector<8x1xf32>
    %691 = arith.addf %689, %690 : vector<8x1xf32>
    %692 = vector.broadcast %684 : vector<1x6xf32> to vector<8x6xf32>
    %693 = arith.mulf %655, %692 : vector<8x6xf32>
    %cst_134 = arith.constant dense<0.000000e+00> : vector<8xf32>
    %694 = vector.multi_reduction <add>, %693, %cst_134 [1] : vector<8x6xf32> to vector<8xf32>
    %695 = vector.shape_cast %694 : vector<8xf32> to vector<8x1xf32>
    %696 = vector.broadcast %685 : vector<1x1xf32> to vector<8x1xf32>
    %697 = arith.addf %695, %696 : vector<8x1xf32>
    %698 = arith.maximumf %691, %697 : vector<8x1xf32>
    %699 = arith.subf %691, %698 : vector<8x1xf32>
    %700 = math.exp %699 : vector<8x1xf32>
    %701 = arith.subf %697, %698 : vector<8x1xf32>
    %702 = math.exp %701 : vector<8x1xf32>
    %703 = arith.addf %700, %702 : vector<8x1xf32>
    %704 = tpu.reciprocal %703 {approx = true} : vector<8x1xf32> -> vector<8x1xf32>
    %705 = arith.mulf %700, %704 : vector<8x1xf32>
    %706 = vector.broadcast %705 : vector<8x1xf32> to vector<8x6xf32>
    %707 = arith.mulf %706, %653 : vector<8x6xf32>
    %708 = arith.mulf %702, %704 : vector<8x1xf32>
    %709 = vector.broadcast %708 : vector<8x1xf32> to vector<8x6xf32>
    %710 = arith.mulf %709, %655 : vector<8x6xf32>
    %711 = arith.addf %707, %710 : vector<8x6xf32>
    %712 = vector.extract_strided_slice %683 {offsets = [0, 0], sizes = [8, 1], strides = [1, 1]} : vector<8x6xf32> to vector<8x1xf32>
    %713 = vector.extract_strided_slice %711 {offsets = [0, 0], sizes = [8, 1], strides = [1, 1]} : vector<8x6xf32> to vector<8x1xf32>
    %714 = vector.broadcast %712 : vector<8x1xf32> to vector<8x64xf32>
    %715 = arith.mulf %634, %714 : vector<8x64xf32>
    %716 = vector.broadcast %713 : vector<8x1xf32> to vector<8x64xf32>
    %717 = arith.mulf %640, %716 : vector<8x64xf32>
    %c0_135 = arith.constant 0 : index
    %c0_136 = arith.constant 0 : index
    %718 = vector.load %arg27[%c0_135, %c0_136] : memref<64x4xf32, #tpu.memory_space<vmem>>, vector<64x4xf32>
    %cst_137 = arith.constant dense<0.000000e+00> : vector<8x4xf32>
    %719 = tpu.matmul %715, %718, %cst_137 {dimension_numbers = #tpu.dot_dimension_numbers<[1], [0], [0], [1], [0, 0, 1, 1], [], []>} : vector<8x64xf32>, vector<64x4xf32>, vector<8x4xf32> -> vector<8x4xf32>
    %c0_138 = arith.constant 0 : index
    %c0_139 = arith.constant 0 : index
    %720 = vector.load %arg28[%c0_138, %c0_139] : memref<1x4xf32, #tpu.memory_space<vmem>>, vector<1x4xf32>
    %721 = vector.broadcast %720 : vector<1x4xf32> to vector<8x4xf32>
    %722 = arith.addf %719, %721 : vector<8x4xf32>
    %c0_140 = arith.constant 0 : index
    %c0_141 = arith.constant 0 : index
    %723 = vector.load %arg29[%c0_140, %c0_141] : memref<64x3xf32, #tpu.memory_space<vmem>>, vector<64x3xf32>
    %cst_142 = arith.constant dense<0.000000e+00> : vector<8x3xf32>
    %724 = tpu.matmul %717, %723, %cst_142 {dimension_numbers = #tpu.dot_dimension_numbers<[1], [0], [0], [1], [0, 0, 1, 1], [], []>} : vector<8x64xf32>, vector<64x3xf32>, vector<8x3xf32> -> vector<8x3xf32>
    %c0_143 = arith.constant 0 : index
    %c0_144 = arith.constant 0 : index
    %725 = vector.load %arg30[%c0_143, %c0_144] : memref<1x3xf32, #tpu.memory_space<vmem>>, vector<1x3xf32>
    %726 = vector.broadcast %725 : vector<1x3xf32> to vector<8x3xf32>
    %727 = arith.addf %724, %726 : vector<8x3xf32>
    %cst_145 = arith.constant 0.000000e+00 : f32
    %728 = vector.broadcast %cst_145 : f32 to vector<8x113xf32>
    %729 = tpu.concatenate %722, %727, %524, %713, %728 in 1 : vector<8x4xf32>, vector<8x3xf32>, vector<8x7xf32>, vector<8x1xf32>, vector<8x113xf32> -> vector<8x128xf32>
    %c0_146 = arith.constant 0 : index
    %c0_147 = arith.constant 0 : index
    %730 = vector.load %arg31[%c0_146, %c0_147] : memref<8x128xf32, #tpu.memory_space<vmem>>, vector<8x128xf32>
    tpu.vector_store %arg31[%c0_146, %c0_147], %729 {strides = array<i32>} : memref<8x128xf32, #tpu.memory_space<vmem>>, vector<8x128xf32>,
    return
  }
}

</mosaic_0001>

<llo_original>
// kernel: han_forward.1
$region0: #{han_forward.1}
  #allocation0 [shape = 'u32[]', space=smem, size = 0x4, offset = 0x4, fixed_abs, tag = 'smem constant byte address 0x4 - core index']
  #allocation1 [shape = 'u32[144,128]{1,0:T(1,128)}', space=vmem, size = 0x12000, scoped, tag = 'internal scratch']
  #allocation2 [shape = 'f32[1]{0:T(128)S(6)}', space=smem, size = 0x200, scoped, tag = 'scoped memory for han_forward.1']
  #allocation3 [shape = 'f32[1]{0:T(128)S(6)}', space=smem, size = 0x200, scoped, tag = 'scoped memory for han_forward.1']
  #allocation4 [shape = 'f32[1,1]{1,0:T(1,128)S(1)}', space=vmem, size = 0x200, scoped, tag = 'scoped memory for han_forward.1']
  #allocation5 [shape = 'f32[1,1]{1,0:T(1,128)S(1)}', space=vmem, size = 0x200, scoped, tag = 'scoped memory for han_forward.1']
  #allocation6 [shape = 'f32[1,1]{1,0:T(1,128)S(1)}', space=vmem, size = 0x200, scoped, tag = 'scoped memory for han_forward.1']
  %s0 = inlined_call_operand.smem [shape: u32[32], index: -1, kind: input, shape index: {}]
  %s1 = sld [smem:[%s0]]
  %s2 = scalar_lea.smem %s0, 1
  %s3 = sld [smem:[%s2]]
  %s4 = scalar_lea.smem %s0, 2
  %s5 = sld [smem:[%s4]]
  %s6 = scalar_lea.smem %s0, 3
  %s7 = sld [smem:[%s6]]
  %s8 = scalar_lea.smem %s0, 4
  %s9 = sld [smem:[%s8]]
  %s10 = scalar_lea.smem %s0, 5
  %s11 = sld [smem:[%s10]]
  %s12 = scalar_lea.smem %s0, 6
  %s13 = sld [smem:[%s12]]
  %s14 = scalar_lea.smem %s0, 7
  %s15 = sld [smem:[%s14]]
  %s16 = scalar_lea.smem %s0, 8
  %s17 = sld [smem:[%s16]]
  %s18 = scalar_lea.smem %s0, 9
  %s19 = sld [smem:[%s18]]
  %s20 = scalar_lea.smem %s0, 10
  %s21 = sld [smem:[%s20]]
  %s22 = scalar_lea.smem %s0, 11
  %s23 = sld [smem:[%s22]]
  %s24 = scalar_lea.smem %s0, 12
  %s25 = sld [smem:[%s24]]
  %s26 = scalar_lea.smem %s0, 13
  %s27 = sld [smem:[%s26]]
  %s28 = scalar_lea.smem %s0, 14
  %s29 = sld [smem:[%s28]]
  %s30 = scalar_lea.smem %s0, 15
  %s31 = sld [smem:[%s30]]
  %s32 = scalar_lea.smem %s0, 16
  %s33 = sld [smem:[%s32]]
  %s34 = scalar_lea.smem %s0, 17
  %s35 = sld [smem:[%s34]]
  %s36 = scalar_lea.smem %s0, 18
  %s37 = sld [smem:[%s36]]
  %s38 = scalar_lea.smem %s0, 19
  %s39 = sld [smem:[%s38]]
  %s40 = scalar_lea.smem %s0, 20
  %s41 = sld [smem:[%s40]]
  %s42 = scalar_lea.smem %s0, 21
  %s43 = sld [smem:[%s42]]
  %s44 = scalar_lea.smem %s0, 22
  %s45 = sld [smem:[%s44]]
  %s46 = scalar_lea.smem %s0, 23
  %s47 = sld [smem:[%s46]]
  %s48 = scalar_lea.smem %s0, 24
  %s49 = sld [smem:[%s48]]
  %s50 = scalar_lea.smem %s0, 25
  %s51 = sld [smem:[%s50]]
  %s52 = scalar_lea.smem %s0, 26
  %s53 = sld [smem:[%s52]]
  %s54 = scalar_lea.smem %s0, 27
  %s55 = sld [smem:[%s54]]
  %s56 = scalar_lea.smem %s0, 28
  %s57 = sld [smem:[%s56]]
  %s58 = scalar_lea.smem %s0, 29
  %s59 = sld [smem:[%s58]]
  %s60 = scalar_lea.smem %s0, 30
  %s61 = sld [smem:[%s60]]
  %s62 = scalar_lea.smem %s0, 31
  %s63 = sld [smem:[%s62]]
  %s64 = sld [smem:[#allocation0]]
  $region142: #{han_forward.1} parent=0
    _
  %s66 = ssub.s32 1, %s64
  %s67 = scalar_select 0, %s66, %s64
  %68 = sst [smem:[#allocation2]] %s21
  %69 = sst [smem:[#allocation3]] %s25
  %v70 = vstv %s45
  %71 = vst [vmem:[#allocation4] sm:$0x1] %v70
  %v72 = vstv %s49
  %73 = vst [vmem:[#allocation5] sm:$0x1] %v72
  %v74 = vstv %s53
  %75 = vst [vmem:[#allocation6] sm:$0x1] %v74
  $region1: #{han_forward.1} parent=0
    #allocation7 [shape = 'u8[512]{0}', space=smem, size = 0x200, scoped, tag = 'input window, operand 9, single buffered']
    #allocation8 [shape = 's32[1]{0}', space=sflag, size = 0x4, scoped, tag = 'scoped memory for han_forward.1']
    #allocation9 [shape = 'u8[512]{0}', space=smem, size = 0x200, scoped, tag = 'input window, operand 11, single buffered']
    #allocation10 [shape = 's32[1]{0}', space=sflag, size = 0x4, scoped, tag = 'scoped memory for han_forward.1']
    %76 = vsyncpa [#allocation8], 0
    %77 = vsyncpa [#allocation10], 0
    // Predicated region
    $region2: #{han_forward.1} parent=1 // pred_check
      _
    $region3: #{han_forward.1} parent=1 // pred_check_branch
      %79 = sbr.rel (0) target = $region5
    $region4: #{han_forward.1} parent=1 // pred_region
      _
    $region5: #{han_forward.1} parent=1 // pred_fallthru
      _
    // Predicated region
    $region6: #{han_forward.1} parent=1 // pred_check
      _
    $region7: #{han_forward.1} parent=1 // pred_check_branch
      %81 = sbr.rel (0) target = $region9
    $region8: #{han_forward.1} parent=1 // pred_region
      _
    $region9: #{han_forward.1} parent=1 // pred_fallthru
      _
    // Predicated region
    $region10: #{han_forward.1} parent=1 // pred_check
      _
    $region11: #{han_forward.1} parent=1 // pred_check_branch
      %83 = sbr.rel (0) target = $region13
    $region12: #{han_forward.1} parent=1 // pred_region
      _
    $region13: #{han_forward.1} parent=1 // pred_fallthru
      _
    // Predicated region
    $region14: #{han_forward.1} parent=1 // pred_check
      _
    $region15: #{han_forward.1} parent=1 // pred_check_branch
      %85 = sbr.rel (0) target = $region17
    $region16: #{han_forward.1} parent=1 // pred_region
      _
    $region17: #{han_forward.1} parent=1 // pred_fallthru
      _
    // Predicated region
    $region18: #{han_forward.1} parent=1 // pred_check
      _
    $region19: #{han_forward.1} parent=1 // pred_check_branch
      %87 = sbr.rel (0) target = $region21
    $region20: #{han_forward.1} parent=1 // pred_region
      _
    $region21: #{han_forward.1} parent=1 // pred_fallthru
      _
    // Predicated region
    $region22: #{han_forward.1} parent=1 // pred_check
      _
    $region23: #{han_forward.1} parent=1 // pred_check_branch
      %89 = sbr.rel (0) target = $region25
    $region24: #{han_forward.1} parent=1 // pred_region
      _
    $region25: #{han_forward.1} parent=1 // pred_fallthru
      _
    // Predicated region
    $region26: #{han_forward.1} parent=1 // pred_check
      _
    $region27: #{han_forward.1} parent=1 // pred_check_branch
      %91 = sbr.rel (0) target = $region29
    $region28: #{han_forward.1} parent=1 // pred_region
      _
    $region29: #{han_forward.1} parent=1 // pred_fallthru
      _
    // Predicated region
    $region30: #{han_forward.1} parent=1 // pred_check
      _
    $region31: #{han_forward.1} parent=1 // pred_check_branch
      %93 = sbr.rel (0) target = $region33
    $region32: #{han_forward.1} parent=1 // pred_region
      _
    $region33: #{han_forward.1} parent=1 // pred_fallthru
      _
    // Predicated region
    $region34: #{han_forward.1} parent=1 // pred_check
      _
    $region35: #{han_forward.1} parent=1 // pred_check_branch
      %95 = sbr.rel (0) target = $region37
    $region36: #{han_forward.1} parent=1 // pred_region
      _
    $region37: #{han_forward.1} parent=1 // pred_fallthru
      _
    // Predicated region
    $region38: #{han_forward.1} parent=1 // pred_check
      _
    $region39: #{han_forward.1} parent=1 // pred_check_branch
      %97 = sbr.rel (0) target = $region41
    $region40: #{han_forward.1} parent=1 // pred_region
      %s99 = ssub.s32 16, 16
      %100 = vsyncadd [#allocation8], %s99
      %s102 = sshll.u32 %s19, 4
      %s103 = int_to_ptr.vmem [resolvable:$true] %s102
      %105 = dma.vmem_to_smem %s103, 16, [#allocation7], [#allocation8]
    $region41: #{han_forward.1} parent=1 // pred_fallthru
      _
    // Predicated region
    $region42: #{han_forward.1} parent=1 // pred_check
      _
    $region43: #{han_forward.1} parent=1 // pred_check_branch
      %107 = sbr.rel (0) target = $region45
    $region44: #{han_forward.1} parent=1 // pred_region
      _
    $region45: #{han_forward.1} parent=1 // pred_fallthru
      _
    // Predicated region
    $region46: #{han_forward.1} parent=1 // pred_check
      _
    $region47: #{han_forward.1} parent=1 // pred_check_branch
      %109 = sbr.rel (0) target = $region49
    $region48: #{han_forward.1} parent=1 // pred_region
      %s111 = ssub.s32 16, 16
      %112 = vsyncadd [#allocation10], %s111
      %s114 = sshll.u32 %s23, 4
      %s115 = int_to_ptr.vmem [resolvable:$true] %s114
      %117 = dma.vmem_to_smem %s115, 16, [#allocation9], [#allocation10]
    $region49: #{han_forward.1} parent=1 // pred_fallthru
      _
    // Predicated region
    $region50: #{han_forward.1} parent=1 // pred_check
      _
    $region51: #{han_forward.1} parent=1 // pred_check_branch
      %119 = sbr.rel (0) target = $region53
    $region52: #{han_forward.1} parent=1 // pred_region
      _
    $region53: #{han_forward.1} parent=1 // pred_fallthru
      _
    // Predicated region
    $region54: #{han_forward.1} parent=1 // pred_check
      _
    $region55: #{han_forward.1} parent=1 // pred_check_branch
      %121 = sbr.rel (0) target = $region57
    $region56: #{han_forward.1} parent=1 // pred_region
      _
    $region57: #{han_forward.1} parent=1 // pred_fallthru
      _
    // Predicated region
    $region58: #{han_forward.1} parent=1 // pred_check
      _
    $region59: #{han_forward.1} parent=1 // pred_check_branch
      %123 = sbr.rel (0) target = $region61
    $region60: #{han_forward.1} parent=1 // pred_region
      _
    $region61: #{han_forward.1} parent=1 // pred_fallthru
      _
    // Predicated region
    $region62: #{han_forward.1} parent=1 // pred_check
      _
    $region63: #{han_forward.1} parent=1 // pred_check_branch
      %125 = sbr.rel (0) target = $region65
    $region64: #{han_forward.1} parent=1 // pred_region
      _
    $region65: #{han_forward.1} parent=1 // pred_fallthru
      _
    // Predicated region
    $region66: #{han_forward.1} parent=1 // pred_check
      _
    $region67: #{han_forward.1} parent=1 // pred_check_branch
      %127 = sbr.rel (0) target = $region69
    $region68: #{han_forward.1} parent=1 // pred_region
      _
    $region69: #{han_forward.1} parent=1 // pred_fallthru
      _
    // Predicated region
    $region70: #{han_forward.1} parent=1 // pred_check
      _
    $region71: #{han_forward.1} parent=1 // pred_check_branch
      %129 = sbr.rel (0) target = $region73
    $region72: #{han_forward.1} parent=1 // pred_region
      _
    $region73: #{han_forward.1} parent=1 // pred_fallthru
      _
    // Predicated region
    $region74: #{han_forward.1} parent=1 // pred_check
      _
    $region75: #{han_forward.1} parent=1 // pred_check_branch
      %131 = sbr.rel (0) target = $region77
    $region76: #{han_forward.1} parent=1 // pred_region
      _
    $region77: #{han_forward.1} parent=1 // pred_fallthru
      _
    // Predicated region
    $region78: #{han_forward.1} parent=1 // pred_check
      _
    $region79: #{han_forward.1} parent=1 // pred_check_branch
      %133 = sbr.rel (0) target = $region81
    $region80: #{han_forward.1} parent=1 // pred_region
      _
    $region81: #{han_forward.1} parent=1 // pred_fallthru
      _
    // Predicated region
    $region82: #{han_forward.1} parent=1 // pred_check
      _
    $region83: #{han_forward.1} parent=1 // pred_check_branch
      %135 = sbr.rel (0) target = $region85
    $region84: #{han_forward.1} parent=1 // pred_region
      _
    $region85: #{han_forward.1} parent=1 // pred_fallthru
      _
    // Predicated region
    $region86: #{han_forward.1} parent=1 // pred_check
      _
    $region87: #{han_forward.1} parent=1 // pred_check_branch
      %137 = sbr.rel (0) target = $region89
    $region88: #{han_forward.1} parent=1 // pred_region
      _
    $region89: #{han_forward.1} parent=1 // pred_fallthru
      _
    // Predicated region
    $region90: #{han_forward.1} parent=1 // pred_check
      _
    $region91: #{han_forward.1} parent=1 // pred_check_branch
      %139 = sbr.rel (0) target = $region93
    $region92: #{han_forward.1} parent=1 // pred_region
      _
    $region93: #{han_forward.1} parent=1 // pred_fallthru
      _
    // Predicated region
    $region94: #{han_forward.1} parent=1 // pred_check
      _
    $region95: #{han_forward.1} parent=1 // pred_check_branch
      %141 = sbr.rel (0) target = $region97
    $region96: #{han_forward.1} parent=1 // pred_region
      _
    $region97: #{han_forward.1} parent=1 // pred_fallthru
      _
    // Predicated region
    $region98: #{han_forward.1} parent=1 // pred_check
      _
    $region99: #{han_forward.1} parent=1 // pred_check_branch
      %143 = sbr.rel (0) target = $region101
    $region100: #{han_forward.1} parent=1 // pred_region
      _
    $region101: #{han_forward.1} parent=1 // pred_fallthru
      _
    // Predicated region
    $region102: #{han_forward.1} parent=1 // pred_check
      _
    $region103: #{han_forward.1} parent=1 // pred_check_branch
      %145 = sbr.rel (0) target = $region105
    $region104: #{han_forward.1} parent=1 // pred_region
      _
    $region105: #{han_forward.1} parent=1 // pred_fallthru
      _
    // Predicated region
    $region106: #{han_forward.1} parent=1 // pred_check
      _
    $region107: #{han_forward.1} parent=1 // pred_check_branch
      %147 = sbr.rel (0) target = $region109
    $region108: #{han_forward.1} parent=1 // pred_region
      _
    $region109: #{han_forward.1} parent=1 // pred_fallthru
      _
    // Predicated region
    $region110: #{han_forward.1} parent=1 // pred_check
      _
    $region111: #{han_forward.1} parent=1 // pred_check_branch
      %149 = sbr.rel (0) target = $region113
    $region112: #{han_forward.1} parent=1 // pred_region
      _
    $region113: #{han_forward.1} parent=1 // pred_fallthru
      _
    // Predicated region
    $region114: #{han_forward.1} parent=1 // pred_check
      _
    $region115: #{han_forward.1} parent=1 // pred_check_branch
      %151 = sbr.rel (0) target = $region117
    $region116: #{han_forward.1} parent=1 // pred_region
      _
    $region117: #{han_forward.1} parent=1 // pred_fallthru
      _
    // Predicated region
    $region118: #{han_forward.1} parent=1 // pred_check
      _
    $region119: #{han_forward.1} parent=1 // pred_check_branch
      %153 = sbr.rel (0) target = $region121
    $region120: #{han_forward.1} parent=1 // pred_region
      _
    $region121: #{han_forward.1} parent=1 // pred_fallthru
      _
    // Predicated region
    $region122: #{han_forward.1} parent=1 // pred_check
      _
    $region123: #{han_forward.1} parent=1 // pred_check_branch
      %155 = sbr.rel (0) target = $region125
    $region124: #{han_forward.1} parent=1 // pred_region
      _
    $region125: #{han_forward.1} parent=1 // pred_fallthru
      _
    // Predicated region
    $region126: #{han_forward.1} parent=1 // pred_check
      _
    $region127: #{han_forward.1} parent=1 // pred_check_branch
      %157 = sbr.rel (0) target = $region129
    $region128: #{han_forward.1} parent=1 // pred_region
      %158 = dma.done [#allocation8], 16
    $region129: #{han_forward.1} parent=1 // pred_fallthru
      _
    // Predicated region
    $region130: #{han_forward.1} parent=1 // pred_check
      _
    $region131: #{han_forward.1} parent=1 // pred_check_branch
      %160 = sbr.rel (0) target = $region133
    $region132: #{han_forward.1} parent=1 // pred_region
      %161 = dma.done [#allocation10], 16
    $region133: #{han_forward.1} parent=1 // pred_fallthru
      _
    %162 = sfence
    %v164 = vld [vmem:[%s1] sm:$0xff]
    %v165 = vld [vmem:[%s1 + $0x8] sm:$0xff]
    %v166 = vld [vmem:[%s1 + $0x10] sm:$0xff]
    %v167 = vld [vmem:[%s1 + $0x18] sm:$0xff]
    %v168 = vld [vmem:[%s1 + $0x20] sm:$0xff]
    %v169 = vld [vmem:[%s1 + $0x28] sm:$0xff]
    %v170 = vld [vmem:[%s1 + $0x30] sm:$0xff]
    %v171 = vld [vmem:[%s1 + $0x38] sm:$0xff]
    %v172 = vld [vmem:[%s1 + $0x40] sm:$0xff]
    %v173 = vld [vmem:[%s1 + $0x48] sm:$0xff]
    %v174 = vld [vmem:[%s1 + $0x50] sm:$0xff]
    %v175 = vld [vmem:[%s1 + $0x58] sm:$0xff]
    %v176 = vld [vmem:[%s1 + $0x60] sm:$0xff]
    %v177 = vld [vmem:[%s1 + $0x68] sm:$0xff]
    %v178 = vld [vmem:[%s1 + $0x70] sm:$0xff]
    %v179 = vld [vmem:[%s1 + $0x78] sm:$0xff]
    %v180 = vld [vmem:[%s1 + $0x80] sm:$0xff]
    %v181 = vld [vmem:[%s1 + $0x88] sm:$0xff]
    %v182 = vld [vmem:[%s1 + $0x90] sm:$0xff]
    %v183 = vld [vmem:[%s1 + $0x98] sm:$0xff]
    %v184 = vld [vmem:[%s1 + $0xa0] sm:$0xff]
    %v185 = vld [vmem:[%s1 + $0xa8] sm:$0xff]
    %v186 = vld [vmem:[%s1 + $0xb0] sm:$0xff]
    %v187 = vld [vmem:[%s1 + $0xb8] sm:$0xff]
    %v188 = vld [vmem:[%s1 + $0xc0] sm:$0xff]
    %v189 = vld [vmem:[%s1 + $0xc8] sm:$0xff]
    %v190 = vld [vmem:[%s1 + $0xd0] sm:$0xff]
    %v191 = vld [vmem:[%s1 + $0xd8] sm:$0xff]
    %v192 = vld [vmem:[%s5] sm:$0xff]
    %v193 = vld [vmem:[%s5 + $0x8] sm:$0xff]
    %v194 = vld [vmem:[%s5 + $0x10] sm:$0xff]
    %v195 = vld [vmem:[%s5 + $0x18] sm:$0xff]
    %v196 = vld [vmem:[%s5 + $0x20] sm:$0xff]
    %v197 = vld [vmem:[%s5 + $0x28] sm:$0xff]
    %v198 = vld [vmem:[%s5 + $0x30] sm:$0xff]
    %v199 = vld [vmem:[%s5 + $0x38] sm:$0xff]
    %v200 = vld [vmem:[%s5 + $0x40] sm:$0xff]
    %v201 = vld [vmem:[%s5 + $0x48] sm:$0xff]
    %v202 = vld [vmem:[%s5 + $0x50] sm:$0xff]
    %v203 = vld [vmem:[%s5 + $0x58] sm:$0xff]
    %v204 = vld [vmem:[%s5 + $0x60] sm:$0xff]
    %v205 = vld [vmem:[%s5 + $0x68] sm:$0xff]
    %v206 = vld [vmem:[%s5 + $0x70] sm:$0xff]
    %v207 = vld [vmem:[%s5 + $0x78] sm:$0xff]
    %v208 = vld [vmem:[%s5 + $0x80] sm:$0xff]
    %v209 = vld [vmem:[%s5 + $0x88] sm:$0xff]
    %v210 = vld [vmem:[%s5 + $0x90] sm:$0xff]
    %v211 = vld [vmem:[%s5 + $0x98] sm:$0xff]
    %v212 = vld [vmem:[%s5 + $0xa0] sm:$0xff]
    %v213 = vld [vmem:[%s5 + $0xa8] sm:$0xff]
    %v214 = vld [vmem:[%s5 + $0xb0] sm:$0xff]
    %v215 = vld [vmem:[%s5 + $0xb8] sm:$0xff]
    %v216 = vld [vmem:[%s5 + $0xc0] sm:$0xff]
    %v217 = vld [vmem:[%s5 + $0xc8] sm:$0xff]
    %v218 = vld [vmem:[%s5 + $0xd0] sm:$0xff]
    %v219 = vld [vmem:[%s5 + $0xd8] sm:$0xff]
    %v220 = vld [vmem:[%s5 + $0xe0] sm:$0xff]
    %v221 = vld [vmem:[%s5 + $0xe8] sm:$0xff]
    %v222 = vld [vmem:[%s5 + $0xf0] sm:$0xff]
    %v223 = vld [vmem:[%s5 + $0xf8] sm:$0xff]
    %v224 = vld [vmem:[%s5 + $0x100] sm:$0xff]
    %v225 = vld [vmem:[%s5 + $0x108] sm:$0xff]
    %v226 = vld [vmem:[%s5 + $0x110] sm:$0xff]
    %v227 = vld [vmem:[%s5 + $0x118] sm:$0xff]
    %v228 = vld [vmem:[%s5 + $0x120] sm:$0xff]
    %v229 = vld [vmem:[%s5 + $0x128] sm:$0xff]
    %v230 = vld [vmem:[%s5 + $0x130] sm:$0xff]
    %v231 = vld [vmem:[%s5 + $0x138] sm:$0xff]
    %v232 = vld [vmem:[%s5 + $0x140] sm:$0xff]
    %v233 = vld [vmem:[%s5 + $0x148] sm:$0xff]
    %v234 = vld [vmem:[%s5 + $0x150] sm:$0xff]
    %v235 = vld [vmem:[%s5 + $0x158] sm:$0xff]
    %v236 = vld [vmem:[%s5 + $0x160] sm:$0xff]
    %v237 = vld [vmem:[%s5 + $0x168] sm:$0xff]
    %v238 = vld [vmem:[%s5 + $0x170] sm:$0xff]
    %v239 = vld [vmem:[%s5 + $0x178] sm:$0xff]
    %v240 = vld [vmem:[%s5 + $0x180] sm:$0xff]
    %v241 = vld [vmem:[%s5 + $0x188] sm:$0xff]
    %v242 = vld [vmem:[%s5 + $0x190] sm:$0xff]
    %v243 = vld [vmem:[%s5 + $0x198] sm:$0xff]
    %v244 = vld [vmem:[%s5 + $0x1a0] sm:$0xff]
    %v245 = vld [vmem:[%s5 + $0x1a8] sm:$0xff]
    %v246 = vld [vmem:[%s5 + $0x1b0] sm:$0xff]
    %v247 = vld [vmem:[%s5 + $0x1b8] sm:$0xff]
    %v248 = vld [vmem:[%s5 + $0x1c0] sm:$0xff]
    %v249 = vld [vmem:[%s5 + $0x1c8] sm:$0xff]
    %v250 = vld [vmem:[%s5 + $0x1d0] sm:$0xff]
    %v251 = vld [vmem:[%s5 + $0x1d8] sm:$0xff]
    %v252 = vld [vmem:[%s5 + $0x1e0] sm:$0xff]
    %v253 = vld [vmem:[%s5 + $0x1e8] sm:$0xff]
    %v254 = vld [vmem:[%s5 + $0x1f0] sm:$0xff]
    %v255 = vld [vmem:[%s5 + $0x1f8] sm:$0xff]
    %v256 = vld [vmem:[%s5 + $0x200] sm:$0xff]
    %v257 = vld [vmem:[%s5 + $0x208] sm:$0xff]
    %v258 = vld [vmem:[%s5 + $0x210] sm:$0xff]
    %v259 = vld [vmem:[%s5 + $0x218] sm:$0xff]
    %v260 = vld [vmem:[%s5 + $0x220] sm:$0xff]
    %v261 = vld [vmem:[%s5 + $0x228] sm:$0xff]
    %v262 = vld [vmem:[%s5 + $0x230] sm:$0xff]
    %v263 = vld [vmem:[%s5 + $0x238] sm:$0xff]
    %v264 = vld [vmem:[%s5 + $0x240] sm:$0xff]
    %v265 = vld [vmem:[%s5 + $0x248] sm:$0xff]
    %v266 = vld [vmem:[%s5 + $0x250] sm:$0xff]
    %v267 = vld [vmem:[%s5 + $0x258] sm:$0xff]
    %v268 = vld [vmem:[%s5 + $0x260] sm:$0xff]
    %v269 = vld [vmem:[%s5 + $0x268] sm:$0xff]
    %v270 = vld [vmem:[%s5 + $0x270] sm:$0xff]
    %v271 = vld [vmem:[%s5 + $0x278] sm:$0xff]
    %v272 = vld [vmem:[%s5 + $0x280] sm:$0xff]
    %v273 = vld [vmem:[%s5 + $0x288] sm:$0xff]
    %v274 = vld [vmem:[%s5 + $0x290] sm:$0xff]
    %v275 = vld [vmem:[%s5 + $0x298] sm:$0xff]
    %v276 = vld [vmem:[%s5 + $0x2a0] sm:$0xff]
    %v277 = vld [vmem:[%s5 + $0x2a8] sm:$0xff]
    %v278 = vld [vmem:[%s5 + $0x2b0] sm:$0xff]
    %v279 = vld [vmem:[%s5 + $0x2b8] sm:$0xff]
    %v280 = vld [vmem:[%s5 + $0x2c0] sm:$0xff]
    %v281 = vld [vmem:[%s5 + $0x2c8] sm:$0xff]
    %v282 = vld [vmem:[%s5 + $0x2d0] sm:$0xff]
    %v283 = vld [vmem:[%s5 + $0x2d8] sm:$0xff]
    %v284 = vld [vmem:[%s5 + $0x2e0] sm:$0xff]
    %v285 = vld [vmem:[%s5 + $0x2e8] sm:$0xff]
    %v286 = vld [vmem:[%s5 + $0x2f0] sm:$0xff]
    %v287 = vld [vmem:[%s5 + $0x2f8] sm:$0xff]
    %v288 = vld [vmem:[%s5 + $0x300] sm:$0xff]
    %v289 = vld [vmem:[%s5 + $0x308] sm:$0xff]
    %v290 = vld [vmem:[%s5 + $0x310] sm:$0xff]
    %v291 = vld [vmem:[%s5 + $0x318] sm:$0xff]
    %v292 = vld [vmem:[%s5 + $0x320] sm:$0xff]
    %v293 = vld [vmem:[%s5 + $0x328] sm:$0xff]
    %v294 = vld [vmem:[%s5 + $0x330] sm:$0xff]
    %v295 = vld [vmem:[%s5 + $0x338] sm:$0xff]
    %v296 = vld [vmem:[%s5 + $0x340] sm:$0xff]
    %v297 = vld [vmem:[%s5 + $0x348] sm:$0xff]
    %v298 = vld [vmem:[%s5 + $0x350] sm:$0xff]
    %v299 = vld [vmem:[%s5 + $0x358] sm:$0xff]
    %v300 = vld [vmem:[%s5 + $0x360] sm:$0xff]
    %v301 = vld [vmem:[%s5 + $0x368] sm:$0xff]
    %v302 = vld [vmem:[%s5 + $0x370] sm:$0xff]
    %v303 = vld [vmem:[%s5 + $0x378] sm:$0xff]
    %v304 = vld [vmem:[%s5 + $0x380] sm:$0xff]
    %v305 = vld [vmem:[%s5 + $0x388] sm:$0xff]
    %v306 = vld [vmem:[%s5 + $0x390] sm:$0xff]
    %v307 = vld [vmem:[%s5 + $0x398] sm:$0xff]
    %v308 = vld [vmem:[%s5 + $0x3a0] sm:$0xff]
    %v309 = vld [vmem:[%s5 + $0x3a8] sm:$0xff]
    %v310 = vld [vmem:[%s5 + $0x3b0] sm:$0xff]
    %v311 = vld [vmem:[%s5 + $0x3b8] sm:$0xff]
    %v312 = vld [vmem:[%s5 + $0x3c0] sm:$0xff]
    %v313 = vld [vmem:[%s5 + $0x3c8] sm:$0xff]
    %v314 = vld [vmem:[%s5 + $0x3d0] sm:$0xff]
    %v315 = vld [vmem:[%s5 + $0x3d8] sm:$0xff]
    %v316 = vld [vmem:[%s5 + $0x3e0] sm:$0xff]
    %v317 = vld [vmem:[%s5 + $0x3e8] sm:$0xff]
    %v318 = vld [vmem:[%s5 + $0x3f0] sm:$0xff]
    %v319 = vld [vmem:[%s5 + $0x3f8] sm:$0xff]
    %v320 = vld [vmem:[%s7] sm:$0x3]
    %v322 = vlaneseq
    %v323 = vshrl.u32 %v322, 7
    %v324 = vsub.s32 0, %v323
    %v325 = vrot.slane %v320, %v324
    %v326 = vlaneseq
    %v327 = vshrl.u32 %v326, 7
    %v328 = vsub.s32 1, %v327
    %v329 = vrot.slane %v320, %v328
    %v360 = vunpack.c.l.b16 %v164
    %v361 = vunpack.c.h.b16 %v164
    %v362 = vunpack.c.l.b16 %v165
    %v363 = vunpack.c.h.b16 %v165
    %v364 = vunpack.c.l.b16 %v166
    %v365 = vunpack.c.h.b16 %v166
    %v366 = vunpack.c.l.b16 %v167
    %v367 = vunpack.c.h.b16 %v167
    %v368 = vunpack.c.l.b16 %v168
    %v369 = vunpack.c.h.b16 %v168
    %v370 = vunpack.c.l.b16 %v169
    %v371 = vunpack.c.h.b16 %v169
    %v372 = vunpack.c.l.b16 %v170
    %v373 = vunpack.c.h.b16 %v170
    %v374 = vunpack.c.l.b16 %v171
    %v375 = vunpack.c.h.b16 %v171
    %v376 = vunpack.c.l.b16 %v172
    %v377 = vunpack.c.h.b16 %v172
    %v378 = vunpack.c.l.b16 %v173
    %v379 = vunpack.c.h.b16 %v173
    %v380 = vunpack.c.l.b16 %v174
    %v381 = vunpack.c.h.b16 %v174
    %v382 = vunpack.c.l.b16 %v175
    %v383 = vunpack.c.h.b16 %v175
    %v384 = vunpack.c.l.b16 %v176
    %v385 = vunpack.c.h.b16 %v176
    %v386 = vunpack.c.l.b16 %v177
    %v387 = vunpack.c.h.b16 %v177
    %v388 = vunpack.c.l.b16 %v178
    %v389 = vunpack.c.h.b16 %v178
    %v390 = vunpack.c.l.b16 %v179
    %v391 = vunpack.c.h.b16 %v179
    %v392 = vunpack.c.l.b16 %v180
    %v393 = vunpack.c.h.b16 %v180
    %v394 = vunpack.c.l.b16 %v181
    %v395 = vunpack.c.h.b16 %v181
    %v396 = vunpack.c.l.b16 %v182
    %v397 = vunpack.c.h.b16 %v182
    %v398 = vunpack.c.l.b16 %v183
    %v399 = vunpack.c.h.b16 %v183
    %v400 = vunpack.c.l.b16 %v184
    %v401 = vunpack.c.h.b16 %v184
    %v402 = vunpack.c.l.b16 %v185
    %v403 = vunpack.c.h.b16 %v185
    %v404 = vunpack.c.l.b16 %v186
    %v405 = vunpack.c.h.b16 %v186
    %v406 = vunpack.c.l.b16 %v187
    %v407 = vunpack.c.h.b16 %v187
    %v408 = vunpack.c.l.b16 %v188
    %v409 = vunpack.c.h.b16 %v188
    %v410 = vunpack.c.l.b16 %v189
    %v411 = vunpack.c.h.b16 %v189
    %v412 = vunpack.c.l.b16 %v190
    %v413 = vunpack.c.h.b16 %v190
    %v414 = vunpack.c.l.b16 %v191
    %v415 = vunpack.c.h.b16 %v191
    %v416 = vpack.c.b16 %v368, %v360
    %v417 = vpack.c.b16 %v369, %v361
    %v418 = vpack.c.b16 %v370, %v362
    %v419 = vpack.c.b16 %v371, %v363
    %v420 = vpack.c.b16 %v372, %v364
    %v421 = vpack.c.b16 %v373, %v365
    %v422 = vpack.c.b16 %v374, %v366
    %v423 = vpack.c.b16 %v375, %v367
    %v424 = vpack.c.b16 %v384, %v376
    %v425 = vpack.c.b16 %v385, %v377
    %v426 = vpack.c.b16 %v386, %v378
    %v427 = vpack.c.b16 %v387, %v379
    %v428 = vpack.c.b16 %v388, %v380
    %v429 = vpack.c.b16 %v389, %v381
    %v430 = vpack.c.b16 %v390, %v382
    %v431 = vpack.c.b16 %v391, %v383
    %v432 = vpack.c.b16 %v400, %v392
    %v433 = vpack.c.b16 %v401, %v393
    %v434 = vpack.c.b16 %v402, %v394
    %v435 = vpack.c.b16 %v403, %v395
    %v436 = vpack.c.b16 %v404, %v396
    %v437 = vpack.c.b16 %v405, %v397
    %v438 = vpack.c.b16 %v406, %v398
    %v439 = vpack.c.b16 %v407, %v399
    %v440 = vpack.c.b16 %v408, %v408
    %v441 = vpack.c.b16 %v409, %v409
    %v442 = vpack.c.b16 %v410, %v410
    %v443 = vpack.c.b16 %v411, %v411
    %v444 = vpack.c.b16 %v412, %v412
    %v445 = vpack.c.b16 %v413, %v413
    %v446 = vpack.c.b16 %v414, %v414
    %v447 = vpack.c.b16 %v415, %v415
    %v608 = vunpack.c.l.b16 %v192
    %v609 = vunpack.c.h.b16 %v192
    %v610 = vunpack.c.l.b16 %v193
    %v611 = vunpack.c.h.b16 %v193
    %v612 = vunpack.c.l.b16 %v194
    %v613 = vunpack.c.h.b16 %v194
    %v614 = vunpack.c.l.b16 %v195
    %v615 = vunpack.c.h.b16 %v195
    %v616 = vunpack.c.l.b16 %v196
    %v617 = vunpack.c.h.b16 %v196
    %v618 = vunpack.c.l.b16 %v197
    %v619 = vunpack.c.h.b16 %v197
    %v620 = vunpack.c.l.b16 %v198
    %v621 = vunpack.c.h.b16 %v198
    %v622 = vunpack.c.l.b16 %v199
    %v623 = vunpack.c.h.b16 %v199
    %v624 = vunpack.c.l.b16 %v200
    %v625 = vunpack.c.h.b16 %v200
    %v626 = vunpack.c.l.b16 %v201
    %v627 = vunpack.c.h.b16 %v201
    %v628 = vunpack.c.l.b16 %v202
    %v629 = vunpack.c.h.b16 %v202
    %v630 = vunpack.c.l.b16 %v203
    %v631 = vunpack.c.h.b16 %v203
    %v632 = vunpack.c.l.b16 %v204
    %v633 = vunpack.c.h.b16 %v204
    %v634 = vunpack.c.l.b16 %v205
    %v635 = vunpack.c.h.b16 %v205
    %v636 = vunpack.c.l.b16 %v206
    %v637 = vunpack.c.h.b16 %v206
    %v638 = vunpack.c.l.b16 %v207
    %v639 = vunpack.c.h.b16 %v207
    %v640 = vunpack.c.l.b16 %v208
    %v641 = vunpack.c.h.b16 %v208
    %v642 = vunpack.c.l.b16 %v209
    %v643 = vunpack.c.h.b16 %v209
    %v644 = vunpack.c.l.b16 %v210
    %v645 = vunpack.c.h.b16 %v210
    %v646 = vunpack.c.l.b16 %v211
    %v647 = vunpack.c.h.b16 %v211
    %v648 = vunpack.c.l.b16 %v212
    %v649 = vunpack.c.h.b16 %v212
    %v650 = vunpack.c.l.b16 %v213
    %v651 = vunpack.c.h.b16 %v213
    %v652 = vunpack.c.l.b16 %v214
    %v653 = vunpack.c.h.b16 %v214
    %v654 = vunpack.c.l.b16 %v215
    %v655 = vunpack.c.h.b16 %v215
    %v656 = vunpack.c.l.b16 %v216
    %v657 = vunpack.c.h.b16 %v216
    %v658 = vunpack.c.l.b16 %v217
    %v659 = vunpack.c.h.b16 %v217
    %v660 = vunpack.c.l.b16 %v218
    %v661 = vunpack.c.h.b16 %v218
    %v662 = vunpack.c.l.b16 %v219
    %v663 = vunpack.c.h.b16 %v219
    %v664 = vunpack.c.l.b16 %v220
    %v665 = vunpack.c.h.b16 %v220
    %v666 = vunpack.c.l.b16 %v221
    %v667 = vunpack.c.h.b16 %v221
    %v668 = vunpack.c.l.b16 %v222
    %v669 = vunpack.c.h.b16 %v222
    %v670 = vunpack.c.l.b16 %v223
    %v671 = vunpack.c.h.b16 %v223
    %v672 = vunpack.c.l.b16 %v224
    %v673 = vunpack.c.h.b16 %v224
    %v674 = vunpack.c.l.b16 %v225
    %v675 = vunpack.c.h.b16 %v225
    %v676 = vunpack.c.l.b16 %v226
    %v677 = vunpack.c.h.b16 %v226
    %v678 = vunpack.c.l.b16 %v227
    %v679 = vunpack.c.h.b16 %v227
    %v680 = vunpack.c.l.b16 %v228
    %v681 = vunpack.c.h.b16 %v228
    %v682 = vunpack.c.l.b16 %v229
    %v683 = vunpack.c.h.b16 %v229
    %v684 = vunpack.c.l.b16 %v230
    %v685 = vunpack.c.h.b16 %v230
    %v686 = vunpack.c.l.b16 %v231
    %v687 = vunpack.c.h.b16 %v231
    %v688 = vunpack.c.l.b16 %v232
    %v689 = vunpack.c.h.b16 %v232
    %v690 = vunpack.c.l.b16 %v233
    %v691 = vunpack.c.h.b16 %v233
    %v692 = vunpack.c.l.b16 %v234
    %v693 = vunpack.c.h.b16 %v234
    %v694 = vunpack.c.l.b16 %v235
    %v695 = vunpack.c.h.b16 %v235
    %v696 = vunpack.c.l.b16 %v236
    %v697 = vunpack.c.h.b16 %v236
    %v698 = vunpack.c.l.b16 %v237
    %v699 = vunpack.c.h.b16 %v237
    %v700 = vunpack.c.l.b16 %v238
    %v701 = vunpack.c.h.b16 %v238
    %v702 = vunpack.c.l.b16 %v239
    %v703 = vunpack.c.h.b16 %v239
    %v704 = vunpack.c.l.b16 %v240
    %v705 = vunpack.c.h.b16 %v240
    %v706 = vunpack.c.l.b16 %v241
    %v707 = vunpack.c.h.b16 %v241
    %v708 = vunpack.c.l.b16 %v242
    %v709 = vunpack.c.h.b16 %v242
    %v710 = vunpack.c.l.b16 %v243
    %v711 = vunpack.c.h.b16 %v243
    %v712 = vunpack.c.l.b16 %v244
    %v713 = vunpack.c.h.b16 %v244
    %v714 = vunpack.c.l.b16 %v245
    %v715 = vunpack.c.h.b16 %v245
    %v716 = vunpack.c.l.b16 %v246
    %v717 = vunpack.c.h.b16 %v246
    %v718 = vunpack.c.l.b16 %v247
    %v719 = vunpack.c.h.b16 %v247
    %v720 = vunpack.c.l.b16 %v248
    %v721 = vunpack.c.h.b16 %v248
    %v722 = vunpack.c.l.b16 %v249
    %v723 = vunpack.c.h.b16 %v249
    %v724 = vunpack.c.l.b16 %v250
    %v725 = vunpack.c.h.b16 %v250
    %v726 = vunpack.c.l.b16 %v251
    %v727 = vunpack.c.h.b16 %v251
    %v728 = vunpack.c.l.b16 %v252
    %v729 = vunpack.c.h.b16 %v252
    %v730 = vunpack.c.l.b16 %v253
    %v731 = vunpack.c.h.b16 %v253
    %v732 = vunpack.c.l.b16 %v254
    %v733 = vunpack.c.h.b16 %v254
    %v734 = vunpack.c.l.b16 %v255
    %v735 = vunpack.c.h.b16 %v255
    %v736 = vunpack.c.l.b16 %v256
    %v737 = vunpack.c.h.b16 %v256
    %v738 = vunpack.c.l.b16 %v257
    %v739 = vunpack.c.h.b16 %v257
    %v740 = vunpack.c.l.b16 %v258
    %v741 = vunpack.c.h.b16 %v258
    %v742 = vunpack.c.l.b16 %v259
    %v743 = vunpack.c.h.b16 %v259
    %v744 = vunpack.c.l.b16 %v260
    %v745 = vunpack.c.h.b16 %v260
    %v746 = vunpack.c.l.b16 %v261
    %v747 = vunpack.c.h.b16 %v261
    %v748 = vunpack.c.l.b16 %v262
    %v749 = vunpack.c.h.b16 %v262
    %v750 = vunpack.c.l.b16 %v263
    %v751 = vunpack.c.h.b16 %v263
    %v752 = vunpack.c.l.b16 %v264
    %v753 = vunpack.c.h.b16 %v264
    %v754 = vunpack.c.l.b16 %v265
    %v755 = vunpack.c.h.b16 %v265
    %v756 = vunpack.c.l.b16 %v266
    %v757 = vunpack.c.h.b16 %v266
    %v758 = vunpack.c.l.b16 %v267
    %v759 = vunpack.c.h.b16 %v267
    %v760 = vunpack.c.l.b16 %v268
    %v761 = vunpack.c.h.b16 %v268
    %v762 = vunpack.c.l.b16 %v269
    %v763 = vunpack.c.h.b16 %v269
    %v764 = vunpack.c.l.b16 %v270
    %v765 = vunpack.c.h.b16 %v270
    %v766 = vunpack.c.l.b16 %v271
    %v767 = vunpack.c.h.b16 %v271
    %v768 = vunpack.c.l.b16 %v272
    %v769 = vunpack.c.h.b16 %v272
    %v770 = vunpack.c.l.b16 %v273
    %v771 = vunpack.c.h.b16 %v273
    %v772 = vunpack.c.l.b16 %v274
    %v773 = vunpack.c.h.b16 %v274
    %v774 = vunpack.c.l.b16 %v275
    %v775 = vunpack.c.h.b16 %v275
    %v776 = vunpack.c.l.b16 %v276
    %v777 = vunpack.c.h.b16 %v276
    %v778 = vunpack.c.l.b16 %v277
    %v779 = vunpack.c.h.b16 %v277
    %v780 = vunpack.c.l.b16 %v278
    %v781 = vunpack.c.h.b16 %v278
    %v782 = vunpack.c.l.b16 %v279
    %v783 = vunpack.c.h.b16 %v279
    %v784 = vunpack.c.l.b16 %v280
    %v785 = vunpack.c.h.b16 %v280
    %v786 = vunpack.c.l.b16 %v281
    %v787 = vunpack.c.h.b16 %v281
    %v788 = vunpack.c.l.b16 %v282
    %v789 = vunpack.c.h.b16 %v282
    %v790 = vunpack.c.l.b16 %v283
    %v791 = vunpack.c.h.b16 %v283
    %v792 = vunpack.c.l.b16 %v284
    %v793 = vunpack.c.h.b16 %v284
    %v794 = vunpack.c.l.b16 %v285
    %v795 = vunpack.c.h.b16 %v285
    %v796 = vunpack.c.l.b16 %v286
    %v797 = vunpack.c.h.b16 %v286
    %v798 = vunpack.c.l.b16 %v287
    %v799 = vunpack.c.h.b16 %v287
    %v800 = vunpack.c.l.b16 %v288
    %v801 = vunpack.c.h.b16 %v288
    %v802 = vunpack.c.l.b16 %v289
    %v803 = vunpack.c.h.b16 %v289
    %v804 = vunpack.c.l.b16 %v290
    %v805 = vunpack.c.h.b16 %v290
    %v806 = vunpack.c.l.b16 %v291
    %v807 = vunpack.c.h.b16 %v291
    %v808 = vunpack.c.l.b16 %v292
    %v809 = vunpack.c.h.b16 %v292
    %v810 = vunpack.c.l.b16 %v293
    %v811 = vunpack.c.h.b16 %v293
    %v812 = vunpack.c.l.b16 %v294
    %v813 = vunpack.c.h.b16 %v294
    %v814 = vunpack.c.l.b16 %v295
    %v815 = vunpack.c.h.b16 %v295
    %v816 = vunpack.c.l.b16 %v296
    %v817 = vunpack.c.h.b16 %v296
    %v818 = vunpack.c.l.b16 %v297
    %v819 = vunpack.c.h.b16 %v297
    %v820 = vunpack.c.l.b16 %v298
    %v821 = vunpack.c.h.b16 %v298
    %v822 = vunpack.c.l.b16 %v299
    %v823 = vunpack.c.h.b16 %v299
    %v824 = vunpack.c.l.b16 %v300
    %v825 = vunpack.c.h.b16 %v300
    %v826 = vunpack.c.l.b16 %v301
    %v827 = vunpack.c.h.b16 %v301
    %v828 = vunpack.c.l.b16 %v302
    %v829 = vunpack.c.h.b16 %v302
    %v830 = vunpack.c.l.b16 %v303
    %v831 = vunpack.c.h.b16 %v303
    %v832 = vunpack.c.l.b16 %v304
    %v833 = vunpack.c.h.b16 %v304
    %v834 = vunpack.c.l.b16 %v305
    %v835 = vunpack.c.h.b16 %v305
    %v836 = vunpack.c.l.b16 %v306
    %v837 = vunpack.c.h.b16 %v306
    %v838 = vunpack.c.l.b16 %v307
    %v839 = vunpack.c.h.b16 %v307
    %v840 = vunpack.c.l.b16 %v308
    %v841 = vunpack.c.h.b16 %v308
    %v842 = vunpack.c.l.b16 %v309
    %v843 = vunpack.c.h.b16 %v309
    %v844 = vunpack.c.l.b16 %v310
    %v845 = vunpack.c.h.b16 %v310
    %v846 = vunpack.c.l.b16 %v311
    %v847 = vunpack.c.h.b16 %v311
    %v848 = vunpack.c.l.b16 %v312
    %v849 = vunpack.c.h.b16 %v312
    %v850 = vunpack.c.l.b16 %v313
    %v851 = vunpack.c.h.b16 %v313
    %v852 = vunpack.c.l.b16 %v314
    %v853 = vunpack.c.h.b16 %v314
    %v854 = vunpack.c.l.b16 %v315
    %v855 = vunpack.c.h.b16 %v315
    %v856 = vunpack.c.l.b16 %v316
    %v857 = vunpack.c.h.b16 %v316
    %v858 = vunpack.c.l.b16 %v317
    %v859 = vunpack.c.h.b16 %v317
    %v860 = vunpack.c.l.b16 %v318
    %v861 = vunpack.c.h.b16 %v318
    %v862 = vunpack.c.l.b16 %v319
    %v863 = vunpack.c.h.b16 %v319
    %v864 = vpack.c.b16 %v610, %v608
    %v865 = vpack.c.b16 %v611, %v609
    %v866 = vpack.c.b16 %v614, %v612
    %v867 = vpack.c.b16 %v615, %v613
    %v868 = vpack.c.b16 %v618, %v616
    %v869 = vpack.c.b16 %v619, %v617
    %v870 = vpack.c.b16 %v622, %v620
    %v871 = vpack.c.b16 %v623, %v621
    %v872 = vpack.c.b16 %v626, %v624
    %v873 = vpack.c.b16 %v627, %v625
    %v874 = vpack.c.b16 %v630, %v628
    %v875 = vpack.c.b16 %v631, %v629
    %v876 = vpack.c.b16 %v634, %v632
    %v877 = vpack.c.b16 %v635, %v633
    %v878 = vpack.c.b16 %v638, %v636
    %v879 = vpack.c.b16 %v639, %v637
    %v880 = vpack.c.b16 %v642, %v640
    %v881 = vpack.c.b16 %v643, %v641
    %v882 = vpack.c.b16 %v646, %v644
    %v883 = vpack.c.b16 %v647, %v645
    %v884 = vpack.c.b16 %v650, %v648
    %v885 = vpack.c.b16 %v651, %v649
    %v886 = vpack.c.b16 %v654, %v652
    %v887 = vpack.c.b16 %v655, %v653
    %v888 = vpack.c.b16 %v658, %v656
    %v889 = vpack.c.b16 %v659, %v657
    %v890 = vpack.c.b16 %v662, %v660
    %v891 = vpack.c.b16 %v663, %v661
    %v892 = vpack.c.b16 %v666, %v664
    %v893 = vpack.c.b16 %v667, %v665
    %v894 = vpack.c.b16 %v670, %v668
    %v895 = vpack.c.b16 %v671, %v669
    %v896 = vpack.c.b16 %v674, %v672
    %v897 = vpack.c.b16 %v675, %v673
    %v898 = vpack.c.b16 %v678, %v676
    %v899 = vpack.c.b16 %v679, %v677
    %v900 = vpack.c.b16 %v682, %v680
    %v901 = vpack.c.b16 %v683, %v681
    %v902 = vpack.c.b16 %v686, %v684
    %v903 = vpack.c.b16 %v687, %v685
    %v904 = vpack.c.b16 %v690, %v688
    %v905 = vpack.c.b16 %v691, %v689
    %v906 = vpack.c.b16 %v694, %v692
    %v907 = vpack.c.b16 %v695, %v693
    %v908 = vpack.c.b16 %v698, %v696
    %v909 = vpack.c.b16 %v699, %v697
    %v910 = vpack.c.b16 %v702, %v700
    %v911 = vpack.c.b16 %v703, %v701
    %v912 = vpack.c.b16 %v706, %v704
    %v913 = vpack.c.b16 %v707, %v705
    %v914 = vpack.c.b16 %v710, %v708
    %v915 = vpack.c.b16 %v711, %v709
    %v916 = vpack.c.b16 %v714, %v712
    %v917 = vpack.c.b16 %v715, %v713
    %v918 = vpack.c.b16 %v718, %v716
    %v919 = vpack.c.b16 %v719, %v717
    %v920 = vpack.c.b16 %v722, %v720
    %v921 = vpack.c.b16 %v723, %v721
    %v922 = vpack.c.b16 %v726, %v724
    %v923 = vpack.c.b16 %v727, %v725
    %v924 = vpack.c.b16 %v730, %v728
    %v925 = vpack.c.b16 %v731, %v729
    %v926 = vpack.c.b16 %v734, %v732
    %v927 = vpack.c.b16 %v735, %v733
    %v928 = vpack.c.b16 %v738, %v736
    %v929 = vpack.c.b16 %v739, %v737
    %v930 = vpack.c.b16 %v742, %v740
    %v931 = vpack.c.b16 %v743, %v741
    %v932 = vpack.c.b16 %v746, %v744
    %v933 = vpack.c.b16 %v747, %v745
    %v934 = vpack.c.b16 %v750, %v748
    %v935 = vpack.c.b16 %v751, %v749
    %v936 = vpack.c.b16 %v754, %v752
    %v937 = vpack.c.b16 %v755, %v753
    %v938 = vpack.c.b16 %v758, %v756
    %v939 = vpack.c.b16 %v759, %v757
    %v940 = vpack.c.b16 %v762, %v760
    %v941 = vpack.c.b16 %v763, %v761
    %v942 = vpack.c.b16 %v766, %v764
    %v943 = vpack.c.b16 %v767, %v765
    %v944 = vpack.c.b16 %v770, %v768
    %v945 = vpack.c.b16 %v771, %v769
    %v946 = vpack.c.b16 %v774, %v772
    %v947 = vpack.c.b16 %v775, %v773
    %v948 = vpack.c.b16 %v778, %v776
    %v949 = vpack.c.b16 %v779, %v777
    %v950 = vpack.c.b16 %v782, %v780
    %v951 = vpack.c.b16 %v783, %v781
    %v952 = vpack.c.b16 %v786, %v784
    %v953 = vpack.c.b16 %v787, %v785
    %v954 = vpack.c.b16 %v790, %v788
    %v955 = vpack.c.b16 %v791, %v789
    %v956 = vpack.c.b16 %v794, %v792
    %v957 = vpack.c.b16 %v795, %v793
    %v958 = vpack.c.b16 %v798, %v796
    %v959 = vpack.c.b16 %v799, %v797
    %v960 = vpack.c.b16 %v802, %v800
    %v961 = vpack.c.b16 %v803, %v801
    %v962 = vpack.c.b16 %v806, %v804
    %v963 = vpack.c.b16 %v807, %v805
    %v964 = vpack.c.b16 %v810, %v808
    %v965 = vpack.c.b16 %v811, %v809
    %v966 = vpack.c.b16 %v814, %v812
    %v967 = vpack.c.b16 %v815, %v813
    %v968 = vpack.c.b16 %v818, %v816
    %v969 = vpack.c.b16 %v819, %v817
    %v970 = vpack.c.b16 %v822, %v820
    %v971 = vpack.c.b16 %v823, %v821
    %v972 = vpack.c.b16 %v826, %v824
    %v973 = vpack.c.b16 %v827, %v825
    %v974 = vpack.c.b16 %v830, %v828
    %v975 = vpack.c.b16 %v831, %v829
    %v976 = vpack.c.b16 %v834, %v832
    %v977 = vpack.c.b16 %v835, %v833
    %v978 = vpack.c.b16 %v838, %v836
    %v979 = vpack.c.b16 %v839, %v837
    %v980 = vpack.c.b16 %v842, %v840
    %v981 = vpack.c.b16 %v843, %v841
    %v982 = vpack.c.b16 %v846, %v844
    %v983 = vpack.c.b16 %v847, %v845
    %v984 = vpack.c.b16 %v850, %v848
    %v985 = vpack.c.b16 %v851, %v849
    %v986 = vpack.c.b16 %v854, %v852
    %v987 = vpack.c.b16 %v855, %v853
    %v988 = vpack.c.b16 %v858, %v856
    %v989 = vpack.c.b16 %v859, %v857
    %v990 = vpack.c.b16 %v862, %v860
    %v991 = vpack.c.b16 %v863, %v861
    %1120 = vmatprep.subr.bf16.mxu0 %v865
    %1121 = vmatpush1.bf16.msra.mxu0 %v864
    %1122 = vmatprep.subr.bf16.mxu0 %v867
    %1123 = vmatpush1.bf16.msra.mxu0 %v866
    %1124 = vmatprep.subr.bf16.mxu0 %v869
    %1125 = vmatpush1.bf16.msra.mxu0 %v868
    %1126 = vmatprep.subr.bf16.mxu0 %v871
    %1127 = vmatpush1.bf16.msra.mxu0 %v870
    %1128 = vmatprep.subr.bf16.mxu0 %v873
    %1129 = vmatpush1.bf16.msra.mxu0 %v872
    %1130 = vmatprep.subr.bf16.mxu0 %v875
    %1131 = vmatpush1.bf16.msra.mxu0 %v874
    %1132 = vmatprep.subr.bf16.mxu0 %v877
    %1133 = vmatpush1.bf16.msra.mxu0 %v876
    %1134 = vmatprep.subr.bf16.mxu0 %v879
    %1135 = vmatpush1.bf16.msra.mxu0 %v878
    %1136 = vmatprep.subr.bf16.mxu0 %v881
    %1137 = vmatpush1.bf16.msra.mxu0 %v880
    %1138 = vmatprep.subr.bf16.mxu0 %v883
    %1139 = vmatpush1.bf16.msra.mxu0 %v882
    %1140 = vmatprep.subr.bf16.mxu0 %v885
    %1141 = vmatpush1.bf16.msra.mxu0 %v884
    %1142 = vmatprep.subr.bf16.mxu0 %v887
    %1143 = vmatpush1.bf16.msra.mxu0 %v886
    %1144 = vmatprep.subr.bf16.mxu0 %v889
    %1145 = vmatpush1.bf16.msra.mxu0 %v888
    %1146 = vmatprep.subr.bf16.mxu0 %v891
    %1147 = vmatpush1.bf16.msra.mxu0 %v890
    %1148 = vmatprep.subr.bf16.mxu0 %v893
    %1149 = vmatpush1.bf16.msra.mxu0 %v892
    %1150 = vmatprep.subr.bf16.mxu0 %v895
    %1151 = vmatpush1.bf16.msra.mxu0 %v894
    %1152 = vmatprep.mubr.bf16.mxu0 %v417
    %1153 = vmatmul.mubr.bf16.gmra.mrb[0].mxu0 %v416
    %v1154 = vpop.f32.mrb[0].mxu0
    %v1155 = vadd.f32 %v325, %v1154
    %v1156 = vpop.f32.mrb[0].mxu0
    %v1157 = vadd.f32 %v329, %v1156
    %v1158 = vpop.f32.mrb[0].mxu0
    %v1159 = vadd.f32 %v325, %v1158
    %v1160 = vpop.f32.mrb[0].mxu0
    %v1161 = vadd.f32 %v329, %v1160
    %1162 = vmatprep.mubr.bf16.mxu0 %v425
    %1163 = vmatmul.mubr.bf16.gmra.mrb[0].mxu0 %v424
    %v1164 = vpop.f32.mrb[0].mxu0
    %v1165 = vadd.f32 %v325, %v1164
    %v1166 = vpop.f32.mrb[0].mxu0
    %v1167 = vadd.f32 %v329, %v1166
    %v1168 = vpop.f32.mrb[0].mxu0
    %v1169 = vadd.f32 %v325, %v1168
    %v1170 = vpop.f32.mrb[0].mxu0
    %v1171 = vadd.f32 %v329, %v1170
    %1172 = vmatprep.mubr.bf16.mxu0 %v433
    %1173 = vmatmul.mubr.bf16.gmra.mrb[0].mxu0 %v432
    %v1174 = vpop.f32.mrb[0].mxu0
    %v1175 = vadd.f32 %v325, %v1174
    %v1176 = vpop.f32.mrb[0].mxu0
    %v1177 = vadd.f32 %v329, %v1176
    %v1178 = vpop.f32.mrb[0].mxu0
    %v1179 = vadd.f32 %v325, %v1178
    %v1180 = vpop.f32.mrb[0].mxu0
    %v1181 = vadd.f32 %v329, %v1180
    %1182 = vmatprep.mubr.bf16.mxu0 %v441
    %1183 = vmatmul.mubr.bf16.gmra.mrb[0].mxu0 %v440
    %v1184 = vpop.f32.mrb[0].mxu0
    %v1185 = vadd.f32 %v325, %v1184
    %v1186 = vpop.f32.mrb[0].mxu0
    %v1187 = vadd.f32 %v329, %v1186
    %v1188 = vpop.f32.mrb[0].mxu0
    %v1189 = vpop.f32.mrb[0].mxu0
    %1190 = vdwg.mxu0
    %1191 = vmatprep.subr.bf16.mxu0 %v897
    %1192 = vmatpush1.bf16.msra.mxu0 %v896
    %1193 = vmatprep.subr.bf16.mxu0 %v899
    %1194 = vmatpush1.bf16.msra.mxu0 %v898
    %1195 = vmatprep.subr.bf16.mxu0 %v901
    %1196 = vmatpush1.bf16.msra.mxu0 %v900
    %1197 = vmatprep.subr.bf16.mxu0 %v903
    %1198 = vmatpush1.bf16.msra.mxu0 %v902
    %1199 = vmatprep.subr.bf16.mxu0 %v905
    %1200 = vmatpush1.bf16.msra.mxu0 %v904
    %1201 = vmatprep.subr.bf16.mxu0 %v907
    %1202 = vmatpush1.bf16.msra.mxu0 %v906
    %1203 = vmatprep.subr.bf16.mxu0 %v909
    %1204 = vmatpush1.bf16.msra.mxu0 %v908
    %1205 = vmatprep.subr.bf16.mxu0 %v911
    %1206 = vmatpush1.bf16.msra.mxu0 %v910
    %1207 = vmatprep.subr.bf16.mxu0 %v913
    %1208 = vmatpush1.bf16.msra.mxu0 %v912
    %1209 = vmatprep.subr.bf16.mxu0 %v915
    %1210 = vmatpush1.bf16.msra.mxu0 %v914
    %1211 = vmatprep.subr.bf16.mxu0 %v917
    %1212 = vmatpush1.bf16.msra.mxu0 %v916
    %1213 = vmatprep.subr.bf16.mxu0 %v919
    %1214 = vmatpush1.bf16.msra.mxu0 %v918
    %1215 = vmatprep.subr.bf16.mxu0 %v921
    %1216 = vmatpush1.bf16.msra.mxu0 %v920
    %1217 = vmatprep.subr.bf16.mxu0 %v923
    %1218 = vmatpush1.bf16.msra.mxu0 %v922
    %1219 = vmatprep.subr.bf16.mxu0 %v925
    %1220 = vmatpush1.bf16.msra.mxu0 %v924
    %1221 = vmatprep.subr.bf16.mxu0 %v927
    %1222 = vmatpush1.bf16.msra.mxu0 %v926
    %1223 = vmatprep.mubr.bf16.mxu0 %v419
    %1224 = vmatmul.mubr.bf16.gmra.mrb[0].mxu0 %v418
    %v1225 = vpop.f32.mrb[0].mxu0
    %v1226 = vadd.f32 %v1155, %v1225
    %v1227 = vpop.f32.mrb[0].mxu0
    %v1228 = vadd.f32 %v1157, %v1227
    %v1229 = vpop.f32.mrb[0].mxu0
    %v1230 = vadd.f32 %v1159, %v1229
    %v1231 = vpop.f32.mrb[0].mxu0
    %v1232 = vadd.f32 %v1161, %v1231
    %1233 = vmatprep.mubr.bf16.mxu0 %v427
    %1234 = vmatmul.mubr.bf16.gmra.mrb[0].mxu0 %v426
    %v1235 = vpop.f32.mrb[0].mxu0
    %v1236 = vadd.f32 %v1165, %v1235
    %v1237 = vpop.f32.mrb[0].mxu0
    %v1238 = vadd.f32 %v1167, %v1237
    %v1239 = vpop.f32.mrb[0].mxu0
    %v1240 = vadd.f32 %v1169, %v1239
    %v1241 = vpop.f32.mrb[0].mxu0
    %v1242 = vadd.f32 %v1171, %v1241
    %1243 = vmatprep.mubr.bf16.mxu0 %v435
    %1244 = vmatmul.mubr.bf16.gmra.mrb[0].mxu0 %v434
    %v1245 = vpop.f32.mrb[0].mxu0
    %v1246 = vadd.f32 %v1175, %v1245
    %v1247 = vpop.f32.mrb[0].mxu0
    %v1248 = vadd.f32 %v1177, %v1247
    %v1249 = vpop.f32.mrb[0].mxu0
    %v1250 = vadd.f32 %v1179, %v1249
    %v1251 = vpop.f32.mrb[0].mxu0
    %v1252 = vadd.f32 %v1181, %v1251
    %1253 = vmatprep.mubr.bf16.mxu0 %v443
    %1254 = vmatmul.mubr.bf16.gmra.mrb[0].mxu0 %v442
    %v1255 = vpop.f32.mrb[0].mxu0
    %v1256 = vadd.f32 %v1185, %v1255
    %v1257 = vpop.f32.mrb[0].mxu0
    %v1258 = vadd.f32 %v1187, %v1257
    %v1259 = vpop.f32.mrb[0].mxu0
    %v1260 = vpop.f32.mrb[0].mxu0
    %1261 = vdwg.mxu0
    %1262 = vmatprep.subr.bf16.mxu0 %v929
    %1263 = vmatpush1.bf16.msra.mxu0 %v928
    %1264 = vmatprep.subr.bf16.mxu0 %v931
    %1265 = vmatpush1.bf16.msra.mxu0 %v930
    %1266 = vmatprep.subr.bf16.mxu0 %v933
    %1267 = vmatpush1.bf16.msra.mxu0 %v932
    %1268 = vmatprep.subr.bf16.mxu0 %v935
    %1269 = vmatpush1.bf16.msra.mxu0 %v934
    %1270 = vmatprep.subr.bf16.mxu0 %v937
    %1271 = vmatpush1.bf16.msra.mxu0 %v936
    %1272 = vmatprep.subr.bf16.mxu0 %v939
    %1273 = vmatpush1.bf16.msra.mxu0 %v938
    %1274 = vmatprep.subr.bf16.mxu0 %v941
    %1275 = vmatpush1.bf16.msra.mxu0 %v940
    %1276 = vmatprep.subr.bf16.mxu0 %v943
    %1277 = vmatpush1.bf16.msra.mxu0 %v942
    %1278 = vmatprep.subr.bf16.mxu0 %v945
    %1279 = vmatpush1.bf16.msra.mxu0 %v944
    %1280 = vmatprep.subr.bf16.mxu0 %v947
    %1281 = vmatpush1.bf16.msra.mxu0 %v946
    %1282 = vmatprep.subr.bf16.mxu0 %v949
    %1283 = vmatpush1.bf16.msra.mxu0 %v948
    %1284 = vmatprep.subr.bf16.mxu0 %v951
    %1285 = vmatpush1.bf16.msra.mxu0 %v950
    %1286 = vmatprep.subr.bf16.mxu0 %v953
    %1287 = vmatpush1.bf16.msra.mxu0 %v952
    %1288 = vmatprep.subr.bf16.mxu0 %v955
    %1289 = vmatpush1.bf16.msra.mxu0 %v954
    %1290 = vmatprep.subr.bf16.mxu0 %v957
    %1291 = vmatpush1.bf16.msra.mxu0 %v956
    %1292 = vmatprep.subr.bf16.mxu0 %v959
    %1293 = vmatpush1.bf16.msra.mxu0 %v958
    %1294 = vmatprep.mubr.bf16.mxu0 %v421
    %1295 = vmatmul.mubr.bf16.gmra.mrb[0].mxu0 %v420
    %v1296 = vpop.f32.mrb[0].mxu0
    %v1297 = vadd.f32 %v1226, %v1296
    %v1298 = vpop.f32.mrb[0].mxu0
    %v1299 = vadd.f32 %v1228, %v1298
    %v1300 = vpop.f32.mrb[0].mxu0
    %v1301 = vadd.f32 %v1230, %v1300
    %v1302 = vpop.f32.mrb[0].mxu0
    %v1303 = vadd.f32 %v1232, %v1302
    %1304 = vmatprep.mubr.bf16.mxu0 %v429
    %1305 = vmatmul.mubr.bf16.gmra.mrb[0].mxu0 %v428
    %v1306 = vpop.f32.mrb[0].mxu0
    %v1307 = vadd.f32 %v1236, %v1306
    %v1308 = vpop.f32.mrb[0].mxu0
    %v1309 = vadd.f32 %v1238, %v1308
    %v1310 = vpop.f32.mrb[0].mxu0
    %v1311 = vadd.f32 %v1240, %v1310
    %v1312 = vpop.f32.mrb[0].mxu0
    %v1313 = vadd.f32 %v1242, %v1312
    %1314 = vmatprep.mubr.bf16.mxu0 %v437
    %1315 = vmatmul.mubr.bf16.gmra.mrb[0].mxu0 %v436
    %v1316 = vpop.f32.mrb[0].mxu0
    %v1317 = vadd.f32 %v1246, %v1316
    %v1318 = vpop.f32.mrb[0].mxu0
    %v1319 = vadd.f32 %v1248, %v1318
    %v1320 = vpop.f32.mrb[0].mxu0
    %v1321 = vadd.f32 %v1250, %v1320
    %v1322 = vpop.f32.mrb[0].mxu0
    %v1323 = vadd.f32 %v1252, %v1322
    %1324 = vmatprep.mubr.bf16.mxu0 %v445
    %1325 = vmatmul.mubr.bf16.gmra.mrb[0].mxu0 %v444
    %v1326 = vpop.f32.mrb[0].mxu0
    %v1327 = vadd.f32 %v1256, %v1326
    %v1328 = vpop.f32.mrb[0].mxu0
    %v1329 = vadd.f32 %v1258, %v1328
    %v1330 = vpop.f32.mrb[0].mxu0
    %v1331 = vpop.f32.mrb[0].mxu0
    %1332 = vdwg.mxu0
    %1333 = vmatprep.subr.bf16.mxu0 %v961
    %1334 = vmatpush1.bf16.msra.mxu0 %v960
    %1335 = vmatprep.subr.bf16.mxu0 %v963
    %1336 = vmatpush1.bf16.msra.mxu0 %v962
    %1337 = vmatprep.subr.bf16.mxu0 %v965
    %1338 = vmatpush1.bf16.msra.mxu0 %v964
    %1339 = vmatprep.subr.bf16.mxu0 %v967
    %1340 = vmatpush1.bf16.msra.mxu0 %v966
    %1341 = vmatprep.subr.bf16.mxu0 %v969
    %1342 = vmatpush1.bf16.msra.mxu0 %v968
    %1343 = vmatprep.subr.bf16.mxu0 %v971
    %1344 = vmatpush1.bf16.msra.mxu0 %v970
    %1345 = vmatprep.subr.bf16.mxu0 %v973
    %1346 = vmatpush1.bf16.msra.mxu0 %v972
    %1347 = vmatprep.subr.bf16.mxu0 %v975
    %1348 = vmatpush1.bf16.msra.mxu0 %v974
    %1349 = vmatprep.subr.bf16.mxu0 %v977
    %1350 = vmatpush1.bf16.msra.mxu0 %v976
    %1351 = vmatprep.subr.bf16.mxu0 %v979
    %1352 = vmatpush1.bf16.msra.mxu0 %v978
    %1353 = vmatprep.subr.bf16.mxu0 %v981
    %1354 = vmatpush1.bf16.msra.mxu0 %v980
    %1355 = vmatprep.subr.bf16.mxu0 %v983
    %1356 = vmatpush1.bf16.msra.mxu0 %v982
    %1357 = vmatprep.subr.bf16.mxu0 %v985
    %1358 = vmatpush1.bf16.msra.mxu0 %v984
    %1359 = vmatprep.subr.bf16.mxu0 %v987
    %1360 = vmatpush1.bf16.msra.mxu0 %v986
    %1361 = vmatprep.subr.bf16.mxu0 %v989
    %1362 = vmatpush1.bf16.msra.mxu0 %v988
    %1363 = vmatprep.subr.bf16.mxu0 %v991
    %1364 = vmatpush1.bf16.msra.mxu0 %v990
    %1365 = vmatprep.mubr.bf16.mxu0 %v423
    %1366 = vmatmul.mubr.bf16.gmra.mrb[0].mxu0 %v422
    %v1367 = vpop.f32.mrb[0].mxu0
    %v1368 = vadd.f32 %v1297, %v1367
    %v1369 = vpop.f32.mrb[0].mxu0
    %v1370 = vadd.f32 %v1299, %v1369
    %v1371 = vpop.f32.mrb[0].mxu0
    %v1372 = vadd.f32 %v1301, %v1371
    %v1373 = vpop.f32.mrb[0].mxu0
    %v1374 = vadd.f32 %v1303, %v1373
    %1375 = vmatprep.mubr.bf16.mxu0 %v431
    %1376 = vmatmul.mubr.bf16.gmra.mrb[0].mxu0 %v430
    %v1377 = vpop.f32.mrb[0].mxu0
    %v1378 = vadd.f32 %v1307, %v1377
    %v1379 = vpop.f32.mrb[0].mxu0
    %v1380 = vadd.f32 %v1309, %v1379
    %v1381 = vpop.f32.mrb[0].mxu0
    %v1382 = vadd.f32 %v1311, %v1381
    %v1383 = vpop.f32.mrb[0].mxu0
    %v1384 = vadd.f32 %v1313, %v1383
    %1385 = vmatprep.mubr.bf16.mxu0 %v439
    %1386 = vmatmul.mubr.bf16.gmra.mrb[0].mxu0 %v438
    %v1387 = vpop.f32.mrb[0].mxu0
    %v1388 = vadd.f32 %v1317, %v1387
    %v1389 = vpop.f32.mrb[0].mxu0
    %v1390 = vadd.f32 %v1319, %v1389
    %v1391 = vpop.f32.mrb[0].mxu0
    %v1392 = vadd.f32 %v1321, %v1391
    %v1393 = vpop.f32.mrb[0].mxu0
    %v1394 = vadd.f32 %v1323, %v1393
    %1395 = vmatprep.mubr.bf16.mxu0 %v447
    %1396 = vmatmul.mubr.bf16.gmra.mrb[0].mxu0 %v446
    %v1397 = vpop.f32.mrb[0].mxu0
    %v1398 = vadd.f32 %v1327, %v1397
    %v1399 = vpop.f32.mrb[0].mxu0
    %v1400 = vadd.f32 %v1329, %v1399
    %v1401 = vpop.f32.mrb[0].mxu0
    %v1402 = vpop.f32.mrb[0].mxu0
    %1403 = vdwg.mxu0
    %1411 = vrot.lane.b32.xlu0 %v1398, 64
    %v1412 = vpop.permute.xlu0 %1411
    %1413 = vrot.lane.b32.xlu0 %v1392, 64
    %v1414 = vpop.permute.xlu0 %1413
    %1415 = vrot.lane.b32.xlu0 %v1388, 64
    %v1416 = vpop.permute.xlu0 %1415
    %1417 = vrot.lane.b32.xlu0 %v1382, 64
    %v1418 = vpop.permute.xlu0 %1417
    %1419 = vrot.lane.b32.xlu0 %v1378, 64
    %v1420 = vpop.permute.xlu0 %1419
    %1421 = vrot.lane.b32.xlu0 %v1372, 64
    %v1422 = vpop.permute.xlu0 %1421
    %1423 = vrot.lane.b32.xlu0 %v1368, 64
    %v1424 = vpop.permute.xlu0 %1423
    %vm1432 = vcmask 261120
    %v1433 = vsel %vm1432, %v1368, %v1412
    %v1434 = vsel %vm1432, %v1372, %v1414
    %v1435 = vsel %vm1432, %v1378, %v1416
    %v1436 = vsel %vm1432, %v1382, %v1418
    %v1437 = vsel %vm1432, %v1388, %v1420
    %v1438 = vsel %vm1432, %v1392, %v1422
    %v1439 = vsel %vm1432, %v1398, %v1424
    %1440 = vrot.lane.b32.xlu0 %v1368, 96
    %v1441 = vpop.permute.xlu0 %1440
    %1442 = vrot.lane.b32.xlu0 %v1372, 96
    %v1443 = vpop.permute.xlu0 %1442
    %1444 = vrot.lane.b32.xlu0 %v1378, 96
    %v1445 = vpop.permute.xlu0 %1444
    %1446 = vrot.lane.b32.xlu0 %v1382, 96
    %v1447 = vpop.permute.xlu0 %1446
    %1448 = vrot.lane.b32.xlu0 %v1388, 96
    %v1449 = vpop.permute.xlu0 %1448
    %1450 = vrot.lane.b32.xlu0 %v1392, 96
    %v1451 = vpop.permute.xlu0 %1450
    %1452 = vrot.lane.b32.xlu0 %v1398, 96
    %v1453 = vpop.permute.xlu0 %1452
    %1468 = vrot.lane.b32.xlu0 %v1400, 32
    %v1469 = vpop.permute.xlu0 %1468
    %1470 = vrot.lane.b32.xlu0 %v1394, 32
    %v1471 = vpop.permute.xlu0 %1470
    %1472 = vrot.lane.b32.xlu0 %v1390, 32
    %v1473 = vpop.permute.xlu0 %1472
    %1474 = vrot.lane.b32.xlu0 %v1384, 32
    %v1475 = vpop.permute.xlu0 %1474
    %1476 = vrot.lane.b32.xlu0 %v1380, 32
    %v1477 = vpop.permute.xlu0 %1476
    %1478 = vrot.lane.b32.xlu0 %v1374, 32
    %v1479 = vpop.permute.xlu0 %1478
    %1480 = vrot.lane.b32.xlu0 %v1370, 32
    %v1481 = vpop.permute.xlu0 %1480
    %v1489 = vsel %vm1432, %v1441, %v1469
    %v1490 = vsel %vm1432, %v1443, %v1471
    %v1491 = vsel %vm1432, %v1445, %v1473
    %v1492 = vsel %vm1432, %v1447, %v1475
    %v1493 = vsel %vm1432, %v1449, %v1477
    %v1494 = vsel %vm1432, %v1451, %v1479
    %v1495 = vsel %vm1432, %v1453, %v1481
    %v1496 = vsel %vm1432, %v1424, %v1400
    %v1497 = vsel %vm1432, %v1422, %v1394
    %v1498 = vsel %vm1432, %v1420, %v1390
    %v1499 = vsel %vm1432, %v1418, %v1384
    %v1500 = vsel %vm1432, %v1416, %v1380
    %v1501 = vsel %vm1432, %v1414, %v1374
    %v1502 = vsel %vm1432, %v1412, %v1370
    %v1503 = vld [vmem:[%s9] sm:$0xff]
    %v1504 = vld [vmem:[%s9 + $0x8] sm:$0xff]
    %v1505 = vld [vmem:[%s9 + $0x10] sm:$0xff]
    %v1506 = vld [vmem:[%s9 + $0x18] sm:$0xff]
    %v1507 = vld [vmem:[%s9 + $0x20] sm:$0xff]
    %v1508 = vld [vmem:[%s9 + $0x28] sm:$0xff]
    %v1509 = vld [vmem:[%s9 + $0x30] sm:$0xff]
    %v1510 = vld [vmem:[%s9 + $0x38] sm:$0xff]
    %v1511 = vld [vmem:[%s11] sm:$0x3]
    %v1513 = vlaneseq
    %v1514 = vshrl.u32 %v1513, 7
    %v1515 = vsub.s32 0, %v1514
    %v1516 = vrot.slane %v1511, %v1515
    %v1517 = vlaneseq
    %v1518 = vshrl.u32 %v1517, 7
    %v1519 = vsub.s32 1, %v1518
    %v1520 = vrot.slane %v1511, %v1519
    %v1531 = vunpack.c.l.b16 %v1503
    %v1532 = vunpack.c.h.b16 %v1503
    %v1533 = vunpack.c.l.b16 %v1504
    %v1534 = vunpack.c.h.b16 %v1504
    %v1535 = vunpack.c.l.b16 %v1505
    %v1536 = vunpack.c.h.b16 %v1505
    %v1537 = vunpack.c.l.b16 %v1506
    %v1538 = vunpack.c.h.b16 %v1506
    %v1539 = vunpack.c.l.b16 %v1507
    %v1540 = vunpack.c.h.b16 %v1507
    %v1541 = vunpack.c.l.b16 %v1508
    %v1542 = vunpack.c.h.b16 %v1508
    %v1543 = vunpack.c.l.b16 %v1509
    %v1544 = vunpack.c.h.b16 %v1509
    %v1545 = vunpack.c.l.b16 %v1510
    %v1546 = vunpack.c.h.b16 %v1510
    %v1547 = vpack.c.b16 %v1533, %v1531
    %v1548 = vpack.c.b16 %v1534, %v1532
    %v1549 = vpack.c.b16 %v1537, %v1535
    %v1550 = vpack.c.b16 %v1538, %v1536
    %v1551 = vpack.c.b16 %v1541, %v1539
    %v1552 = vpack.c.b16 %v1542, %v1540
    %v1553 = vpack.c.b16 %v1545, %v1543
    %v1554 = vpack.c.b16 %v1546, %v1544
    %vm1563 = vcmask 523264
    %v1565 = vsel %vm1563, 0, 0
    %1567 = vmatprep.subr.bf16.mxu0 %v1548
    %1568 = vmatpush1.bf16.msra.mxu0 %v1547
    %1569 = vmatprep.subr.bf16.mxu0 %v1550
    %1570 = vmatpush1.bf16.msra.mxu0 %v1549
    %1571 = vmatprep.subr.bf16.mxu0 %v1552
    %1572 = vmatpush1.bf16.msra.mxu0 %v1551
    %1573 = vmatprep.subr.bf16.mxu0 %v1554
    %1574 = vmatpush1.bf16.msra.mxu0 %v1553
    %1575 = vmatprep.subr.bf16.mxu0 0
    %1576 = vmatpush1.bf16.msra.mxu0 0
    %1577 = vmatprep.subr.bf16.mxu0 0
    %1578 = vmatpush1.bf16.msra.mxu0 0
    %1579 = vmatprep.subr.bf16.mxu0 0
    %1580 = vmatpush1.bf16.msra.mxu0 0
    %1581 = vmatprep.subr.bf16.mxu0 0
    %1582 = vmatpush1.bf16.msra.mxu0 0
    %1583 = vmatprep.subr.bf16.mxu0 0
    %1584 = vmatpush1.bf16.msra.mxu0 0
    %1585 = vmatprep.subr.bf16.mxu0 0
    %1586 = vmatpush1.bf16.msra.mxu0 0
    %1587 = vmatprep.subr.bf16.mxu0 0
    %1588 = vmatpush1.bf16.msra.mxu0 0
    %1589 = vmatprep.subr.bf16.mxu0 0
    %1590 = vmatpush1.bf16.msra.mxu0 0
    %1591 = vmatprep.subr.bf16.mxu0 0
    %1592 = vmatpush1.bf16.msra.mxu0 0
    %1593 = vmatprep.subr.bf16.mxu0 0
    %1594 = vmatpush1.bf16.msra.mxu0 0
    %1595 = vmatprep.subr.bf16.mxu0 0
    %1596 = vmatpush1.bf16.msra.mxu0 0
    %1597 = vmatprep.subr.bf16.mxu0 0
    %1598 = vmatpush1.bf16.msra.mxu0 0
    %1599 = vmatprep.mubr.bf16.mxu0 0
    %1600 = vmatmul.mubr.bf16.gmra.mrb[0].mxu0 %v1565
    %v1601 = vpop.f32.mrb[0].mxu0
    %v1602 = vadd.f32 %v1516, %v1601
    %v1603 = vpop.f32.mrb[0].mxu0
    %v1604 = vadd.f32 %v1520, %v1603
    %v1605 = vpop.f32.mrb[0].mxu0
    %v1606 = vpop.f32.mrb[0].mxu0
    %1607 = vdwg.mxu0
    %v1608 = vadd.f32 %v1433, %v1602
    %v1609 = vxor.u32 %v1608, 2147483648
    %v1610 = vmul.f32 %v1609, 1.442695
    %v1611 = vpow.pop %v1610
    %v1612 = vadd.f32 %v1611, 1.0
    %v1613 = vrcp.pop %v1612
    %v1614 = vmul.f32 1.0, %v1613
    %1616 = vrot.lane.b32.xlu0 %v1602, 64
    %v1617 = vpop.permute.xlu0 %1616
    %v1619 = vadd.f32 %v1489, %v1617
    %v1620 = vxor.u32 %v1619, 2147483648
    %v1621 = vmul.f32 %v1620, 1.442695
    %v1622 = vpow.pop %v1621
    %v1623 = vadd.f32 %v1622, 1.0
    %v1624 = vrcp.pop %v1623
    %v1625 = vmul.f32 1.0, %v1624
    %v1626 = vmul.f32 %v1614, %v1604
    %v1627 = vadd.f32 %v1496, %v1626
    %v1628 = vtanh.pop %v1627
    %v1629 = vsub.f32 1.0, %v1625
    %v1630 = vmul.f32 %v1629, %v1628
    %v1631 = vmul.f32 %v1625, 0.0
    %v1632 = vadd.f32 %v1630, %v1631
    %v1633 = vpack.c.bf16 %v1632, %v1632
    %v1635 = vsel %vm1563, %v1633, 0
    %1637 = vmatprep.subr.bf16.mxu0 %v1548
    %1638 = vmatpush1.bf16.msra.mxu0 %v1547
    %1639 = vmatprep.subr.bf16.mxu0 %v1550
    %1640 = vmatpush1.bf16.msra.mxu0 %v1549
    %1641 = vmatprep.subr.bf16.mxu0 %v1552
    %1642 = vmatpush1.bf16.msra.mxu0 %v1551
    %1643 = vmatprep.subr.bf16.mxu0 %v1554
    %1644 = vmatpush1.bf16.msra.mxu0 %v1553
    %1645 = vmatprep.subr.bf16.mxu0 0
    %1646 = vmatpush1.bf16.msra.mxu0 0
    %1647 = vmatprep.subr.bf16.mxu0 0
    %1648 = vmatpush1.bf16.msra.mxu0 0
    %1649 = vmatprep.subr.bf16.mxu0 0
    %1650 = vmatpush1.bf16.msra.mxu0 0
    %1651 = vmatprep.subr.bf16.mxu0 0
    %1652 = vmatpush1.bf16.msra.mxu0 0
    %1653 = vmatprep.subr.bf16.mxu0 0
    %1654 = vmatpush1.bf16.msra.mxu0 0
    %1655 = vmatprep.subr.bf16.mxu0 0
    %1656 = vmatpush1.bf16.msra.mxu0 0
    %1657 = vmatprep.subr.bf16.mxu0 0
    %1658 = vmatpush1.bf16.msra.mxu0 0
    %1659 = vmatprep.subr.bf16.mxu0 0
    %1660 = vmatpush1.bf16.msra.mxu0 0
    %1661 = vmatprep.subr.bf16.mxu0 0
    %1662 = vmatpush1.bf16.msra.mxu0 0
    %1663 = vmatprep.subr.bf16.mxu0 0
    %1664 = vmatpush1.bf16.msra.mxu0 0
    %1665 = vmatprep.subr.bf16.mxu0 0
    %1666 = vmatpush1.bf16.msra.mxu0 0
    %1667 = vmatprep.subr.bf16.mxu0 0
    %1668 = vmatpush1.bf16.msra.mxu0 0
    %1669 = vmatprep.mubr.bf16.mxu0 0
    %1670 = vmatmul.mubr.bf16.gmra.mrb[0].mxu0 %v1635
    %v1671 = vpop.f32.mrb[0].mxu0
    %v1672 = vadd.f32 %v1516, %v1671
    %v1673 = vpop.f32.mrb[0].mxu0
    %v1674 = vadd.f32 %v1520, %v1673
    %v1675 = vpop.f32.mrb[0].mxu0
    %v1676 = vpop.f32.mrb[0].mxu0
    %1677 = vdwg.mxu0
    %v1678 = vadd.f32 %v1434, %v1672
    %v1679 = vxor.u32 %v1678, 2147483648
    %v1680 = vmul.f32 %v1679, 1.442695
    %v1681 = vpow.pop %v1680
    %v1682 = vadd.f32 %v1681, 1.0
    %v1683 = vrcp.pop %v1682
    %v1684 = vmul.f32 1.0, %v1683
    %1686 = vrot.lane.b32.xlu0 %v1672, 64
    %v1687 = vpop.permute.xlu0 %1686
    %v1689 = vadd.f32 %v1490, %v1687
    %v1690 = vxor.u32 %v1689, 2147483648
    %v1691 = vmul.f32 %v1690, 1.442695
    %v1692 = vpow.pop %v1691
    %v1693 = vadd.f32 %v1692, 1.0
    %v1694 = vrcp.pop %v1693
    %v1695 = vmul.f32 1.0, %v1694
    %v1696 = vmul.f32 %v1684, %v1674
    %v1697 = vadd.f32 %v1497, %v1696
    %v1698 = vtanh.pop %v1697
    %v1699 = vsub.f32 1.0, %v1695
    %v1700 = vmul.f32 %v1699, %v1698
    %v1701 = vmul.f32 %v1695, %v1632
    %v1702 = vadd.f32 %v1700, %v1701
    %v1703 = vpack.c.bf16 %v1702, %v1702
    %v1705 = vsel %vm1563, %v1703, 0
    %1707 = vmatprep.subr.bf16.mxu0 %v1548
    %1708 = vmatpush1.bf16.msra.mxu0 %v1547
    %1709 = vmatprep.subr.bf16.mxu0 %v1550
    %1710 = vmatpush1.bf16.msra.mxu0 %v1549
    %1711 = vmatprep.subr.bf16.mxu0 %v1552
    %1712 = vmatpush1.bf16.msra.mxu0 %v1551
    %1713 = vmatprep.subr.bf16.mxu0 %v1554
    %1714 = vmatpush1.bf16.msra.mxu0 %v1553
    %1715 = vmatprep.subr.bf16.mxu0 0
    %1716 = vmatpush1.bf16.msra.mxu0 0
    %1717 = vmatprep.subr.bf16.mxu0 0
    %1718 = vmatpush1.bf16.msra.mxu0 0
    %1719 = vmatprep.subr.bf16.mxu0 0
    %1720 = vmatpush1.bf16.msra.mxu0 0
    %1721 = vmatprep.subr.bf16.mxu0 0
    %1722 = vmatpush1.bf16.msra.mxu0 0
    %1723 = vmatprep.subr.bf16.mxu0 0
    %1724 = vmatpush1.bf16.msra.mxu0 0
    %1725 = vmatprep.subr.bf16.mxu0 0
    %1726 = vmatpush1.bf16.msra.mxu0 0
    %1727 = vmatprep.subr.bf16.mxu0 0
    %1728 = vmatpush1.bf16.msra.mxu0 0
    %1729 = vmatprep.subr.bf16.mxu0 0
    %1730 = vmatpush1.bf16.msra.mxu0 0
    %1731 = vmatprep.subr.bf16.mxu0 0
    %1732 = vmatpush1.bf16.msra.mxu0 0
    %1733 = vmatprep.subr.bf16.mxu0 0
    %1734 = vmatpush1.bf16.msra.mxu0 0
    %1735 = vmatprep.subr.bf16.mxu0 0
    %1736 = vmatpush1.bf16.msra.mxu0 0
    %1737 = vmatprep.subr.bf16.mxu0 0
    %1738 = vmatpush1.bf16.msra.mxu0 0
    %1739 = vmatprep.mubr.bf16.mxu0 0
    %1740 = vmatmul.mubr.bf16.gmra.mrb[0].mxu0 %v1705
    %v1741 = vpop.f32.mrb[0].mxu0
    %v1742 = vadd.f32 %v1516, %v1741
    %v1743 = vpop.f32.mrb[0].mxu0
    %v1744 = vadd.f32 %v1520, %v1743
    %v1745 = vpop.f32.mrb[0].mxu0
    %v1746 = vpop.f32.mrb[0].mxu0
    %1747 = vdwg.mxu0
    %v1748 = vadd.f32 %v1435, %v1742
    %v1749 = vxor.u32 %v1748, 2147483648
    %v1750 = vmul.f32 %v1749, 1.442695
    %v1751 = vpow.pop %v1750
    %v1752 = vadd.f32 %v1751, 1.0
    %v1753 = vrcp.pop %v1752
    %v1754 = vmul.f32 1.0, %v1753
    %1756 = vrot.lane.b32.xlu0 %v1742, 64
    %v1757 = vpop.permute.xlu0 %1756
    %v1759 = vadd.f32 %v1491, %v1757
    %v1760 = vxor.u32 %v1759, 2147483648
    %v1761 = vmul.f32 %v1760, 1.442695
    %v1762 = vpow.pop %v1761
    %v1763 = vadd.f32 %v1762, 1.0
    %v1764 = vrcp.pop %v1763
    %v1765 = vmul.f32 1.0, %v1764
    %v1766 = vmul.f32 %v1754, %v1744
    %v1767 = vadd.f32 %v1498, %v1766
    %v1768 = vtanh.pop %v1767
    %v1769 = vsub.f32 1.0, %v1765
    %v1770 = vmul.f32 %v1769, %v1768
    %v1771 = vmul.f32 %v1765, %v1702
    %v1772 = vadd.f32 %v1770, %v1771
    %v1773 = vpack.c.bf16 %v1772, %v1772
    %v1775 = vsel %vm1563, %v1773, 0
    %1777 = vmatprep.subr.bf16.mxu0 %v1548
    %1778 = vmatpush1.bf16.msra.mxu0 %v1547
    %1779 = vmatprep.subr.bf16.mxu0 %v1550
    %1780 = vmatpush1.bf16.msra.mxu0 %v1549
    %1781 = vmatprep.subr.bf16.mxu0 %v1552
    %1782 = vmatpush1.bf16.msra.mxu0 %v1551
    %1783 = vmatprep.subr.bf16.mxu0 %v1554
    %1784 = vmatpush1.bf16.msra.mxu0 %v1553
    %1785 = vmatprep.subr.bf16.mxu0 0
    %1786 = vmatpush1.bf16.msra.mxu0 0
    %1787 = vmatprep.subr.bf16.mxu0 0
    %1788 = vmatpush1.bf16.msra.mxu0 0
    %1789 = vmatprep.subr.bf16.mxu0 0
    %1790 = vmatpush1.bf16.msra.mxu0 0
    %1791 = vmatprep.subr.bf16.mxu0 0
    %1792 = vmatpush1.bf16.msra.mxu0 0
    %1793 = vmatprep.subr.bf16.mxu0 0
    %1794 = vmatpush1.bf16.msra.mxu0 0
    %1795 = vmatprep.subr.bf16.mxu0 0
    %1796 = vmatpush1.bf16.msra.mxu0 0
    %1797 = vmatprep.subr.bf16.mxu0 0
    %1798 = vmatpush1.bf16.msra.mxu0 0
    %1799 = vmatprep.subr.bf16.mxu0 0
    %1800 = vmatpush1.bf16.msra.mxu0 0
    %1801 = vmatprep.subr.bf16.mxu0 0
    %1802 = vmatpush1.bf16.msra.mxu0 0
    %1803 = vmatprep.subr.bf16.mxu0 0
    %1804 = vmatpush1.bf16.msra.mxu0 0
    %1805 = vmatprep.subr.bf16.mxu0 0
    %1806 = vmatpush1.bf16.msra.mxu0 0
    %1807 = vmatprep.subr.bf16.mxu0 0
    %1808 = vmatpush1.bf16.msra.mxu0 0
    %1809 = vmatprep.mubr.bf16.mxu0 0
    %1810 = vmatmul.mubr.bf16.gmra.mrb[0].mxu0 %v1775
    %v1811 = vpop.f32.mrb[0].mxu0
    %v1812 = vadd.f32 %v1516, %v1811
    %v1813 = vpop.f32.mrb[0].mxu0
    %v1814 = vadd.f32 %v1520, %v1813
    %v1815 = vpop.f32.mrb[0].mxu0
    %v1816 = vpop.f32.mrb[0].mxu0
    %1817 = vdwg.mxu0
    %v1818 = vadd.f32 %v1436, %v1812
    %v1819 = vxor.u32 %v1818, 2147483648
    %v1820 = vmul.f32 %v1819, 1.442695
    %v1821 = vpow.pop %v1820
    %v1822 = vadd.f32 %v1821, 1.0
    %v1823 = vrcp.pop %v1822
    %v1824 = vmul.f32 1.0, %v1823
    %1826 = vrot.lane.b32.xlu0 %v1812, 64
    %v1827 = vpop.permute.xlu0 %1826
    %v1829 = vadd.f32 %v1492, %v1827
    %v1830 = vxor.u32 %v1829, 2147483648
    %v1831 = vmul.f32 %v1830, 1.442695
    %v1832 = vpow.pop %v1831
    %v1833 = vadd.f32 %v1832, 1.0
    %v1834 = vrcp.pop %v1833
    %v1835 = vmul.f32 1.0, %v1834
    %v1836 = vmul.f32 %v1824, %v1814
    %v1837 = vadd.f32 %v1499, %v1836
    %v1838 = vtanh.pop %v1837
    %v1839 = vsub.f32 1.0, %v1835
    %v1840 = vmul.f32 %v1839, %v1838
    %v1841 = vmul.f32 %v1835, %v1772
    %v1842 = vadd.f32 %v1840, %v1841
    %v1843 = vpack.c.bf16 %v1842, %v1842
    %v1845 = vsel %vm1563, %v1843, 0
    %1847 = vmatprep.subr.bf16.mxu0 %v1548
    %1848 = vmatpush1.bf16.msra.mxu0 %v1547
    %1849 = vmatprep.subr.bf16.mxu0 %v1550
    %1850 = vmatpush1.bf16.msra.mxu0 %v1549
    %1851 = vmatprep.subr.bf16.mxu0 %v1552
    %1852 = vmatpush1.bf16.msra.mxu0 %v1551
    %1853 = vmatprep.subr.bf16.mxu0 %v1554
    %1854 = vmatpush1.bf16.msra.mxu0 %v1553
    %1855 = vmatprep.subr.bf16.mxu0 0
    %1856 = vmatpush1.bf16.msra.mxu0 0
    %1857 = vmatprep.subr.bf16.mxu0 0
    %1858 = vmatpush1.bf16.msra.mxu0 0
    %1859 = vmatprep.subr.bf16.mxu0 0
    %1860 = vmatpush1.bf16.msra.mxu0 0
    %1861 = vmatprep.subr.bf16.mxu0 0
    %1862 = vmatpush1.bf16.msra.mxu0 0
    %1863 = vmatprep.subr.bf16.mxu0 0
    %1864 = vmatpush1.bf16.msra.mxu0 0
    %1865 = vmatprep.subr.bf16.mxu0 0
    %1866 = vmatpush1.bf16.msra.mxu0 0
    %1867 = vmatprep.subr.bf16.mxu0 0
    %1868 = vmatpush1.bf16.msra.mxu0 0
    %1869 = vmatprep.subr.bf16.mxu0 0
    %1870 = vmatpush1.bf16.msra.mxu0 0
    %1871 = vmatprep.subr.bf16.mxu0 0
    %1872 = vmatpush1.bf16.msra.mxu0 0
    %1873 = vmatprep.subr.bf16.mxu0 0
    %1874 = vmatpush1.bf16.msra.mxu0 0
    %1875 = vmatprep.subr.bf16.mxu0 0
    %1876 = vmatpush1.bf16.msra.mxu0 0
    %1877 = vmatprep.subr.bf16.mxu0 0
    %1878 = vmatpush1.bf16.msra.mxu0 0
    %1879 = vmatprep.mubr.bf16.mxu0 0
    %1880 = vmatmul.mubr.bf16.gmra.mrb[0].mxu0 %v1845
    %v1881 = vpop.f32.mrb[0].mxu0
    %v1882 = vadd.f32 %v1516, %v1881
    %v1883 = vpop.f32.mrb[0].mxu0
    %v1884 = vadd.f32 %v1520, %v1883
    %v1885 = vpop.f32.mrb[0].mxu0
    %v1886 = vpop.f32.mrb[0].mxu0
    %1887 = vdwg.mxu0
    %v1888 = vadd.f32 %v1437, %v1882
    %v1889 = vxor.u32 %v1888, 2147483648
    %v1890 = vmul.f32 %v1889, 1.442695
    %v1891 = vpow.pop %v1890
    %v1892 = vadd.f32 %v1891, 1.0
    %v1893 = vrcp.pop %v1892
    %v1894 = vmul.f32 1.0, %v1893
    %1896 = vrot.lane.b32.xlu0 %v1882, 64
    %v1897 = vpop.permute.xlu0 %1896
    %v1899 = vadd.f32 %v1493, %v1897
    %v1900 = vxor.u32 %v1899, 2147483648
    %v1901 = vmul.f32 %v1900, 1.442695
    %v1902 = vpow.pop %v1901
    %v1903 = vadd.f32 %v1902, 1.0
    %v1904 = vrcp.pop %v1903
    %v1905 = vmul.f32 1.0, %v1904
    %v1906 = vmul.f32 %v1894, %v1884
    %v1907 = vadd.f32 %v1500, %v1906
    %v1908 = vtanh.pop %v1907
    %v1909 = vsub.f32 1.0, %v1905
    %v1910 = vmul.f32 %v1909, %v1908
    %v1911 = vmul.f32 %v1905, %v1842
    %v1912 = vadd.f32 %v1910, %v1911
    %v1913 = vpack.c.bf16 %v1912, %v1912
    %v1915 = vsel %vm1563, %v1913, 0
    %1917 = vmatprep.subr.bf16.mxu0 %v1548
    %1918 = vmatpush1.bf16.msra.mxu0 %v1547
    %1919 = vmatprep.subr.bf16.mxu0 %v1550
    %1920 = vmatpush1.bf16.msra.mxu0 %v1549
    %1921 = vmatprep.subr.bf16.mxu0 %v1552
    %1922 = vmatpush1.bf16.msra.mxu0 %v1551
    %1923 = vmatprep.subr.bf16.mxu0 %v1554
    %1924 = vmatpush1.bf16.msra.mxu0 %v1553
    %1925 = vmatprep.subr.bf16.mxu0 0
    %1926 = vmatpush1.bf16.msra.mxu0 0
    %1927 = vmatprep.subr.bf16.mxu0 0
    %1928 = vmatpush1.bf16.msra.mxu0 0
    %1929 = vmatprep.subr.bf16.mxu0 0
    %1930 = vmatpush1.bf16.msra.mxu0 0
    %1931 = vmatprep.subr.bf16.mxu0 0
    %1932 = vmatpush1.bf16.msra.mxu0 0
    %1933 = vmatprep.subr.bf16.mxu0 0
    %1934 = vmatpush1.bf16.msra.mxu0 0
    %1935 = vmatprep.subr.bf16.mxu0 0
    %1936 = vmatpush1.bf16.msra.mxu0 0
    %1937 = vmatprep.subr.bf16.mxu0 0
    %1938 = vmatpush1.bf16.msra.mxu0 0
    %1939 = vmatprep.subr.bf16.mxu0 0
    %1940 = vmatpush1.bf16.msra.mxu0 0
    %1941 = vmatprep.subr.bf16.mxu0 0
    %1942 = vmatpush1.bf16.msra.mxu0 0
    %1943 = vmatprep.subr.bf16.mxu0 0
    %1944 = vmatpush1.bf16.msra.mxu0 0
    %1945 = vmatprep.subr.bf16.mxu0 0
    %1946 = vmatpush1.bf16.msra.mxu0 0
    %1947 = vmatprep.subr.bf16.mxu0 0
    %1948 = vmatpush1.bf16.msra.mxu0 0
    %1949 = vmatprep.mubr.bf16.mxu0 0
    %1950 = vmatmul.mubr.bf16.gmra.mrb[0].mxu0 %v1915
    %v1951 = vpop.f32.mrb[0].mxu0
    %v1952 = vadd.f32 %v1516, %v1951
    %v1953 = vpop.f32.mrb[0].mxu0
    %v1954 = vadd.f32 %v1520, %v1953
    %v1955 = vpop.f32.mrb[0].mxu0
    %v1956 = vpop.f32.mrb[0].mxu0
    %1957 = vdwg.mxu0
    %v1958 = vadd.f32 %v1438, %v1952
    %v1959 = vxor.u32 %v1958, 2147483648
    %v1960 = vmul.f32 %v1959, 1.442695
    %v1961 = vpow.pop %v1960
    %v1962 = vadd.f32 %v1961, 1.0
    %v1963 = vrcp.pop %v1962
    %v1964 = vmul.f32 1.0, %v1963
    %1966 = vrot.lane.b32.xlu0 %v1952, 64
    %v1967 = vpop.permute.xlu0 %1966
    %v1969 = vadd.f32 %v1494, %v1967
    %v1970 = vxor.u32 %v1969, 2147483648
    %v1971 = vmul.f32 %v1970, 1.442695
    %v1972 = vpow.pop %v1971
    %v1973 = vadd.f32 %v1972, 1.0
    %v1974 = vrcp.pop %v1973
    %v1975 = vmul.f32 1.0, %v1974
    %v1976 = vmul.f32 %v1964, %v1954
    %v1977 = vadd.f32 %v1501, %v1976
    %v1978 = vtanh.pop %v1977
    %v1979 = vsub.f32 1.0, %v1975
    %v1980 = vmul.f32 %v1979, %v1978
    %v1981 = vmul.f32 %v1975, %v1912
    %v1982 = vadd.f32 %v1980, %v1981
    %v1983 = vpack.c.bf16 %v1982, %v1982
    %v1985 = vsel %vm1563, %v1983, 0
    %1987 = vmatprep.subr.bf16.mxu0 %v1548
    %1988 = vmatpush1.bf16.msra.mxu0 %v1547
    %1989 = vmatprep.subr.bf16.mxu0 %v1550
    %1990 = vmatpush1.bf16.msra.mxu0 %v1549
    %1991 = vmatprep.subr.bf16.mxu0 %v1552
    %1992 = vmatpush1.bf16.msra.mxu0 %v1551
    %1993 = vmatprep.subr.bf16.mxu0 %v1554
    %1994 = vmatpush1.bf16.msra.mxu0 %v1553
    %1995 = vmatprep.subr.bf16.mxu0 0
    %1996 = vmatpush1.bf16.msra.mxu0 0
    %1997 = vmatprep.subr.bf16.mxu0 0
    %1998 = vmatpush1.bf16.msra.mxu0 0
    %1999 = vmatprep.subr.bf16.mxu0 0
    %2000 = vmatpush1.bf16.msra.mxu0 0
    %2001 = vmatprep.subr.bf16.mxu0 0
    %2002 = vmatpush1.bf16.msra.mxu0 0
    %2003 = vmatprep.subr.bf16.mxu0 0
    %2004 = vmatpush1.bf16.msra.mxu0 0
    %2005 = vmatprep.subr.bf16.mxu0 0
    %2006 = vmatpush1.bf16.msra.mxu0 0
    %2007 = vmatprep.subr.bf16.mxu0 0
    %2008 = vmatpush1.bf16.msra.mxu0 0
    %2009 = vmatprep.subr.bf16.mxu0 0
    %2010 = vmatpush1.bf16.msra.mxu0 0
    %2011 = vmatprep.subr.bf16.mxu0 0
    %2012 = vmatpush1.bf16.msra.mxu0 0
    %2013 = vmatprep.subr.bf16.mxu0 0
    %2014 = vmatpush1.bf16.msra.mxu0 0
    %2015 = vmatprep.subr.bf16.mxu0 0
    %2016 = vmatpush1.bf16.msra.mxu0 0
    %2017 = vmatprep.subr.bf16.mxu0 0
    %2018 = vmatpush1.bf16.msra.mxu0 0
    %2019 = vmatprep.mubr.bf16.mxu0 0
    %2020 = vmatmul.mubr.bf16.gmra.mrb[0].mxu0 %v1985
    %v2021 = vpop.f32.mrb[0].mxu0
    %v2022 = vadd.f32 %v1516, %v2021
    %v2023 = vpop.f32.mrb[0].mxu0
    %v2024 = vadd.f32 %v1520, %v2023
    %v2025 = vpop.f32.mrb[0].mxu0
    %v2026 = vpop.f32.mrb[0].mxu0
    %2027 = vdwg.mxu0
    %v2028 = vadd.f32 %v1439, %v2022
    %v2029 = vxor.u32 %v2028, 2147483648
    %v2030 = vmul.f32 %v2029, 1.442695
    %v2031 = vpow.pop %v2030
    %v2032 = vadd.f32 %v2031, 1.0
    %v2033 = vrcp.pop %v2032
    %v2034 = vmul.f32 1.0, %v2033
    %2036 = vrot.lane.b32.xlu0 %v2022, 64
    %v2037 = vpop.permute.xlu0 %2036
    %v2039 = vadd.f32 %v1495, %v2037
    %v2040 = vxor.u32 %v2039, 2147483648
    %v2041 = vmul.f32 %v2040, 1.442695
    %v2042 = vpow.pop %v2041
    %v2043 = vadd.f32 %v2042, 1.0
    %v2044 = vrcp.pop %v2043
    %v2045 = vmul.f32 1.0, %v2044
    %v2046 = vmul.f32 %v2034, %v2024
    %v2047 = vadd.f32 %v1502, %v2046
    %v2048 = vtanh.pop %v2047
    %v2049 = vsub.f32 1.0, %v2045
    %v2050 = vmul.f32 %v2049, %v2048
    %v2051 = vmul.f32 %v2045, %v1982
    %v2052 = vadd.f32 %v2050, %v2051
    %v2053 = vsel %vm1432, %v1632, %v2052
    %v2054 = vsel %vm1432, %v1702, %v1982
    %v2055 = vsel %vm1432, %v1772, %v1912
    %v2056 = vsel %vm1432, %v1912, %v1772
    %v2057 = vsel %vm1432, %v1982, %v1702
    %v2058 = vsel %vm1432, %v2052, %v1632
    %v2059 = vpack.c.bf16 %v2054, %v2053
    %v2060 = vpack.c.bf16 %v1842, %v2055
    %v2061 = vpack.c.bf16 %v2057, %v2056
    %v2062 = vpack.c.bf16 %v2058, %v2058
    %v2063 = vld [vmem:[%s13] sm:$0xf]
    %v2064 = vld [vmem:[%s13 + $0x4] sm:$0xf]
    %v2065 = vld [vmem:[%s13 + $0x8] sm:$0xf]
    %v2066 = vld [vmem:[%s13 + $0xc] sm:$0xf]
    %v2067 = vld [vmem:[%s13 + $0x10] sm:$0xf]
    %v2068 = vld [vmem:[%s13 + $0x14] sm:$0xf]
    %v2069 = vld [vmem:[%s13 + $0x18] sm:$0xf]
    %v2070 = vld [vmem:[%s13 + $0x1c] sm:$0xf]
    %v2071 = vld [vmem:[%s15] sm:$0x1]
    %v2073 = vlaneseq
    %v2074 = vshrl.u32 %v2073, 7
    %v2075 = vsub.s32 0, %v2074
    %v2076 = vrot.slane %v2071, %v2075
    %v2086 = vunpack.c.l.b16 %v2063
    %v2087 = vunpack.c.l.b16 %v2064
    %v2088 = vunpack.c.l.b16 %v2065
    %v2089 = vunpack.c.l.b16 %v2066
    %v2090 = vunpack.c.l.b16 %v2067
    %v2091 = vunpack.c.l.b16 %v2068
    %v2092 = vunpack.c.l.b16 %v2069
    %v2093 = vunpack.c.l.b16 %v2070
    %v2094 = vpack.c.b16 %v2087, %v2086
    %v2095 = vpack.c.b16 %v2089, %v2088
    %v2096 = vpack.c.b16 %v2091, %v2090
    %v2097 = vpack.c.b16 %v2093, %v2092
    %v2103 = vsel %vm1563, %v2059, 0
    %v2106 = vsel %vm1563, %v2060, 0
    %v2109 = vsel %vm1563, %v2061, 0
    %v2112 = vsel %vm1563, %v2062, 0
    %2114 = vmatprep.subr.bf16.mxu0 0
    %2115 = vmatpush1.bf16.msra.mxu0 %v2094
    %2116 = vmatprep.subr.bf16.mxu0 0
    %2117 = vmatpush1.bf16.msra.mxu0 %v2095
    %2118 = vmatprep.subr.bf16.mxu0 0
    %2119 = vmatpush1.bf16.msra.mxu0 %v2096
    %2120 = vmatprep.subr.bf16.mxu0 0
    %2121 = vmatpush1.bf16.msra.mxu0 %v2097
    %2122 = vmatprep.subr.bf16.mxu0 0
    %2123 = vmatpush1.bf16.msra.mxu0 0
    %2124 = vmatprep.subr.bf16.mxu0 0
    %2125 = vmatpush1.bf16.msra.mxu0 0
    %2126 = vmatprep.subr.bf16.mxu0 0
    %2127 = vmatpush1.bf16.msra.mxu0 0
    %2128 = vmatprep.subr.bf16.mxu0 0
    %2129 = vmatpush1.bf16.msra.mxu0 0
    %2130 = vmatprep.subr.bf16.mxu0 0
    %2131 = vmatpush1.bf16.msra.mxu0 0
    %2132 = vmatprep.subr.bf16.mxu0 0
    %2133 = vmatpush1.bf16.msra.mxu0 0
    %2134 = vmatprep.subr.bf16.mxu0 0
    %2135 = vmatpush1.bf16.msra.mxu0 0
    %2136 = vmatprep.subr.bf16.mxu0 0
    %2137 = vmatpush1.bf16.msra.mxu0 0
    %2138 = vmatprep.subr.bf16.mxu0 0
    %2139 = vmatpush1.bf16.msra.mxu0 0
    %2140 = vmatprep.subr.bf16.mxu0 0
    %2141 = vmatpush1.bf16.msra.mxu0 0
    %2142 = vmatprep.subr.bf16.mxu0 0
    %2143 = vmatpush1.bf16.msra.mxu0 0
    %2144 = vmatprep.subr.bf16.mxu0 0
    %2145 = vmatpush1.bf16.msra.mxu0 0
    %2146 = vmatprep.mubr.bf16.mxu0 0
    %2147 = vmatmul.mubr.bf16.gmra.mrb[0].mxu0 %v2103
    %v2148 = vpop.f32.mrb[0].mxu0
    %v2149 = vadd.f32 %v2076, %v2148
    %v2150 = vpop.f32.mrb[0].mxu0
    %v2151 = vpop.f32.mrb[0].mxu0
    %v2152 = vadd.f32 %v2076, %v2151
    %v2153 = vpop.f32.mrb[0].mxu0
    %2154 = vmatprep.mubr.bf16.mxu0 0
    %2155 = vmatmul.mubr.bf16.gmra.mrb[0].mxu0 %v2106
    %v2156 = vpop.f32.mrb[0].mxu0
    %v2157 = vadd.f32 %v2076, %v2156
    %v2158 = vpop.f32.mrb[0].mxu0
    %v2159 = vpop.f32.mrb[0].mxu0
    %v2160 = vadd.f32 %v2076, %v2159
    %v2161 = vpop.f32.mrb[0].mxu0
    %2162 = vmatprep.mubr.bf16.mxu0 0
    %2163 = vmatmul.mubr.bf16.gmra.mrb[0].mxu0 %v2109
    %v2164 = vpop.f32.mrb[0].mxu0
    %v2165 = vadd.f32 %v2076, %v2164
    %v2166 = vpop.f32.mrb[0].mxu0
    %v2167 = vpop.f32.mrb[0].mxu0
    %v2168 = vadd.f32 %v2076, %v2167
    %v2169 = vpop.f32.mrb[0].mxu0
    %2170 = vmatprep.mubr.bf16.mxu0 0
    %2171 = vmatmul.mubr.bf16.gmra.mrb[0].mxu0 %v2112
    %v2172 = vpop.f32.mrb[0].mxu0
    %v2173 = vadd.f32 %v2076, %v2172
    %v2174 = vpop.f32.mrb[0].mxu0
    %v2175 = vpop.f32.mrb[0].mxu0
    %v2176 = vpop.f32.mrb[0].mxu0
    %2177 = vdwg.mxu0
    %v2178 = vtanh.pop %v2149
    %v2179 = vtanh.pop %v2152
    %v2180 = vtanh.pop %v2157
    %v2181 = vtanh.pop %v2160
    %v2182 = vtanh.pop %v2165
    %v2183 = vtanh.pop %v2168
    %v2184 = vtanh.pop %v2173
    %v2185 = vpack.c.bf16 %v2179, %v2178
    %v2186 = vpack.c.bf16 %v2181, %v2180
    %v2187 = vpack.c.bf16 %v2183, %v2182
    %v2188 = vpack.c.bf16 %v2184, %v2184
    %v2189 = vld [vmem:[%s17] sm:$0xf]
    %v2190 = vld [vmem:[%s17 + $0x4] sm:$0xf]
    %v2191 = vld [vmem:[%s17 + $0x8] sm:$0xf]
    %v2192 = vld [vmem:[%s17 + $0xc] sm:$0xf]
    %v2193 = vld [vmem:[%s17 + $0x10] sm:$0xf]
    %v2194 = vld [vmem:[%s17 + $0x14] sm:$0xf]
    %v2195 = vld [vmem:[%s17 + $0x18] sm:$0xf]
    %v2196 = vld [vmem:[%s17 + $0x1c] sm:$0xf]
    %v2197 = vld [vmem:[%s17 + $0x20] sm:$0xf]
    %v2198 = vld [vmem:[%s17 + $0x24] sm:$0xf]
    %v2199 = vld [vmem:[%s17 + $0x28] sm:$0xf]
    %v2200 = vld [vmem:[%s17 + $0x2c] sm:$0xf]
    %v2201 = vld [vmem:[%s17 + $0x30] sm:$0xf]
    %v2202 = vld [vmem:[%s17 + $0x34] sm:$0xf]
    %v2203 = vld [vmem:[%s17 + $0x38] sm:$0xf]
    %v2204 = vld [vmem:[%s17 + $0x3c] sm:$0xf]
    %v2221 = vunpack.c.l.b16 %v2189
    %v2222 = vunpack.c.l.b16 %v2190
    %v2223 = vunpack.c.l.b16 %v2191
    %v2224 = vunpack.c.l.b16 %v2192
    %v2225 = vunpack.c.l.b16 %v2193
    %v2226 = vunpack.c.l.b16 %v2194
    %v2227 = vunpack.c.l.b16 %v2195
    %v2228 = vunpack.c.l.b16 %v2196
    %v2229 = vunpack.c.l.b16 %v2197
    %v2230 = vunpack.c.l.b16 %v2198
    %v2231 = vunpack.c.l.b16 %v2199
    %v2232 = vunpack.c.l.b16 %v2200
    %v2233 = vunpack.c.l.b16 %v2201
    %v2234 = vunpack.c.l.b16 %v2202
    %v2235 = vunpack.c.l.b16 %v2203
    %v2236 = vunpack.c.l.b16 %v2204
    %v2237 = vpack.c.b16 %v2222, %v2221
    %v2238 = vpack.c.b16 %v2224, %v2223
    %v2239 = vpack.c.b16 %v2226, %v2225
    %v2240 = vpack.c.b16 %v2228, %v2227
    %v2241 = vpack.c.b16 %v2230, %v2229
    %v2242 = vpack.c.b16 %v2232, %v2231
    %v2243 = vpack.c.b16 %v2234, %v2233
    %v2244 = vpack.c.b16 %v2236, %v2235
    %2253 = vmatprep.subr.bf16.mxu0 0
    %2254 = vmatpush1.bf16.msra.mxu0 %v2237
    %2255 = vmatprep.subr.bf16.mxu0 0
    %2256 = vmatpush1.bf16.msra.mxu0 %v2238
    %2257 = vmatprep.subr.bf16.mxu0 0
    %2258 = vmatpush1.bf16.msra.mxu0 %v2239
    %2259 = vmatprep.subr.bf16.mxu0 0
    %2260 = vmatpush1.bf16.msra.mxu0 %v2240
    %2261 = vmatprep.subr.bf16.mxu0 0
    %2262 = vmatpush1.bf16.msra.mxu0 %v2241
    %2263 = vmatprep.subr.bf16.mxu0 0
    %2264 = vmatpush1.bf16.msra.mxu0 %v2242
    %2265 = vmatprep.subr.bf16.mxu0 0
    %2266 = vmatpush1.bf16.msra.mxu0 %v2243
    %2267 = vmatprep.subr.bf16.mxu0 0
    %2268 = vmatpush1.bf16.msra.mxu0 %v2244
    %2269 = vmatprep.subr.bf16.mxu0 0
    %2270 = vmatpush1.bf16.msra.mxu0 0
    %2271 = vmatprep.subr.bf16.mxu0 0
    %2272 = vmatpush1.bf16.msra.mxu0 0
    %2273 = vmatprep.subr.bf16.mxu0 0
    %2274 = vmatpush1.bf16.msra.mxu0 0
    %2275 = vmatprep.subr.bf16.mxu0 0
    %2276 = vmatpush1.bf16.msra.mxu0 0
    %2277 = vmatprep.subr.bf16.mxu0 0
    %2278 = vmatpush1.bf16.msra.mxu0 0
    %2279 = vmatprep.subr.bf16.mxu0 0
    %2280 = vmatpush1.bf16.msra.mxu0 0
    %2281 = vmatprep.subr.bf16.mxu0 0
    %2282 = vmatpush1.bf16.msra.mxu0 0
    %2283 = vmatprep.subr.bf16.mxu0 0
    %2284 = vmatpush1.bf16.msra.mxu0 0
    %2285 = vmatprep.mubr.bf16.mxu0 0
    %2286 = vmatmul.mubr.bf16.gmra.mrb[0].mxu0 %v2185
    %v2287 = vpop.f32.mrb[0].mxu0
    %v2288 = vadd.f32 0.0, %v2287
    %v2289 = vpop.f32.mrb[0].mxu0
    %v2290 = vpop.f32.mrb[0].mxu0
    %v2291 = vadd.f32 0.0, %v2290
    %v2292 = vpop.f32.mrb[0].mxu0
    %2293 = vmatprep.mubr.bf16.mxu0 0
    %2294 = vmatmul.mubr.bf16.gmra.mrb[0].mxu0 %v2186
    %v2295 = vpop.f32.mrb[0].mxu0
    %v2296 = vadd.f32 0.0, %v2295
    %v2297 = vpop.f32.mrb[0].mxu0
    %v2298 = vpop.f32.mrb[0].mxu0
    %v2299 = vadd.f32 0.0, %v2298
    %v2300 = vpop.f32.mrb[0].mxu0
    %2301 = vmatprep.mubr.bf16.mxu0 0
    %2302 = vmatmul.mubr.bf16.gmra.mrb[0].mxu0 %v2187
    %v2303 = vpop.f32.mrb[0].mxu0
    %v2304 = vadd.f32 0.0, %v2303
    %v2305 = vpop.f32.mrb[0].mxu0
    %v2306 = vpop.f32.mrb[0].mxu0
    %v2307 = vadd.f32 0.0, %v2306
    %v2308 = vpop.f32.mrb[0].mxu0
    %2309 = vmatprep.mubr.bf16.mxu0 0
    %2310 = vmatmul.mubr.bf16.gmra.mrb[0].mxu0 %v2188
    %v2311 = vpop.f32.mrb[0].mxu0
    %v2312 = vadd.f32 0.0, %v2311
    %v2313 = vpop.f32.mrb[0].mxu0
    %v2314 = vpop.f32.mrb[0].mxu0
    %v2315 = vpop.f32.mrb[0].mxu0
    %2316 = vdwg.mxu0
    %v2317 = vld [vmem:[%s3] sm:$0xff]
    %vm2318 = vcmp.le.s32.totalorder %v2317, 0
    %v2319 = vsel %vm2318, 1, 0
    %2320 = vset.pattern.permute.xlu0 0
    %2321 = vperm.xlu0 %2320, %v2319
    %v2322 = vpop.permute.xlu0 %2321
    %vm2323 = vcmp.eq.s32.totalorder %v2322, 1
    %v2324 = vsel %vm2323, -1e+09, %v2288
    %vm2325 = vcmp.le.s32.totalorder %v2317, 1
    %v2326 = vsel %vm2325, 1, 0
    %2327 = vset.pattern.permute.xlu0 0
    %2328 = vperm.xlu0 %2327, %v2326
    %v2329 = vpop.permute.xlu0 %2328
    %vm2330 = vcmp.eq.s32.totalorder %v2329, 1
    %v2331 = vsel %vm2330, -1e+09, %v2291
    %vm2332 = vcmp.le.s32.totalorder %v2317, 2
    %v2333 = vsel %vm2332, 1, 0
    %2334 = vset.pattern.permute.xlu0 0
    %2335 = vperm.xlu0 %2334, %v2333
    %v2336 = vpop.permute.xlu0 %2335
    %vm2337 = vcmp.eq.s32.totalorder %v2336, 1
    %v2338 = vsel %vm2337, -1e+09, %v2296
    %vm2339 = vcmp.le.s32.totalorder %v2317, 3
    %v2340 = vsel %vm2339, 1, 0
    %2341 = vset.pattern.permute.xlu0 0
    %2342 = vperm.xlu0 %2341, %v2340
    %v2343 = vpop.permute.xlu0 %2342
    %vm2344 = vcmp.eq.s32.totalorder %v2343, 1
    %v2345 = vsel %vm2344, -1e+09, %v2299
    %vm2346 = vcmp.le.s32.totalorder %v2317, 4
    %v2347 = vsel %vm2346, 1, 0
    %2348 = vset.pattern.permute.xlu0 0
    %2349 = vperm.xlu0 %2348, %v2347
    %v2350 = vpop.permute.xlu0 %2349
    %vm2351 = vcmp.eq.s32.totalorder %v2350, 1
    %v2352 = vsel %vm2351, -1e+09, %v2304
    %vm2353 = vcmp.le.s32.totalorder %v2317, 5
    %v2354 = vsel %vm2353, 1, 0
    %2355 = vset.pattern.permute.xlu0 0
    %2356 = vperm.xlu0 %2355, %v2354
    %v2357 = vpop.permute.xlu0 %2356
    %vm2358 = vcmp.eq.s32.totalorder %v2357, 1
    %v2359 = vsel %vm2358, -1e+09, %v2307
    %vm2360 = vcmp.le.s32.totalorder %v2317, 6
    %v2361 = vsel %vm2360, 1, 0
    %2362 = vset.pattern.permute.xlu0 0
    %2363 = vperm.xlu0 %2362, %v2361
    %v2364 = vpop.permute.xlu0 %2363
    %vm2365 = vcmp.eq.s32.totalorder %v2364, 1
    %v2366 = vsel %vm2365, -1e+09, %v2312
    %v2367 = vmax.f32 %v2324, %v2331
    %v2368 = vmax.f32 %v2367, %v2338
    %v2369 = vmax.f32 %v2368, %v2345
    %v2370 = vmax.f32 %v2369, %v2352
    %v2371 = vmax.f32 %v2370, %v2359
    %v2372 = vmax.f32 %v2371, %v2366
    %v2373 = vsub.f32 %v2324, %v2372
    %v2374 = vmul.f32 %v2373, 1.442695
    %v2375 = vpow.pop %v2374
    %v2376 = vsub.f32 %v2331, %v2372
    %v2377 = vmul.f32 %v2376, 1.442695
    %v2378 = vpow.pop %v2377
    %v2379 = vsub.f32 %v2338, %v2372
    %v2380 = vmul.f32 %v2379, 1.442695
    %v2381 = vpow.pop %v2380
    %v2382 = vsub.f32 %v2345, %v2372
    %v2383 = vmul.f32 %v2382, 1.442695
    %v2384 = vpow.pop %v2383
    %v2385 = vsub.f32 %v2352, %v2372
    %v2386 = vmul.f32 %v2385, 1.442695
    %v2387 = vpow.pop %v2386
    %v2388 = vsub.f32 %v2359, %v2372
    %v2389 = vmul.f32 %v2388, 1.442695
    %v2390 = vpow.pop %v2389
    %v2391 = vsub.f32 %v2366, %v2372
    %v2392 = vmul.f32 %v2391, 1.442695
    %v2393 = vpow.pop %v2392
    %v2394 = vadd.f32 %v2375, %v2378
    %v2395 = vadd.f32 %v2394, %v2381
    %v2396 = vadd.f32 %v2395, %v2384
    %v2397 = vadd.f32 %v2396, %v2387
    %v2398 = vadd.f32 %v2397, %v2390
    %v2399 = vadd.f32 %v2398, %v2393
    %v2400 = vrcp.pop %v2399
    %v2401 = vmul.f32 %v2375, %v2400
    %v2402 = vmul.f32 %v2378, %v2400
    %v2403 = vmul.f32 %v2381, %v2400
    %v2404 = vmul.f32 %v2384, %v2400
    %v2405 = vmul.f32 %v2387, %v2400
    %v2406 = vmul.f32 %v2390, %v2400
    %v2407 = vmul.f32 %v2393, %v2400
    %s2408 = sld [smem:[#allocation7]]
    %v2409 = vstv %s2408
    %v2410 = vmul.f32 %v2401, %v2409
    %v2411 = vadd.f32 %v2410, 0.0
    %s2412 = sld [smem:[#allocation9]]
    %v2413 = vstv %s2412
    %v2414 = vmul.f32 %v2401, %v2413
    %v2415 = vadd.f32 %v2414, 0.0
    %s2416 = sld [smem:[#allocation7 + $0x1]]
    %v2417 = vstv %s2416
    %v2418 = vmul.f32 %v2402, %v2417
    %v2419 = vadd.f32 %v2411, %v2418
    %s2420 = sld [smem:[#allocation9 + $0x1]]
    %v2421 = vstv %s2420
    %v2422 = vmul.f32 %v2402, %v2421
    %v2423 = vadd.f32 %v2415, %v2422
    %s2424 = sld [smem:[#allocation7 + $0x2]]
    %v2425 = vstv %s2424
    %v2426 = vmul.f32 %v2403, %v2425
    %v2427 = vadd.f32 %v2419, %v2426
    %s2428 = sld [smem:[#allocation9 + $0x2]]
    %v2429 = vstv %s2428
    %v2430 = vmul.f32 %v2403, %v2429
    %v2431 = vadd.f32 %v2423, %v2430
    %s2432 = sld [smem:[#allocation7 + $0x3]]
    %v2433 = vstv %s2432
    %v2434 = vmul.f32 %v2404, %v2433
    %v2435 = vadd.f32 %v2427, %v2434
    %s2436 = sld [smem:[#allocation9 + $0x3]]
    %v2437 = vstv %s2436
    %v2438 = vmul.f32 %v2404, %v2437
    %v2439 = vadd.f32 %v2431, %v2438
    %s2440 = sld [smem:[#allocation7 + $0x4]]
    %v2441 = vstv %s2440
    %v2442 = vmul.f32 %v2405, %v2441
    %v2443 = vadd.f32 %v2435, %v2442
    %s2444 = sld [smem:[#allocation9 + $0x4]]
    %v2445 = vstv %s2444
    %v2446 = vmul.f32 %v2405, %v2445
    %v2447 = vadd.f32 %v2439, %v2446
    %s2448 = sld [smem:[#allocation7 + $0x5]]
    %v2449 = vstv %s2448
    %v2450 = vmul.f32 %v2406, %v2449
    %v2451 = vadd.f32 %v2443, %v2450
    %s2452 = sld [smem:[#allocation9 + $0x5]]
    %v2453 = vstv %s2452
    %v2454 = vmul.f32 %v2406, %v2453
    %v2455 = vadd.f32 %v2447, %v2454
    %s2456 = sld [smem:[#allocation7 + $0x6]]
    %v2457 = vstv %s2456
    %v2458 = vmul.f32 %v2407, %v2457
    %v2459 = vadd.f32 %v2451, %v2458
    %s2460 = sld [smem:[#allocation9 + $0x6]]
    %v2461 = vstv %s2460
    %v2462 = vmul.f32 %v2407, %v2461
    %v2463 = vadd.f32 %v2455, %v2462
    %s2464 = sld [smem:[#allocation2]]
    %v2465 = vstv %s2464
    %v2466 = vadd.f32 %v2459, %v2465
    %vm2467 = vcmask 15360
    %v2468 = vsel %vm2467, %v2466, -inf
    %2469 = vmax.xlane.f32.xlu0 %v2468
    %v2470 = vpop.xlane.xlu0 %2469
    %v2471 = vsub.f32 %v2466, %v2470
    %v2472 = vmul.f32 %v2471, 1.442695
    %v2473 = vpow.pop %v2472
    %v2474 = vsel %vm2467, %v2473, 0.0
    %2475 = vadd.xlane.f32.xlu0 %v2474
    %v2476 = vpop.xlane.xlu0 %2475
    %v2477 = vrcp.pop %v2476
    %v2478 = vmul.f32 %v2473, %v2477
    %s2479 = sld [smem:[#allocation3]]
    %v2480 = vstv %s2479
    %v2481 = vadd.f32 %v2463, %v2480
    %v2482 = vsel %vm2467, %v2481, -inf
    %2483 = vmax.xlane.f32.xlu0 %v2482
    %v2484 = vpop.xlane.xlu0 %2483
    %v2485 = vsub.f32 %v2481, %v2484
    %v2486 = vmul.f32 %v2485, 1.442695
    %v2487 = vpow.pop %v2486
    %v2488 = vsel %vm2467, %v2487, 0.0
    %2489 = vadd.xlane.f32.xlu0 %v2488
    %v2490 = vpop.xlane.xlu0 %2489
    %v2491 = vrcp.pop %v2490
    %v2492 = vmul.f32 %v2487, %v2491
    %v2493 = vmul.f32 %v2478, %v2401
    %v2494 = vsel %vm2467, %v2493, 0.0
    %2495 = vadd.xlane.f32.xlu0 %v2494
    %v2496 = vpop.xlane.xlu0 %2495
    %v2497 = vmul.f32 %v2478, %v2402
    %v2498 = vsel %vm2467, %v2497, 0.0
    %2499 = vadd.xlane.f32.xlu0 %v2498
    %v2500 = vpop.xlane.xlu0 %2499
    %v2501 = vmul.f32 %v2478, %v2403
    %v2502 = vsel %vm2467, %v2501, 0.0
    %2503 = vadd.xlane.f32.xlu0 %v2502
    %v2504 = vpop.xlane.xlu0 %2503
    %v2505 = vmul.f32 %v2478, %v2404
    %v2506 = vsel %vm2467, %v2505, 0.0
    %2507 = vadd.xlane.f32.xlu0 %v2506
    %v2508 = vpop.xlane.xlu0 %2507
    %v2509 = vmul.f32 %v2478, %v2405
    %v2510 = vsel %vm2467, %v2509, 0.0
    %2511 = vadd.xlane.f32.xlu0 %v2510
    %v2512 = vpop.xlane.xlu0 %2511
    %v2513 = vmul.f32 %v2478, %v2406
    %v2514 = vsel %vm2467, %v2513, 0.0
    %2515 = vadd.xlane.f32.xlu0 %v2514
    %v2516 = vpop.xlane.xlu0 %2515
    %v2517 = vmul.f32 %v2478, %v2407
    %v2518 = vsel %vm2467, %v2517, 0.0
    %2519 = vadd.xlane.f32.xlu0 %v2518
    %v2520 = vpop.xlane.xlu0 %2519
    %v2521 = vmul.f32 %v2492, %v2401
    %v2522 = vsel %vm2467, %v2521, 0.0
    %2523 = vadd.xlane.f32.xlu0 %v2522
    %v2524 = vpop.xlane.xlu0 %2523
    %v2525 = vmul.f32 %v2492, %v2402
    %v2526 = vsel %vm2467, %v2525, 0.0
    %2527 = vadd.xlane.f32.xlu0 %v2526
    %v2528 = vpop.xlane.xlu0 %2527
    %v2529 = vmul.f32 %v2492, %v2403
    %v2530 = vsel %vm2467, %v2529, 0.0
    %2531 = vadd.xlane.f32.xlu0 %v2530
    %v2532 = vpop.xlane.xlu0 %2531
    %v2533 = vmul.f32 %v2492, %v2404
    %v2534 = vsel %vm2467, %v2533, 0.0
    %2535 = vadd.xlane.f32.xlu0 %v2534
    %v2536 = vpop.xlane.xlu0 %2535
    %v2537 = vmul.f32 %v2492, %v2405
    %v2538 = vsel %vm2467, %v2537, 0.0
    %2539 = vadd.xlane.f32.xlu0 %v2538
    %v2540 = vpop.xlane.xlu0 %2539
    %v2541 = vmul.f32 %v2492, %v2406
    %v2542 = vsel %vm2467, %v2541, 0.0
    %2543 = vadd.xlane.f32.xlu0 %v2542
    %v2544 = vpop.xlane.xlu0 %2543
    %v2545 = vmul.f32 %v2492, %v2407
    %v2546 = vsel %vm2467, %v2545, 0.0
    %2547 = vadd.xlane.f32.xlu0 %v2546
    %v2548 = vpop.xlane.xlu0 %2547
    %v2549 = vmul.f32 %v2053, %v2496
    %v2550 = vadd.f32 %v2549, 0.0
    %v2551 = vmul.f32 %v2053, %v2524
    %v2552 = vadd.f32 %v2551, 0.0
    %v2553 = vmul.f32 %v2054, %v2500
    %v2554 = vadd.f32 %v2550, %v2553
    %v2555 = vmul.f32 %v2054, %v2528
    %v2556 = vadd.f32 %v2552, %v2555
    %v2557 = vmul.f32 %v2055, %v2504
    %v2558 = vadd.f32 %v2554, %v2557
    %v2559 = vmul.f32 %v2055, %v2532
    %v2560 = vadd.f32 %v2556, %v2559
    %v2561 = vmul.f32 %v1842, %v2508
    %v2562 = vadd.f32 %v2558, %v2561
    %v2563 = vmul.f32 %v1842, %v2536
    %v2564 = vadd.f32 %v2560, %v2563
    %v2565 = vmul.f32 %v2056, %v2512
    %v2566 = vadd.f32 %v2562, %v2565
    %v2567 = vmul.f32 %v2056, %v2540
    %v2568 = vadd.f32 %v2564, %v2567
    %v2569 = vmul.f32 %v2057, %v2516
    %v2570 = vadd.f32 %v2566, %v2569
    %v2571 = vmul.f32 %v2057, %v2544
    %v2572 = vadd.f32 %v2568, %v2571
    %v2573 = vmul.f32 %v2058, %v2520
    %v2574 = vadd.f32 %v2570, %v2573
    %v2575 = vmul.f32 %v2058, %v2548
    %v2576 = vadd.f32 %v2572, %v2575
    %vm2577 = vcmask 7168
    %v2578 = vsel %vm2577, %v2524, %v2528
    %v2579 = vsel %vm2467, %v2578, %v2532
    %vm2580 = vcmask 23552
    %v2581 = vsel %vm2580, %v2579, %v2536
    %vm2582 = vcmask 31744
    %v2583 = vsel %vm2582, %v2581, %v2540
    %vm2584 = vcmask 39936
    %v2585 = vsel %vm2584, %v2583, %v2544
    %vm2586 = vcmask 48128
    %v2587 = vsel %vm2586, %v2585, %v2548
    %v2589 = vrot.slane %v2576, 7
    %vm2591 = vcmask 1040384
    %v2592 = vsel %vm2591, %v2574, %v2589
    %vm2593 = vcmask 1041408
    %v2594 = vsel %vm2593, %v2592, 0.0
    %v2596 = vrot.slane %v2574, 1
    %v2598 = vsel %vm2591, %v2596, %v2576
    %v2599 = vsel %vm2593, %v2598, 0.0
    %v2600 = vpack.c.bf16 %v2599, %v2594
    %v2601 = vld [vmem:[%s27] sm:$0xff]
    %v2602 = vld [vmem:[%s27 + $0x8] sm:$0xff]
    %v2603 = vld [vmem:[%s27 + $0x10] sm:$0xff]
    %v2604 = vld [vmem:[%s27 + $0x18] sm:$0xff]
    %v2605 = vld [vmem:[%s27 + $0x20] sm:$0xff]
    %v2606 = vld [vmem:[%s27 + $0x28] sm:$0xff]
    %v2607 = vld [vmem:[%s27 + $0x30] sm:$0xff]
    %v2608 = vld [vmem:[%s27 + $0x38] sm:$0xff]
    %v2609 = vld [vmem:[%s29] sm:$0x3]
    %v2611 = vlaneseq
    %v2612 = vshrl.u32 %v2611, 7
    %v2613 = vsub.s32 0, %v2612
    %v2614 = vrot.slane %v2609, %v2613
    %v2615 = vlaneseq
    %v2616 = vshrl.u32 %v2615, 7
    %v2617 = vsub.s32 1, %v2616
    %v2618 = vrot.slane %v2609, %v2617
    %v2629 = vunpack.c.l.b16 %v2601
    %v2630 = vunpack.c.h.b16 %v2601
    %v2631 = vunpack.c.l.b16 %v2602
    %v2632 = vunpack.c.h.b16 %v2602
    %v2633 = vunpack.c.l.b16 %v2603
    %v2634 = vunpack.c.h.b16 %v2603
    %v2635 = vunpack.c.l.b16 %v2604
    %v2636 = vunpack.c.h.b16 %v2604
    %v2637 = vunpack.c.l.b16 %v2605
    %v2638 = vunpack.c.h.b16 %v2605
    %v2639 = vunpack.c.l.b16 %v2606
    %v2640 = vunpack.c.h.b16 %v2606
    %v2641 = vunpack.c.l.b16 %v2607
    %v2642 = vunpack.c.h.b16 %v2607
    %v2643 = vunpack.c.l.b16 %v2608
    %v2644 = vunpack.c.h.b16 %v2608
    %v2645 = vpack.c.b16 %v2631, %v2629
    %v2646 = vpack.c.b16 %v2632, %v2630
    %v2647 = vpack.c.b16 %v2635, %v2633
    %v2648 = vpack.c.b16 %v2636, %v2634
    %v2649 = vpack.c.b16 %v2639, %v2637
    %v2650 = vpack.c.b16 %v2640, %v2638
    %v2651 = vpack.c.b16 %v2643, %v2641
    %v2652 = vpack.c.b16 %v2644, %v2642
    %v2662 = vsel %vm1563, %v2600, 0
    %2664 = vmatprep.subr.bf16.mxu0 %v2646
    %2665 = vmatpush1.bf16.msra.mxu0 %v2645
    %2666 = vmatprep.subr.bf16.mxu0 %v2648
    %2667 = vmatpush1.bf16.msra.mxu0 %v2647
    %2668 = vmatprep.subr.bf16.mxu0 %v2650
    %2669 = vmatpush1.bf16.msra.mxu0 %v2649
    %2670 = vmatprep.subr.bf16.mxu0 %v2652
    %2671 = vmatpush1.bf16.msra.mxu0 %v2651
    %2672 = vmatprep.subr.bf16.mxu0 0
    %2673 = vmatpush1.bf16.msra.mxu0 0
    %2674 = vmatprep.subr.bf16.mxu0 0
    %2675 = vmatpush1.bf16.msra.mxu0 0
    %2676 = vmatprep.subr.bf16.mxu0 0
    %2677 = vmatpush1.bf16.msra.mxu0 0
    %2678 = vmatprep.subr.bf16.mxu0 0
    %2679 = vmatpush1.bf16.msra.mxu0 0
    %2680 = vmatprep.subr.bf16.mxu0 0
    %2681 = vmatpush1.bf16.msra.mxu0 0
    %2682 = vmatprep.subr.bf16.mxu0 0
    %2683 = vmatpush1.bf16.msra.mxu0 0
    %2684 = vmatprep.subr.bf16.mxu0 0
    %2685 = vmatpush1.bf16.msra.mxu0 0
    %2686 = vmatprep.subr.bf16.mxu0 0
    %2687 = vmatpush1.bf16.msra.mxu0 0
    %2688 = vmatprep.subr.bf16.mxu0 0
    %2689 = vmatpush1.bf16.msra.mxu0 0
    %2690 = vmatprep.subr.bf16.mxu0 0
    %2691 = vmatpush1.bf16.msra.mxu0 0
    %2692 = vmatprep.subr.bf16.mxu0 0
    %2693 = vmatpush1.bf16.msra.mxu0 0
    %2694 = vmatprep.subr.bf16.mxu0 0
    %2695 = vmatpush1.bf16.msra.mxu0 0
    %2696 = vmatprep.mubr.bf16.mxu0 0
    %2697 = vmatmul.mubr.bf16.gmra.mrb[0].mxu0 %v2662
    %v2698 = vpop.f32.mrb[0].mxu0
    %v2699 = vadd.f32 %v2614, %v2698
    %v2700 = vpop.f32.mrb[0].mxu0
    %v2701 = vadd.f32 %v2618, %v2700
    %v2702 = vpop.f32.mrb[0].mxu0
    %v2703 = vadd.f32 %v2614, %v2702
    %v2704 = vpop.f32.mrb[0].mxu0
    %v2705 = vadd.f32 %v2618, %v2704
    %2706 = vdwg.mxu0
    %2709 = vrot.lane.b32.xlu0 %v2703, 64
    %v2710 = vpop.permute.xlu0 %2709
    %2711 = vrot.lane.b32.xlu0 %v2699, 64
    %v2712 = vpop.permute.xlu0 %2711
    %v2715 = vsel %vm1432, %v2699, %v2710
    %v2716 = vsel %vm1432, %v2703, %v2712
    %2717 = vrot.lane.b32.xlu0 %v2699, 96
    %v2718 = vpop.permute.xlu0 %2717
    %2719 = vrot.lane.b32.xlu0 %v2703, 96
    %v2720 = vpop.permute.xlu0 %2719
    %2725 = vrot.lane.b32.xlu0 %v2705, 32
    %v2726 = vpop.permute.xlu0 %2725
    %2727 = vrot.lane.b32.xlu0 %v2701, 32
    %v2728 = vpop.permute.xlu0 %2727
    %v2731 = vsel %vm1432, %v2718, %v2726
    %v2732 = vsel %vm1432, %v2720, %v2728
    %v2733 = vsel %vm1432, %v2712, %v2705
    %v2734 = vsel %vm1432, %v2710, %v2701
    %v2735 = vld [vmem:[%s31] sm:$0xff]
    %v2736 = vld [vmem:[%s31 + $0x8] sm:$0xff]
    %v2737 = vld [vmem:[%s31 + $0x10] sm:$0xff]
    %v2738 = vld [vmem:[%s31 + $0x18] sm:$0xff]
    %v2739 = vld [vmem:[%s31 + $0x20] sm:$0xff]
    %v2740 = vld [vmem:[%s31 + $0x28] sm:$0xff]
    %v2741 = vld [vmem:[%s31 + $0x30] sm:$0xff]
    %v2742 = vld [vmem:[%s31 + $0x38] sm:$0xff]
    %v2743 = vld [vmem:[%s33] sm:$0x3]
    %v2745 = vlaneseq
    %v2746 = vshrl.u32 %v2745, 7
    %v2747 = vsub.s32 0, %v2746
    %v2748 = vrot.slane %v2743, %v2747
    %v2749 = vlaneseq
    %v2750 = vshrl.u32 %v2749, 7
    %v2751 = vsub.s32 1, %v2750
    %v2752 = vrot.slane %v2743, %v2751
    %v2763 = vunpack.c.l.b16 %v2735
    %v2764 = vunpack.c.h.b16 %v2735
    %v2765 = vunpack.c.l.b16 %v2736
    %v2766 = vunpack.c.h.b16 %v2736
    %v2767 = vunpack.c.l.b16 %v2737
    %v2768 = vunpack.c.h.b16 %v2737
    %v2769 = vunpack.c.l.b16 %v2738
    %v2770 = vunpack.c.h.b16 %v2738
    %v2771 = vunpack.c.l.b16 %v2739
    %v2772 = vunpack.c.h.b16 %v2739
    %v2773 = vunpack.c.l.b16 %v2740
    %v2774 = vunpack.c.h.b16 %v2740
    %v2775 = vunpack.c.l.b16 %v2741
    %v2776 = vunpack.c.h.b16 %v2741
    %v2777 = vunpack.c.l.b16 %v2742
    %v2778 = vunpack.c.h.b16 %v2742
    %v2779 = vpack.c.b16 %v2765, %v2763
    %v2780 = vpack.c.b16 %v2766, %v2764
    %v2781 = vpack.c.b16 %v2769, %v2767
    %v2782 = vpack.c.b16 %v2770, %v2768
    %v2783 = vpack.c.b16 %v2773, %v2771
    %v2784 = vpack.c.b16 %v2774, %v2772
    %v2785 = vpack.c.b16 %v2777, %v2775
    %v2786 = vpack.c.b16 %v2778, %v2776
    %2795 = vmatprep.subr.bf16.mxu0 %v2780
    %2796 = vmatpush1.bf16.msra.mxu0 %v2779
    %2797 = vmatprep.subr.bf16.mxu0 %v2782
    %2798 = vmatpush1.bf16.msra.mxu0 %v2781
    %2799 = vmatprep.subr.bf16.mxu0 %v2784
    %2800 = vmatpush1.bf16.msra.mxu0 %v2783
    %2801 = vmatprep.subr.bf16.mxu0 %v2786
    %2802 = vmatpush1.bf16.msra.mxu0 %v2785
    %2803 = vmatprep.subr.bf16.mxu0 0
    %2804 = vmatpush1.bf16.msra.mxu0 0
    %2805 = vmatprep.subr.bf16.mxu0 0
    %2806 = vmatpush1.bf16.msra.mxu0 0
    %2807 = vmatprep.subr.bf16.mxu0 0
    %2808 = vmatpush1.bf16.msra.mxu0 0
    %2809 = vmatprep.subr.bf16.mxu0 0
    %2810 = vmatpush1.bf16.msra.mxu0 0
    %2811 = vmatprep.subr.bf16.mxu0 0
    %2812 = vmatpush1.bf16.msra.mxu0 0
    %2813 = vmatprep.subr.bf16.mxu0 0
    %2814 = vmatpush1.bf16.msra.mxu0 0
    %2815 = vmatprep.subr.bf16.mxu0 0
    %2816 = vmatpush1.bf16.msra.mxu0 0
    %2817 = vmatprep.subr.bf16.mxu0 0
    %2818 = vmatpush1.bf16.msra.mxu0 0
    %2819 = vmatprep.subr.bf16.mxu0 0
    %2820 = vmatpush1.bf16.msra.mxu0 0
    %2821 = vmatprep.subr.bf16.mxu0 0
    %2822 = vmatpush1.bf16.msra.mxu0 0
    %2823 = vmatprep.subr.bf16.mxu0 0
    %2824 = vmatpush1.bf16.msra.mxu0 0
    %2825 = vmatprep.subr.bf16.mxu0 0
    %2826 = vmatpush1.bf16.msra.mxu0 0
    %2827 = vmatprep.mubr.bf16.mxu0 0
    %2828 = vmatmul.mubr.bf16.gmra.mrb[0].mxu0 %v1565
    %v2829 = vpop.f32.mrb[0].mxu0
    %v2830 = vadd.f32 %v2748, %v2829
    %v2831 = vpop.f32.mrb[0].mxu0
    %v2832 = vadd.f32 %v2752, %v2831
    %v2833 = vpop.f32.mrb[0].mxu0
    %v2834 = vpop.f32.mrb[0].mxu0
    %2835 = vdwg.mxu0
    %v2836 = vadd.f32 %v2715, %v2830
    %v2837 = vxor.u32 %v2836, 2147483648
    %v2838 = vmul.f32 %v2837, 1.442695
    %v2839 = vpow.pop %v2838
    %v2840 = vadd.f32 %v2839, 1.0
    %v2841 = vrcp.pop %v2840
    %v2842 = vmul.f32 1.0, %v2841
    %2844 = vrot.lane.b32.xlu0 %v2830, 64
    %v2845 = vpop.permute.xlu0 %2844
    %v2847 = vadd.f32 %v2731, %v2845
    %v2848 = vxor.u32 %v2847, 2147483648
    %v2849 = vmul.f32 %v2848, 1.442695
    %v2850 = vpow.pop %v2849
    %v2851 = vadd.f32 %v2850, 1.0
    %v2852 = vrcp.pop %v2851
    %v2853 = vmul.f32 1.0, %v2852
    %v2854 = vmul.f32 %v2842, %v2832
    %v2855 = vadd.f32 %v2733, %v2854
    %v2856 = vtanh.pop %v2855
    %v2857 = vsub.f32 1.0, %v2853
    %v2858 = vmul.f32 %v2857, %v2856
    %v2859 = vmul.f32 %v2853, 0.0
    %v2860 = vadd.f32 %v2858, %v2859
    %v2861 = vpack.c.bf16 %v2860, %v2860
    %v2863 = vsel %vm1563, %v2861, 0
    %2865 = vmatprep.subr.bf16.mxu0 %v2780
    %2866 = vmatpush1.bf16.msra.mxu0 %v2779
    %2867 = vmatprep.subr.bf16.mxu0 %v2782
    %2868 = vmatpush1.bf16.msra.mxu0 %v2781
    %2869 = vmatprep.subr.bf16.mxu0 %v2784
    %2870 = vmatpush1.bf16.msra.mxu0 %v2783
    %2871 = vmatprep.subr.bf16.mxu0 %v2786
    %2872 = vmatpush1.bf16.msra.mxu0 %v2785
    %2873 = vmatprep.subr.bf16.mxu0 0
    %2874 = vmatpush1.bf16.msra.mxu0 0
    %2875 = vmatprep.subr.bf16.mxu0 0
    %2876 = vmatpush1.bf16.msra.mxu0 0
    %2877 = vmatprep.subr.bf16.mxu0 0
    %2878 = vmatpush1.bf16.msra.mxu0 0
    %2879 = vmatprep.subr.bf16.mxu0 0
    %2880 = vmatpush1.bf16.msra.mxu0 0
    %2881 = vmatprep.subr.bf16.mxu0 0
    %2882 = vmatpush1.bf16.msra.mxu0 0
    %2883 = vmatprep.subr.bf16.mxu0 0
    %2884 = vmatpush1.bf16.msra.mxu0 0
    %2885 = vmatprep.subr.bf16.mxu0 0
    %2886 = vmatpush1.bf16.msra.mxu0 0
    %2887 = vmatprep.subr.bf16.mxu0 0
    %2888 = vmatpush1.bf16.msra.mxu0 0
    %2889 = vmatprep.subr.bf16.mxu0 0
    %2890 = vmatpush1.bf16.msra.mxu0 0
    %2891 = vmatprep.subr.bf16.mxu0 0
    %2892 = vmatpush1.bf16.msra.mxu0 0
    %2893 = vmatprep.subr.bf16.mxu0 0
    %2894 = vmatpush1.bf16.msra.mxu0 0
    %2895 = vmatprep.subr.bf16.mxu0 0
    %2896 = vmatpush1.bf16.msra.mxu0 0
    %2897 = vmatprep.mubr.bf16.mxu0 0
    %2898 = vmatmul.mubr.bf16.gmra.mrb[0].mxu0 %v2863
    %v2899 = vpop.f32.mrb[0].mxu0
    %v2900 = vadd.f32 %v2748, %v2899
    %v2901 = vpop.f32.mrb[0].mxu0
    %v2902 = vadd.f32 %v2752, %v2901
    %v2903 = vpop.f32.mrb[0].mxu0
    %v2904 = vpop.f32.mrb[0].mxu0
    %2905 = vdwg.mxu0
    %v2906 = vadd.f32 %v2716, %v2900
    %v2907 = vxor.u32 %v2906, 2147483648
    %v2908 = vmul.f32 %v2907, 1.442695
    %v2909 = vpow.pop %v2908
    %v2910 = vadd.f32 %v2909, 1.0
    %v2911 = vrcp.pop %v2910
    %v2912 = vmul.f32 1.0, %v2911
    %2914 = vrot.lane.b32.xlu0 %v2900, 64
    %v2915 = vpop.permute.xlu0 %2914
    %v2917 = vadd.f32 %v2732, %v2915
    %v2918 = vxor.u32 %v2917, 2147483648
    %v2919 = vmul.f32 %v2918, 1.442695
    %v2920 = vpow.pop %v2919
    %v2921 = vadd.f32 %v2920, 1.0
    %v2922 = vrcp.pop %v2921
    %v2923 = vmul.f32 1.0, %v2922
    %v2924 = vmul.f32 %v2912, %v2902
    %v2925 = vadd.f32 %v2734, %v2924
    %v2926 = vtanh.pop %v2925
    %v2927 = vsub.f32 1.0, %v2923
    %v2928 = vmul.f32 %v2927, %v2926
    %v2929 = vmul.f32 %v2923, %v2860
    %v2930 = vadd.f32 %v2928, %v2929
    %v2931 = vsel %vm1432, %v2860, %v2930
    %v2932 = vsel %vm1432, %v2930, %v2860
    %v2934 = vrot.slane %v2932, 7
    %v2936 = vsel %vm2591, %v2931, %v2934
    %v2937 = vsel %vm2593, %v2936, 0.0
    %v2939 = vrot.slane %v2931, 1
    %v2941 = vsel %vm2591, %v2939, %v2932
    %v2942 = vsel %vm2593, %v2941, 0.0
    %v2943 = vld [vmem:[%s35] sm:$0xff]
    %v2944 = vld [vmem:[%s35 + $0x8] sm:$0xff]
    %v2945 = vld [vmem:[%s35 + $0x10] sm:$0xff]
    %v2946 = vld [vmem:[%s35 + $0x18] sm:$0xff]
    %v2947 = vld [vmem:[%s35 + $0x20] sm:$0xff]
    %v2948 = vld [vmem:[%s35 + $0x28] sm:$0xff]
    %v2949 = vld [vmem:[%s35 + $0x30] sm:$0xff]
    %v2950 = vld [vmem:[%s35 + $0x38] sm:$0xff]
    %v2951 = vld [vmem:[%s37] sm:$0x1]
    %v2953 = vlaneseq
    %v2954 = vshrl.u32 %v2953, 7
    %v2955 = vsub.s32 0, %v2954
    %v2956 = vrot.slane %v2951, %v2955
    %v2959 = vsel %vm1563, %v2937, 0
    %2961 = vmatprep.subr.mxu0 0.0
    %2962 = vmatpush1.msra.mxu0 %v2943
    %2963 = vmatprep.subr.mxu0 0.0
    %2964 = vmatpush1.msra.mxu0 %v2944
    %2965 = vmatprep.subr.mxu0 0.0
    %2966 = vmatpush1.msra.mxu0 %v2945
    %2967 = vmatprep.subr.mxu0 0.0
    %2968 = vmatpush1.msra.mxu0 %v2946
    %2969 = vmatprep.subr.mxu0 0.0
    %2970 = vmatpush1.msra.mxu0 %v2947
    %2971 = vmatprep.subr.mxu0 0.0
    %2972 = vmatpush1.msra.mxu0 %v2948
    %2973 = vmatprep.subr.mxu0 0.0
    %2974 = vmatpush1.msra.mxu0 %v2949
    %2975 = vmatprep.subr.mxu0 0.0
    %2976 = vmatpush1.msra.mxu0 %v2950
    %2977 = vmatprep.subr.mxu0 0.0
    %2978 = vmatpush1.msra.mxu0 0.0
    %2979 = vmatprep.subr.mxu0 0.0
    %2980 = vmatpush1.msra.mxu0 0.0
    %2981 = vmatprep.subr.mxu0 0.0
    %2982 = vmatpush1.msra.mxu0 0.0
    %2983 = vmatprep.subr.mxu0 0.0
    %2984 = vmatpush1.msra.mxu0 0.0
    %2985 = vmatprep.subr.mxu0 0.0
    %2986 = vmatpush1.msra.mxu0 0.0
    %2987 = vmatprep.subr.mxu0 0.0
    %2988 = vmatpush1.msra.mxu0 0.0
    %2989 = vmatprep.subr.mxu0 0.0
    %2990 = vmatpush1.msra.mxu0 0.0
    %2991 = vmatprep.subr.mxu0 0.0
    %2992 = vmatpush1.msra.mxu0 0.0
    %2993 = vmatprep.subr.mxu0 0.0
    %2994 = vmatpush1.msra.mxu0 0.0
    %2995 = vmatprep.subr.mxu0 0.0
    %2996 = vmatpush1.msra.mxu0 0.0
    %2997 = vmatprep.subr.mxu0 0.0
    %2998 = vmatpush1.msra.mxu0 0.0
    %2999 = vmatprep.subr.mxu0 0.0
    %3000 = vmatpush1.msra.mxu0 0.0
    %3001 = vmatprep.subr.mxu0 0.0
    %3002 = vmatpush1.msra.mxu0 0.0
    %3003 = vmatprep.subr.mxu0 0.0
    %3004 = vmatpush1.msra.mxu0 0.0
    %3005 = vmatprep.subr.mxu0 0.0
    %3006 = vmatpush1.msra.mxu0 0.0
    %3007 = vmatprep.subr.mxu0 0.0
    %3008 = vmatpush1.msra.mxu0 0.0
    %3009 = vmatprep.subr.mxu0 0.0
    %3010 = vmatpush1.msra.mxu0 0.0
    %3011 = vmatprep.subr.mxu0 0.0
    %3012 = vmatpush1.msra.mxu0 0.0
    %3013 = vmatprep.subr.mxu0 0.0
    %3014 = vmatpush1.msra.mxu0 0.0
    %3015 = vmatprep.subr.mxu0 0.0
    %3016 = vmatpush1.msra.mxu0 0.0
    %3017 = vmatprep.subr.mxu0 0.0
    %3018 = vmatpush1.msra.mxu0 0.0
    %3019 = vmatprep.subr.mxu0 0.0
    %3020 = vmatpush1.msra.mxu0 0.0
    %3021 = vmatprep.subr.mxu0 0.0
    %3022 = vmatpush1.msra.mxu0 0.0
    %3023 = vmatprep.subr.mxu0 0.0
    %3024 = vmatpush1.msra.mxu0 0.0
    %3025 = vmatprep.mubr.f32.mxu0 0.0
    %3026 = vmatmul.mubr.f32.gmra.mrb[0].mxu0 %v2959
    %v3027 = vpop.f32.mrb[0].mxu0
    %v3028 = vadd.f32 %v2956, %v3027
    %v3029 = vpop.f32.mrb[0].mxu0
    %3030 = vdwg.mxu0
    %v3031 = vtanh.pop %v3028
    %v3032 = vld [vmem:[%s39] sm:$0xff]
    %v3033 = vld [vmem:[%s39 + $0x8] sm:$0xff]
    %v3034 = vld [vmem:[%s39 + $0x10] sm:$0xff]
    %v3035 = vld [vmem:[%s39 + $0x18] sm:$0xff]
    %v3036 = vld [vmem:[%s39 + $0x20] sm:$0xff]
    %v3037 = vld [vmem:[%s39 + $0x28] sm:$0xff]
    %v3038 = vld [vmem:[%s39 + $0x30] sm:$0xff]
    %v3039 = vld [vmem:[%s39 + $0x38] sm:$0xff]
    %v3040 = vld [vmem:[%s41] sm:$0x1]
    %v3042 = vlaneseq
    %v3043 = vshrl.u32 %v3042, 7
    %v3044 = vsub.s32 0, %v3043
    %v3045 = vrot.slane %v3040, %v3044
    %v3048 = vsel %vm1563, %v2942, 0
    %3050 = vmatprep.subr.mxu0 0.0
    %3051 = vmatpush1.msra.mxu0 %v3032
    %3052 = vmatprep.subr.mxu0 0.0
    %3053 = vmatpush1.msra.mxu0 %v3033
    %3054 = vmatprep.subr.mxu0 0.0
    %3055 = vmatpush1.msra.mxu0 %v3034
    %3056 = vmatprep.subr.mxu0 0.0
    %3057 = vmatpush1.msra.mxu0 %v3035
    %3058 = vmatprep.subr.mxu0 0.0
    %3059 = vmatpush1.msra.mxu0 %v3036
    %3060 = vmatprep.subr.mxu0 0.0
    %3061 = vmatpush1.msra.mxu0 %v3037
    %3062 = vmatprep.subr.mxu0 0.0
    %3063 = vmatpush1.msra.mxu0 %v3038
    %3064 = vmatprep.subr.mxu0 0.0
    %3065 = vmatpush1.msra.mxu0 %v3039
    %3066 = vmatprep.subr.mxu0 0.0
    %3067 = vmatpush1.msra.mxu0 0.0
    %3068 = vmatprep.subr.mxu0 0.0
    %3069 = vmatpush1.msra.mxu0 0.0
    %3070 = vmatprep.subr.mxu0 0.0
    %3071 = vmatpush1.msra.mxu0 0.0
    %3072 = vmatprep.subr.mxu0 0.0
    %3073 = vmatpush1.msra.mxu0 0.0
    %3074 = vmatprep.subr.mxu0 0.0
    %3075 = vmatpush1.msra.mxu0 0.0
    %3076 = vmatprep.subr.mxu0 0.0
    %3077 = vmatpush1.msra.mxu0 0.0
    %3078 = vmatprep.subr.mxu0 0.0
    %3079 = vmatpush1.msra.mxu0 0.0
    %3080 = vmatprep.subr.mxu0 0.0
    %3081 = vmatpush1.msra.mxu0 0.0
    %3082 = vmatprep.subr.mxu0 0.0
    %3083 = vmatpush1.msra.mxu0 0.0
    %3084 = vmatprep.subr.mxu0 0.0
    %3085 = vmatpush1.msra.mxu0 0.0
    %3086 = vmatprep.subr.mxu0 0.0
    %3087 = vmatpush1.msra.mxu0 0.0
    %3088 = vmatprep.subr.mxu0 0.0
    %3089 = vmatpush1.msra.mxu0 0.0
    %3090 = vmatprep.subr.mxu0 0.0
    %3091 = vmatpush1.msra.mxu0 0.0
    %3092 = vmatprep.subr.mxu0 0.0
    %3093 = vmatpush1.msra.mxu0 0.0
    %3094 = vmatprep.subr.mxu0 0.0
    %3095 = vmatpush1.msra.mxu0 0.0
    %3096 = vmatprep.subr.mxu0 0.0
    %3097 = vmatpush1.msra.mxu0 0.0
    %3098 = vmatprep.subr.mxu0 0.0
    %3099 = vmatpush1.msra.mxu0 0.0
    %3100 = vmatprep.subr.mxu0 0.0
    %3101 = vmatpush1.msra.mxu0 0.0
    %3102 = vmatprep.subr.mxu0 0.0
    %3103 = vmatpush1.msra.mxu0 0.0
    %3104 = vmatprep.subr.mxu0 0.0
    %3105 = vmatpush1.msra.mxu0 0.0
    %3106 = vmatprep.subr.mxu0 0.0
    %3107 = vmatpush1.msra.mxu0 0.0
    %3108 = vmatprep.subr.mxu0 0.0
    %3109 = vmatpush1.msra.mxu0 0.0
    %3110 = vmatprep.subr.mxu0 0.0
    %3111 = vmatpush1.msra.mxu0 0.0
    %3112 = vmatprep.subr.mxu0 0.0
    %3113 = vmatpush1.msra.mxu0 0.0
    %3114 = vmatprep.mubr.f32.mxu0 0.0
    %3115 = vmatmul.mubr.f32.gmra.mrb[0].mxu0 %v3048
    %v3116 = vpop.f32.mrb[0].mxu0
    %v3117 = vadd.f32 %v3045, %v3116
    %v3118 = vpop.f32.mrb[0].mxu0
    %3119 = vdwg.mxu0
    %v3120 = vtanh.pop %v3117
    %v3121 = vld [vmem:[%s43] sm:$0x1]
    %v3123 = vlaneseq
    %v3124 = vshrl.u32 %v3123, 7
    %v3125 = vsub.s32 0, %v3124
    %v3126 = vrot.slane %v3121, %v3125
    %v3128 = vmul.f32 %v3120, %v3126
    %v3129 = vsel %vm1563, %v3128, 0.0
    %3130 = vadd.xlane.f32.xlu0 %v3129
    %v3131 = vpop.xlane.xlu0 %3130
    %v3132 = vld [vmem:[#allocation4] sm:$0x1]
    %v3134 = vlaneseq
    %v3135 = vshrl.u32 %v3134, 7
    %v3136 = vsub.s32 0, %v3135
    %v3137 = vrot.slane %v3132, %v3136
    %v3139 = vadd.f32 %v3131, %v3137
    %v3140 = vlaneseq
    %v3141 = vand.u32 %v3140, 127
    %vm3142 = vcmp.eq.s32.totalorder %v3141, 0
    %v3143 = vsel %vm3142, 1, 0
    %v3144 = vcvt.s32.f32 %v3143
    %3146 = vset.pattern.permute.xlu0 0
    %3147 = vperm.xlu0 %3146, %v3139
    %v3148 = vpop.permute.xlu0 %3147
    %v3150 = vmul.f32 %v3148, %v3144
    %v3151 = vld [vmem:[%s47] sm:$0x1]
    %v3152 = vld [vmem:[#allocation5] sm:$0x1]
    %v3154 = vlaneseq
    %v3155 = vshrl.u32 %v3154, 7
    %v3156 = vsub.s32 0, %v3155
    %v3157 = vrot.slane %v3151, %v3156
    %v3159 = vmul.f32 %v3144, %v3157
    %v3160 = vsel %vm2586, %v3159, 0.0
    %3161 = vadd.xlane.f32.xlu0 %v3160
    %v3162 = vpop.xlane.xlu0 %3161
    %v3164 = vlaneseq
    %v3165 = vshrl.u32 %v3164, 7
    %v3166 = vsub.s32 0, %v3165
    %v3167 = vrot.slane %v3152, %v3166
    %v3169 = vadd.f32 %v3162, %v3167
    %v3170 = vmul.f32 %v3150, %v3157
    %v3171 = vsel %vm2586, %v3170, 0.0
    %3172 = vadd.xlane.f32.xlu0 %v3171
    %v3173 = vpop.xlane.xlu0 %3172
    %v3174 = vadd.f32 %v3173, %v3167
    %v3175 = vmax.f32 %v3169, %v3174
    %v3176 = vsub.f32 %v3169, %v3175
    %v3177 = vmul.f32 %v3176, 1.442695
    %v3178 = vpow.pop %v3177
    %v3179 = vsub.f32 %v3174, %v3175
    %v3180 = vmul.f32 %v3179, 1.442695
    %v3181 = vpow.pop %v3180
    %v3182 = vadd.f32 %v3178, %v3181
    %v3183 = vrcp.pop %v3182
    %v3184 = vmul.f32 %v3178, %v3183
    %3186 = vset.pattern.permute.xlu0 0
    %3187 = vperm.xlu0 %3186, %v3184
    %v3188 = vpop.permute.xlu0 %3187
    %v3190 = vmul.f32 %v3188, %v3144
    %v3191 = vmul.f32 %v3181, %v3183
    %3193 = vset.pattern.permute.xlu0 0
    %3194 = vperm.xlu0 %3193, %v3191
    %v3195 = vpop.permute.xlu0 %3194
    %v3197 = vmul.f32 %v3195, %v3150
    %v3198 = vadd.f32 %v3190, %v3197
    %v3199 = vld [vmem:[%s51] sm:$0x1]
    %v3200 = vld [vmem:[#allocation6] sm:$0x1]
    %v3202 = vlaneseq
    %v3203 = vshrl.u32 %v3202, 7
    %v3204 = vsub.s32 0, %v3203
    %v3205 = vrot.slane %v3199, %v3204
    %v3207 = vmul.f32 %v3144, %v3205
    %v3208 = vsel %vm2586, %v3207, 0.0
    %3209 = vadd.xlane.f32.xlu0 %v3208
    %v3210 = vpop.xlane.xlu0 %3209
    %v3212 = vlaneseq
    %v3213 = vshrl.u32 %v3212, 7
    %v3214 = vsub.s32 0, %v3213
    %v3215 = vrot.slane %v3200, %v3214
    %v3217 = vadd.f32 %v3210, %v3215
    %v3218 = vmul.f32 %v3150, %v3205
    %v3219 = vsel %vm2586, %v3218, 0.0
    %3220 = vadd.xlane.f32.xlu0 %v3219
    %v3221 = vpop.xlane.xlu0 %3220
    %v3222 = vadd.f32 %v3221, %v3215
    %v3223 = vmax.f32 %v3217, %v3222
    %v3224 = vsub.f32 %v3217, %v3223
    %v3225 = vmul.f32 %v3224, 1.442695
    %v3226 = vpow.pop %v3225
    %v3227 = vsub.f32 %v3222, %v3223
    %v3228 = vmul.f32 %v3227, 1.442695
    %v3229 = vpow.pop %v3228
    %v3230 = vadd.f32 %v3226, %v3229
    %v3231 = vrcp.pop %v3230
    %v3232 = vmul.f32 %v3226, %v3231
    %3234 = vset.pattern.permute.xlu0 0
    %3235 = vperm.xlu0 %3234, %v3232
    %v3236 = vpop.permute.xlu0 %3235
    %v3238 = vmul.f32 %v3236, %v3144
    %v3239 = vmul.f32 %v3229, %v3231
    %3241 = vset.pattern.permute.xlu0 0
    %3242 = vperm.xlu0 %3241, %v3239
    %v3243 = vpop.permute.xlu0 %3242
    %v3245 = vmul.f32 %v3243, %v3150
    %v3246 = vadd.f32 %v3238, %v3245
    %3248 = vset.pattern.permute.xlu0 0
    %3249 = vperm.xlu0 %3248, %v3198
    %v3250 = vpop.permute.xlu0 %3249
    %v3252 = vmul.f32 %v3031, %v3250
    %3254 = vset.pattern.permute.xlu0 0
    %3255 = vperm.xlu0 %3254, %v3246
    %v3256 = vpop.permute.xlu0 %3255
    %v3258 = vmul.f32 %v3120, %v3256
    %v3259 = vld [vmem:[%s55] sm:$0xff]
    %v3260 = vld [vmem:[%s55 + $0x8] sm:$0xff]
    %v3261 = vld [vmem:[%s55 + $0x10] sm:$0xff]
    %v3262 = vld [vmem:[%s55 + $0x18] sm:$0xff]
    %v3263 = vld [vmem:[%s55 + $0x20] sm:$0xff]
    %v3264 = vld [vmem:[%s55 + $0x28] sm:$0xff]
    %v3265 = vld [vmem:[%s55 + $0x30] sm:$0xff]
    %v3266 = vld [vmem:[%s55 + $0x38] sm:$0xff]
    %v3267 = vld [vmem:[%s57] sm:$0x1]
    %v3269 = vlaneseq
    %v3270 = vshrl.u32 %v3269, 7
    %v3271 = vsub.s32 0, %v3270
    %v3272 = vrot.slane %v3267, %v3271
    %v3275 = vsel %vm1563, %v3252, 0
    %3277 = vmatprep.subr.mxu0 0.0
    %3278 = vmatpush1.msra.mxu0 %v3259
    %3279 = vmatprep.subr.mxu0 0.0
    %3280 = vmatpush1.msra.mxu0 %v3260
    %3281 = vmatprep.subr.mxu0 0.0
    %3282 = vmatpush1.msra.mxu0 %v3261
    %3283 = vmatprep.subr.mxu0 0.0
    %3284 = vmatpush1.msra.mxu0 %v3262
    %3285 = vmatprep.subr.mxu0 0.0
    %3286 = vmatpush1.msra.mxu0 %v3263
    %3287 = vmatprep.subr.mxu0 0.0
    %3288 = vmatpush1.msra.mxu0 %v3264
    %3289 = vmatprep.subr.mxu0 0.0
    %3290 = vmatpush1.msra.mxu0 %v3265
    %3291 = vmatprep.subr.mxu0 0.0
    %3292 = vmatpush1.msra.mxu0 %v3266
    %3293 = vmatprep.subr.mxu0 0.0
    %3294 = vmatpush1.msra.mxu0 0.0
    %3295 = vmatprep.subr.mxu0 0.0
    %3296 = vmatpush1.msra.mxu0 0.0
    %3297 = vmatprep.subr.mxu0 0.0
    %3298 = vmatpush1.msra.mxu0 0.0
    %3299 = vmatprep.subr.mxu0 0.0
    %3300 = vmatpush1.msra.mxu0 0.0
    %3301 = vmatprep.subr.mxu0 0.0
    %3302 = vmatpush1.msra.mxu0 0.0
    %3303 = vmatprep.subr.mxu0 0.0
    %3304 = vmatpush1.msra.mxu0 0.0
    %3305 = vmatprep.subr.mxu0 0.0
    %3306 = vmatpush1.msra.mxu0 0.0
    %3307 = vmatprep.subr.mxu0 0.0
    %3308 = vmatpush1.msra.mxu0 0.0
    %3309 = vmatprep.subr.mxu0 0.0
    %3310 = vmatpush1.msra.mxu0 0.0
    %3311 = vmatprep.subr.mxu0 0.0
    %3312 = vmatpush1.msra.mxu0 0.0
    %3313 = vmatprep.subr.mxu0 0.0
    %3314 = vmatpush1.msra.mxu0 0.0
    %3315 = vmatprep.subr.mxu0 0.0
    %3316 = vmatpush1.msra.mxu0 0.0
    %3317 = vmatprep.subr.mxu0 0.0
    %3318 = vmatpush1.msra.mxu0 0.0
    %3319 = vmatprep.subr.mxu0 0.0
    %3320 = vmatpush1.msra.mxu0 0.0
    %3321 = vmatprep.subr.mxu0 0.0
    %3322 = vmatpush1.msra.mxu0 0.0
    %3323 = vmatprep.subr.mxu0 0.0
    %3324 = vmatpush1.msra.mxu0 0.0
    %3325 = vmatprep.subr.mxu0 0.0
    %3326 = vmatpush1.msra.mxu0 0.0
    %3327 = vmatprep.subr.mxu0 0.0
    %3328 = vmatpush1.msra.mxu0 0.0
    %3329 = vmatprep.subr.mxu0 0.0
    %3330 = vmatpush1.msra.mxu0 0.0
    %3331 = vmatprep.subr.mxu0 0.0
    %3332 = vmatpush1.msra.mxu0 0.0
    %3333 = vmatprep.subr.mxu0 0.0
    %3334 = vmatpush1.msra.mxu0 0.0
    %3335 = vmatprep.subr.mxu0 0.0
    %3336 = vmatpush1.msra.mxu0 0.0
    %3337 = vmatprep.subr.mxu0 0.0
    %3338 = vmatpush1.msra.mxu0 0.0
    %3339 = vmatprep.subr.mxu0 0.0
    %3340 = vmatpush1.msra.mxu0 0.0
    %3341 = vmatprep.mubr.f32.mxu0 0.0
    %3342 = vmatmul.mubr.f32.gmra.mrb[0].mxu0 %v3275
    %v3343 = vpop.f32.mrb[0].mxu0
    %v3344 = vadd.f32 %v3272, %v3343
    %v3345 = vpop.f32.mrb[0].mxu0
    %3346 = vdwg.mxu0
    %v3347 = vld [vmem:[%s59] sm:$0xff]
    %v3348 = vld [vmem:[%s59 + $0x8] sm:$0xff]
    %v3349 = vld [vmem:[%s59 + $0x10] sm:$0xff]
    %v3350 = vld [vmem:[%s59 + $0x18] sm:$0xff]
    %v3351 = vld [vmem:[%s59 + $0x20] sm:$0xff]
    %v3352 = vld [vmem:[%s59 + $0x28] sm:$0xff]
    %v3353 = vld [vmem:[%s59 + $0x30] sm:$0xff]
    %v3354 = vld [vmem:[%s59 + $0x38] sm:$0xff]
    %v3355 = vld [vmem:[%s61] sm:$0x1]
    %v3357 = vlaneseq
    %v3358 = vshrl.u32 %v3357, 7
    %v3359 = vsub.s32 0, %v3358
    %v3360 = vrot.slane %v3355, %v3359
    %v3363 = vsel %vm1563, %v3258, 0
    %3365 = vmatprep.subr.mxu0 0.0
    %3366 = vmatpush1.msra.mxu0 %v3347
    %3367 = vmatprep.subr.mxu0 0.0
    %3368 = vmatpush1.msra.mxu0 %v3348
    %3369 = vmatprep.subr.mxu0 0.0
    %3370 = vmatpush1.msra.mxu0 %v3349
    %3371 = vmatprep.subr.mxu0 0.0
    %3372 = vmatpush1.msra.mxu0 %v3350
    %3373 = vmatprep.subr.mxu0 0.0
    %3374 = vmatpush1.msra.mxu0 %v3351
    %3375 = vmatprep.subr.mxu0 0.0
    %3376 = vmatpush1.msra.mxu0 %v3352
    %3377 = vmatprep.subr.mxu0 0.0
    %3378 = vmatpush1.msra.mxu0 %v3353
    %3379 = vmatprep.subr.mxu0 0.0
    %3380 = vmatpush1.msra.mxu0 %v3354
    %3381 = vmatprep.subr.mxu0 0.0
    %3382 = vmatpush1.msra.mxu0 0.0
    %3383 = vmatprep.subr.mxu0 0.0
    %3384 = vmatpush1.msra.mxu0 0.0
    %3385 = vmatprep.subr.mxu0 0.0
    %3386 = vmatpush1.msra.mxu0 0.0
    %3387 = vmatprep.subr.mxu0 0.0
    %3388 = vmatpush1.msra.mxu0 0.0
    %3389 = vmatprep.subr.mxu0 0.0
    %3390 = vmatpush1.msra.mxu0 0.0
    %3391 = vmatprep.subr.mxu0 0.0
    %3392 = vmatpush1.msra.mxu0 0.0
    %3393 = vmatprep.subr.mxu0 0.0
    %3394 = vmatpush1.msra.mxu0 0.0
    %3395 = vmatprep.subr.mxu0 0.0
    %3396 = vmatpush1.msra.mxu0 0.0
    %3397 = vmatprep.subr.mxu0 0.0
    %3398 = vmatpush1.msra.mxu0 0.0
    %3399 = vmatprep.subr.mxu0 0.0
    %3400 = vmatpush1.msra.mxu0 0.0
    %3401 = vmatprep.subr.mxu0 0.0
    %3402 = vmatpush1.msra.mxu0 0.0
    %3403 = vmatprep.subr.mxu0 0.0
    %3404 = vmatpush1.msra.mxu0 0.0
    %3405 = vmatprep.subr.mxu0 0.0
    %3406 = vmatpush1.msra.mxu0 0.0
    %3407 = vmatprep.subr.mxu0 0.0
    %3408 = vmatpush1.msra.mxu0 0.0
    %3409 = vmatprep.subr.mxu0 0.0
    %3410 = vmatpush1.msra.mxu0 0.0
    %3411 = vmatprep.subr.mxu0 0.0
    %3412 = vmatpush1.msra.mxu0 0.0
    %3413 = vmatprep.subr.mxu0 0.0
    %3414 = vmatpush1.msra.mxu0 0.0
    %3415 = vmatprep.subr.mxu0 0.0
    %3416 = vmatpush1.msra.mxu0 0.0
    %3417 = vmatprep.subr.mxu0 0.0
    %3418 = vmatpush1.msra.mxu0 0.0
    %3419 = vmatprep.subr.mxu0 0.0
    %3420 = vmatpush1.msra.mxu0 0.0
    %3421 = vmatprep.subr.mxu0 0.0
    %3422 = vmatpush1.msra.mxu0 0.0
    %3423 = vmatprep.subr.mxu0 0.0
    %3424 = vmatpush1.msra.mxu0 0.0
    %3425 = vmatprep.subr.mxu0 0.0
    %3426 = vmatpush1.msra.mxu0 0.0
    %3427 = vmatprep.subr.mxu0 0.0
    %3428 = vmatpush1.msra.mxu0 0.0
    %3429 = vmatprep.mubr.f32.mxu0 0.0
    %3430 = vmatmul.mubr.f32.gmra.mrb[0].mxu0 %v3363
    %v3431 = vpop.f32.mrb[0].mxu0
    %v3432 = vadd.f32 %v3360, %v3431
    %v3433 = vpop.f32.mrb[0].mxu0
    %3434 = vdwg.mxu0
    %3436 = vrot.lane.b32.xlu0 %v3432, 4
    %v3437 = vpop.permute.xlu0 %3436
    %3440 = vrot.lane.b32.xlu0 %v2587, 7
    %v3441 = vpop.permute.xlu0 %3440
    %3443 = vrot.lane.b32.xlu0 %v3246, 14
    %v3444 = vpop.permute.xlu0 %3443
    %v3446 = vsel %vm2582, %v3344, %v3437
    %vm3447 = vcmask 56320
    %v3448 = vsel %vm3447, %v3446, %v3441
    %vm3449 = vcmask 113664
    %v3450 = vsel %vm3449, %v3448, %v3444
    %vm3451 = vcmask 121856
    %v3452 = vsel %vm3451, %v3450, 0.0
    %3453 = vst [vmem:[%s63] sm:$0xff] %v3452
    // Predicated region
    $region134: #{han_forward.1} parent=1 // pred_check
      _
    $region135: #{han_forward.1} parent=1 // pred_check_branch
      %3455 = sbr.rel (0) target = $region137
    $region136: #{han_forward.1} parent=1 // pred_region
      _
    $region137: #{han_forward.1} parent=1 // pred_fallthru
      _
    // Predicated region
    $region138: #{han_forward.1} parent=1 // pred_check
      _
    $region139: #{han_forward.1} parent=1 // pred_check_branch
      %3457 = sbr.rel (0) target = $region141
    $region140: #{han_forward.1} parent=1 // pred_region
      _
    $region141: #{han_forward.1} parent=1 // pred_fallthru
      _
    %3458 = vsyncpa [#allocation8], 1
    %3459 = vsyncpa [#allocation10], 1

</llo_original>
